<compile_context>
chip_gen: v6e
topology: v6e:2x2x1
jax: 0.10.0
libtpu: 0.0.40
codegen_flags: <defaults>
</compile_context>

<pallas_src>
import functools

import jax
import jax.numpy as jnp
from jax.experimental import pallas as pl
from jax.experimental.pallas import tpu as pltpu

NUM_FRAMES = 5  # the PyTorch module hard-codes repeat_interleave(5, dim=0)


# ----------------------------- Pallas kernel ------------------------------ #
def _modulator_fused_kernel(num_shifts, depth, hidden, ratio_col,
                            inp_ref, wz_ref, wh_ref, out_ref):
    """One row-tile of the fused Modulator, all 4 shifts unrolled in-body.

    inp_ref : (S, tn, in_f+2)  compute dtype; columns = [z(in_f) | ratio | 1]
    wz_ref  : (in_f+2, depth*hidden)  packed z-path weights, a zero row for
              the ratio column, and the packed biases as the last row
    wh_ref  : (depth-1, hidden, hidden)  hidden-path weights
    out_ref : (tn, depth*hidden) f32, written once per tile (no RMW)
    """
    acc = None
    for s in range(num_shifts):
        z = inp_ref[s]                                         # (tn, in_f+2)
        r = z[:, ratio_col:ratio_col + 1].astype(jnp.float32)  # (tn, 1)

        # One lane-dense matmul covers the skip (z) path of every layer AND
        # the biases (constant-1 column x bias row).
        zw = jnp.dot(z, wz_ref[...], preferred_element_type=jnp.float32)

        h = jnp.maximum(zw[:, 0:hidden], 0.0)                  # layer 0
        hs = [h]
        for d in range(1, depth):
            h = jnp.maximum(
                jnp.dot(h.astype(wh_ref.dtype), wh_ref[d - 1],
                        preferred_element_type=jnp.float32)
                + zw[:, d * hidden:(d + 1) * hidden],
                0.0)
            hs.append(h)

        contrib = jnp.concatenate(hs, axis=-1) * r             # (tn, D*h)
        acc = contrib if acc is None else acc + contrib

    out_ref[...] = acc                                         # single store


def run_modulator_fused(inp_all, Ws, bs, *, tn=2048):
    """inp_all: (S, N, in_f+2) in the compute dtype (bf16 or f32).

    Columns of the last axis: [z-features(in_f) | area ratio | constant 1].
    Returns (N, depth*hidden) f32 = sum over the S shifts of
    ratio * per-layer hidden activations, packed as [layer0|layer1|...].
    Padded tail rows must carry ratio == 0 so they contribute nothing.
    """
    S, N, in_f_aug = inp_all.shape
    in_f = in_f_aug - 2
    hidden = Ws[0].shape[1]
    depth = len(Ws)
    DH = depth * hidden
    cdtype = inp_all.dtype

    # Pack weights: z path of every layer side by side, a zero row for the
    # ratio column, and the packed biases driven by the constant-1 column.
    wz_core = jnp.concatenate(
        [Ws[0]] + [Ws[d][hidden:, :] for d in range(1, depth)], axis=1)
    wz_aug = jnp.concatenate(
        [wz_core,
         jnp.zeros((1, DH), wz_core.dtype),                    # ratio column
         jnp.concatenate(bs, axis=0).reshape(1, DH)],          # bias row
        axis=0).astype(cdtype)                                 # (in_f+2, DH)
    wh_all = jnp.stack([Ws[d][:hidden, :] for d in range(1, depth)],
                       axis=0).astype(cdtype)                  # (D-1, h, h)

    # Row tile: as large as requested, but keep >= 2 tiles so the single
    # "parallel" grid axis can shard across v7x's 2 TensorCores; multiples of
    # 16 for bf16 sublane packing.
    def rup(v, m):
        return ((v + m - 1) // m) * m

    if N <= 16:
        tn_eff = 16
    else:
        two_tiles = rup((N + 1) // 2, 16)
        tn_eff = min(rup(tn, 16), max(16, two_tiles))
    Np = rup(N, tn_eff)
    inp_p = jnp.pad(inp_all, ((0, 0), (0, Np - N), (0, 0)))    # ratio pad == 0

    out = pl.pallas_call(
        functools.partial(_modulator_fused_kernel, S, depth, hidden, in_f),
        grid=(Np // tn_eff,),
        in_specs=[
            pl.BlockSpec((S, tn_eff, in_f_aug), lambda i: (0, i, 0)),
            pl.BlockSpec((in_f_aug, DH), lambda i: (0, 0)),
            pl.BlockSpec((depth - 1, hidden, hidden), lambda i: (0, 0, 0)),
        ],
        out_specs=pl.BlockSpec((tn_eff, DH), lambda i: (i, 0)),
        out_shape=jax.ShapeDtypeStruct((Np, DH), jnp.float32),
        compiler_params=pltpu.CompilerParams(
            dimension_semantics=("parallel",),
            vmem_limit_bytes=48 * 1024 * 1024),
    )(inp_p, wz_aug, wh_all)
    return out[:N]


# Pure-JAX reference of the Modulator (sanity check of the kernel only).
def modulator_ref(inp, ratio, Ws, bs):
    z = inp
    h = jnp.maximum(z @ Ws[0] + bs[0], 0.0)
    outs = [h * ratio]
    x = jnp.concatenate([h, z], axis=-1)
    for d in range(1, len(Ws)):
        h = jnp.maximum(x @ Ws[d] + bs[d], 0.0)
        outs.append(h * ratio)
        x = jnp.concatenate([h, z], axis=-1)
    return tuple(outs)


# ------------------------------ full forward ------------------------------ #
def liif3d_forward(x, query_coord, cell, Ws, bs, *,
                   num_frames=NUM_FRAMES, tn=2048, use_pallas=True,
                   use_bf16=True):
    BF, z_dim, H, W = x.shape
    B, Q, _ = query_coord.shape
    assert BF == B * num_frames
    hidden = Ws[0].shape[1]
    depth = len(Ws)
    in_f = z_dim * 9 + 4
    N = BF * Q
    cdtype = jnp.bfloat16 if (use_pallas and use_bf16) else jnp.float32

    x = x.astype(jnp.float32)
    query_coord = query_coord.astype(jnp.float32)
    cell = cell.astype(jnp.float32)

    # Padded NHWC feature map, cast ONCE to the compute dtype; the 3x3 unfold
    # taps are gathered directly from it per query, already in bf16, so the
    # (BF, z_dim*9, H, W) unfold tensor and an f32 (4,N,40) intermediate are
    # never written to HBM.
    xp = jnp.pad(x, ((0, 0), (0, 0), (1, 1), (1, 1)))
    xp_t = jnp.transpose(xp, (0, 2, 3, 1)).astype(cdtype)       # (BF,H+2,W+2,z)

    rh, rw = 1.0 / H, 1.0 / W
    eps_shift = 1e-6

    def nearest_idx(coord, size):
        # grid_sample(..., mode='nearest', align_corners=False).
        # TODO(synk): PyTorch rounds half-to-even (nearbyint); floor(t+0.5)
        # matches for the in-range positive coords produced here (only exact
        # .5 boundaries could differ).
        t = ((coord + 1.0) * size - 1.0) / 2.0
        return jnp.clip(jnp.floor(t + 0.5).astype(jnp.int32), 0, size - 1)

    rel_cell = cell * jnp.array([H, W], dtype=jnp.float32)          # (B, Q, 2)
    rel_cell_bf = jnp.repeat(rel_cell, num_frames, axis=0).astype(cdtype)
    batch_idx = jnp.arange(BF)[:, None]
    ones_col = jnp.ones((BF, Q, 1), cdtype)

    shift_list = [(-1, -1), (-1, 1), (1, -1), (1, 1)]               # (vx, vy)
    feats, areas = [], []
    for vx, vy in shift_list:
        qy = jnp.clip(query_coord[:, :, 0] + vx * rh + eps_shift,
                      -1 + 1e-6, 1 - 1e-6)
        qx = jnp.clip(query_coord[:, :, 1] + vy * rw + eps_shift,
                      -1 + 1e-6, 1 - 1e-6)
        iy = nearest_idx(qy, H)                                     # (B, Q)
        ix = nearest_idx(qx, W)
        # nearest sample of feat_coord == pixel-center coordinate
        qc_y = -1.0 + (2.0 * iy.astype(jnp.float32) + 1.0) / H
        qc_x = -1.0 + (2.0 * ix.astype(jnp.float32) + 1.0) / W
        rel_y = (query_coord[:, :, 0] - qc_y) * H
        rel_x = (query_coord[:, :, 1] - qc_x) * W
        areas.append(jnp.abs(rel_y * rel_x) + 1e-9)                 # (B, Q)

        iy_bf = jnp.repeat(iy, num_frames, axis=0)                  # (BF, Q)
        ix_bf = jnp.repeat(ix, num_frames, axis=0)
        # 9 taps of the 3x3 window; F.unfold channel order c*9 + ky*3 + kx.
        # TODO(synk): fuse this gather into the Pallas kernel (scalar-prefetch
        # iy/ix + manual DMA from the padded map left in pl.ANY) so the
        # 4xNx36 feature tensor never hits HBM at all.
        taps = [xp_t[batch_idx, iy_bf + ky, ix_bf + kx]
                for ky in range(3) for kx in range(3)]              # (BF,Q,z)x9
        q_feat = jnp.stack(taps, axis=-1).reshape(BF, Q, z_dim * 9)
        rel_bf = jnp.repeat(jnp.stack([rel_y, rel_x], axis=-1),
                            num_frames, axis=0).astype(cdtype)
        feats.append((q_feat, rel_bf))

    tot_area = areas[0] + areas[1] + areas[2] + areas[3]
    # bilinear-style swap: areas[0]<->areas[3], areas[1]<->areas[2]
    weight_areas = [areas[3], areas[2], areas[1], areas[0]]
    ratios = [jnp.repeat(w / tot_area, num_frames, axis=0)[..., None]
              .astype(cdtype) for w in weight_areas]                # (BF,Q,1)x4

    # Augmented kernel input: [features(in_f) | ratio | 1], built directly in
    # the compute dtype.
    inp_all = jnp.stack(
        [jnp.concatenate([q_feat, rel_bf, rel_cell_bf, ratio, ones_col],
                         axis=-1).reshape(N, in_f + 2)
         for (q_feat, rel_bf), ratio in zip(feats, ratios)], axis=0)

    if use_pallas:
        packed = run_modulator_fused(inp_all, Ws, bs, tn=tn)        # (N, D*h)
        # NOTE: consumers that accept the packed (N, depth*hidden) layout
        # should skip this transpose (an extra HBM pass on a mem-bound path).
        ret = packed.reshape(BF, Q, depth, hidden).transpose(2, 0, 1, 3)
    else:
        inp_f32 = inp_all.astype(jnp.float32)
        ret = jnp.zeros((depth, BF, Q, hidden), jnp.float32)
        for s in range(len(shift_list)):
            z = inp_f32[s, :, :in_f]
            r = inp_f32[s, :, in_f:in_f + 1]
            outs = modulator_ref(z, r, Ws, bs)
            ret = ret + jnp.stack(
                [o.reshape(BF, Q, hidden) for o in outs], axis=0)
    return ret


# ---------------------------------- main ----------------------------------- #
if __name__ == "__main__":
    key = jax.random.PRNGKey(0)
    B, z_dim, H, W, Q = 2, 4, 16, 16, 32
    hidden, depth = 32, 4
    BF = B * NUM_FRAMES
    in_f = z_dim * 9 + 4

    kx, kq, kc, kw = jax.random.split(key, 4)
    x = jax.random.normal(kx, (BF, z_dim, H, W), jnp.float32)
    query_coord = jax.random.uniform(kq, (B, Q, 2), jnp.float32, -1.0, 1.0)
    cell = (2.0 / (2 * H)) * (1.0 + 0.1 * jax.random.uniform(
        kc, (B, Q, 2), jnp.float32))

    # Deterministic Linear weights (shapes from Modulator: depth layers,
    # layer 0: in_f -> hidden, layers 1..depth-1: hidden+in_f -> hidden).
    Ws, bs = [], []
    dims = [in_f] + [hidden + in_f] * (depth - 1)
    wkeys = jax.random.split(kw, 2 * depth)
    for d, din in enumerate(dims):
        bound = float(din) ** -0.5
        Ws.append(jax.random.uniform(wkeys[2 * d], (din, hidden),
                                     jnp.float32, -bound, bound))
        bs.append(jax.random.uniform(wkeys[2 * d + 1], (hidden,),
                                     jnp.float32, -bound, bound))

    # Pallas (bf16 MXU path), Pallas (pure f32 path) and pure-JAX reference.
    ret = jax.block_until_ready(liif3d_forward(x, query_coord, cell, Ws, bs))
    ret_f32 = jax.block_until_ready(
        liif3d_forward(x, query_coord, cell, Ws, bs, use_bf16=False))
    ret_ref = jax.block_until_ready(
        liif3d_forward(x, query_coord, cell, Ws, bs, use_pallas=False))

    assert ret.shape == (depth, BF, Q, hidden)
    assert bool(jnp.all(jnp.isfinite(ret)))
    # Near-exact arithmetic check of the fused kernel (f32 vs f32 reference).
    assert bool(jnp.allclose(ret_f32, ret_ref, rtol=1e-4, atol=1e-4))
    # bf16 MXU path stays within a loose tolerance of the f32 reference.
    assert bool(jnp.allclose(ret, ret_ref, rtol=3e-2, atol=3e-2))
    print("KERNEL_OK")
</pallas_src>

<mosaic_0001>
module attributes {stable_mosaic.version = 11 : i64} {
  func.func @_modulator_fused_kernel(%arg0: i32, %arg1: memref<4x160x42xbf16, #tpu.memory_space<vmem>>, %arg2: memref<42x128xbf16, #tpu.memory_space<vmem>>, %arg3: memref<3x32x32xbf16, #tpu.memory_space<vmem>>, %arg4: memref<160x128xf32, #tpu.memory_space<vmem>>) attributes {dimension_semantics = [#tpu.dimension_semantics<parallel>], iteration_bounds = array<i64: 2>, scalar_prefetch = 0 : i64, scratch_operands = 0 : i64, tpu.core_type = #tpu.core_type<tc>, window_params = [{transform_indices = @transform_0, window_bounds = array<i64: 4, 160, 42>}, {pipeline_mode = #tpu.pipeline_mode<synchronous>, transform_indices = @transform_1, window_bounds = array<i64: 42, 128>}, {pipeline_mode = #tpu.pipeline_mode<synchronous>, transform_indices = @transform_2, window_bounds = array<i64: 3, 32, 32>}, {transform_indices = @transform_3, window_bounds = array<i64: 160, 128>}]} {
    %c0 = arith.constant 0 : index
    %c0_0 = arith.constant 0 : index
    %c0_1 = arith.constant 0 : index
    %0 = vector.load %arg1[%c0, %c0_0, %c0_1] : memref<4x160x42xbf16, #tpu.memory_space<vmem>>, vector<1x160x42xbf16>
    %1 = vector.shape_cast %0 : vector<1x160x42xbf16> to vector<160x42xbf16>
    %2 = vector.extract_strided_slice %1 {offsets = [0, 40], sizes = [160, 1], strides = [1, 1]} : vector<160x42xbf16> to vector<160x1xbf16>
    %3 = arith.extf %2 : vector<160x1xbf16> to vector<160x1xf32>
    %c0_2 = arith.constant 0 : index
    %c0_3 = arith.constant 0 : index
    %4 = vector.load %arg2[%c0_2, %c0_3] : memref<42x128xbf16, #tpu.memory_space<vmem>>, vector<42x128xbf16>
    %cst = arith.constant dense<0.000000e+00> : vector<160x128xf32>
    %5 = tpu.matmul %1, %4, %cst {dimension_numbers = #tpu.dot_dimension_numbers<[1], [0], [0], [1], [0, 0, 1, 1], [], []>} : vector<160x42xbf16>, vector<42x128xbf16>, vector<160x128xf32> -> vector<160x128xf32>
    %6 = vector.extract_strided_slice %5 {offsets = [0, 0], sizes = [160, 32], strides = [1, 1]} : vector<160x128xf32> to vector<160x32xf32>
    %cst_4 = arith.constant 0.000000e+00 : f32
    %7 = vector.broadcast %cst_4 : f32 to vector<160x32xf32>
    %8 = arith.maximumf %6, %7 : vector<160x32xf32>
    %9 = arith.truncf %8 : vector<160x32xf32> to vector<160x32xbf16>
    %c0_5 = arith.constant 0 : index
    %c0_6 = arith.constant 0 : index
    %c0_7 = arith.constant 0 : index
    %10 = vector.load %arg3[%c0_5, %c0_6, %c0_7] : memref<3x32x32xbf16, #tpu.memory_space<vmem>>, vector<1x32x32xbf16>
    %11 = vector.shape_cast %10 : vector<1x32x32xbf16> to vector<32x32xbf16>
    %cst_8 = arith.constant dense<0.000000e+00> : vector<160x32xf32>
    %12 = tpu.matmul %9, %11, %cst_8 {dimension_numbers = #tpu.dot_dimension_numbers<[1], [0], [0], [1], [0, 0, 1, 1], [], []>} : vector<160x32xbf16>, vector<32x32xbf16>, vector<160x32xf32> -> vector<160x32xf32>
    %13 = vector.extract_strided_slice %5 {offsets = [0, 32], sizes = [160, 32], strides = [1, 1]} : vector<160x128xf32> to vector<160x32xf32>
    %14 = arith.addf %12, %13 : vector<160x32xf32>
    %cst_9 = arith.constant 0.000000e+00 : f32
    %15 = vector.broadcast %cst_9 : f32 to vector<160x32xf32>
    %16 = arith.maximumf %14, %15 : vector<160x32xf32>
    %17 = arith.truncf %16 : vector<160x32xf32> to vector<160x32xbf16>
    %c1 = arith.constant 1 : index
    %c0_10 = arith.constant 0 : index
    %c0_11 = arith.constant 0 : index
    %18 = vector.load %arg3[%c1, %c0_10, %c0_11] : memref<3x32x32xbf16, #tpu.memory_space<vmem>>, vector<1x32x32xbf16>
    %19 = vector.shape_cast %18 : vector<1x32x32xbf16> to vector<32x32xbf16>
    %cst_12 = arith.constant dense<0.000000e+00> : vector<160x32xf32>
    %20 = tpu.matmul %17, %19, %cst_12 {dimension_numbers = #tpu.dot_dimension_numbers<[1], [0], [0], [1], [0, 0, 1, 1], [], []>} : vector<160x32xbf16>, vector<32x32xbf16>, vector<160x32xf32> -> vector<160x32xf32>
    %21 = vector.extract_strided_slice %5 {offsets = [0, 64], sizes = [160, 32], strides = [1, 1]} : vector<160x128xf32> to vector<160x32xf32>
    %22 = arith.addf %20, %21 : vector<160x32xf32>
    %cst_13 = arith.constant 0.000000e+00 : f32
    %23 = vector.broadcast %cst_13 : f32 to vector<160x32xf32>
    %24 = arith.maximumf %22, %23 : vector<160x32xf32>
    %25 = arith.truncf %24 : vector<160x32xf32> to vector<160x32xbf16>
    %c2 = arith.constant 2 : index
    %c0_14 = arith.constant 0 : index
    %c0_15 = arith.constant 0 : index
    %26 = vector.load %arg3[%c2, %c0_14, %c0_15] : memref<3x32x32xbf16, #tpu.memory_space<vmem>>, vector<1x32x32xbf16>
    %27 = vector.shape_cast %26 : vector<1x32x32xbf16> to vector<32x32xbf16>
    %cst_16 = arith.constant dense<0.000000e+00> : vector<160x32xf32>
    %28 = tpu.matmul %25, %27, %cst_16 {dimension_numbers = #tpu.dot_dimension_numbers<[1], [0], [0], [1], [0, 0, 1, 1], [], []>} : vector<160x32xbf16>, vector<32x32xbf16>, vector<160x32xf32> -> vector<160x32xf32>
    %29 = vector.extract_strided_slice %5 {offsets = [0, 96], sizes = [160, 32], strides = [1, 1]} : vector<160x128xf32> to vector<160x32xf32>
    %30 = arith.addf %28, %29 : vector<160x32xf32>
    %cst_17 = arith.constant 0.000000e+00 : f32
    %31 = vector.broadcast %cst_17 : f32 to vector<160x32xf32>
    %32 = arith.maximumf %30, %31 : vector<160x32xf32>
    %33 = tpu.concatenate %8, %16, %24, %32 in 1 : vector<160x32xf32>, vector<160x32xf32>, vector<160x32xf32>, vector<160x32xf32> -> vector<160x128xf32>
    %34 = vector.broadcast %3 : vector<160x1xf32> to vector<160x128xf32>
    %35 = arith.mulf %33, %34 : vector<160x128xf32>
    %c1_18 = arith.constant 1 : index
    %c0_19 = arith.constant 0 : index
    %c0_20 = arith.constant 0 : index
    %36 = vector.load %arg1[%c1_18, %c0_19, %c0_20] : memref<4x160x42xbf16, #tpu.memory_space<vmem>>, vector<1x160x42xbf16>
    %37 = vector.shape_cast %36 : vector<1x160x42xbf16> to vector<160x42xbf16>
    %38 = vector.extract_strided_slice %37 {offsets = [0, 40], sizes = [160, 1], strides = [1, 1]} : vector<160x42xbf16> to vector<160x1xbf16>
    %39 = arith.extf %38 : vector<160x1xbf16> to vector<160x1xf32>
    %c0_21 = arith.constant 0 : index
    %c0_22 = arith.constant 0 : index
    %40 = vector.load %arg2[%c0_21, %c0_22] : memref<42x128xbf16, #tpu.memory_space<vmem>>, vector<42x128xbf16>
    %cst_23 = arith.constant dense<0.000000e+00> : vector<160x128xf32>
    %41 = tpu.matmul %37, %40, %cst_23 {dimension_numbers = #tpu.dot_dimension_numbers<[1], [0], [0], [1], [0, 0, 1, 1], [], []>} : vector<160x42xbf16>, vector<42x128xbf16>, vector<160x128xf32> -> vector<160x128xf32>
    %42 = vector.extract_strided_slice %41 {offsets = [0, 0], sizes = [160, 32], strides = [1, 1]} : vector<160x128xf32> to vector<160x32xf32>
    %cst_24 = arith.constant 0.000000e+00 : f32
    %43 = vector.broadcast %cst_24 : f32 to vector<160x32xf32>
    %44 = arith.maximumf %42, %43 : vector<160x32xf32>
    %45 = arith.truncf %44 : vector<160x32xf32> to vector<160x32xbf16>
    %c0_25 = arith.constant 0 : index
    %c0_26 = arith.constant 0 : index
    %c0_27 = arith.constant 0 : index
    %46 = vector.load %arg3[%c0_25, %c0_26, %c0_27] : memref<3x32x32xbf16, #tpu.memory_space<vmem>>, vector<1x32x32xbf16>
    %47 = vector.shape_cast %46 : vector<1x32x32xbf16> to vector<32x32xbf16>
    %cst_28 = arith.constant dense<0.000000e+00> : vector<160x32xf32>
    %48 = tpu.matmul %45, %47, %cst_28 {dimension_numbers = #tpu.dot_dimension_numbers<[1], [0], [0], [1], [0, 0, 1, 1], [], []>} : vector<160x32xbf16>, vector<32x32xbf16>, vector<160x32xf32> -> vector<160x32xf32>
    %49 = vector.extract_strided_slice %41 {offsets = [0, 32], sizes = [160, 32], strides = [1, 1]} : vector<160x128xf32> to vector<160x32xf32>
    %50 = arith.addf %48, %49 : vector<160x32xf32>
    %cst_29 = arith.constant 0.000000e+00 : f32
    %51 = vector.broadcast %cst_29 : f32 to vector<160x32xf32>
    %52 = arith.maximumf %50, %51 : vector<160x32xf32>
    %53 = arith.truncf %52 : vector<160x32xf32> to vector<160x32xbf16>
    %c1_30 = arith.constant 1 : index
    %c0_31 = arith.constant 0 : index
    %c0_32 = arith.constant 0 : index
    %54 = vector.load %arg3[%c1_30, %c0_31, %c0_32] : memref<3x32x32xbf16, #tpu.memory_space<vmem>>, vector<1x32x32xbf16>
    %55 = vector.shape_cast %54 : vector<1x32x32xbf16> to vector<32x32xbf16>
    %cst_33 = arith.constant dense<0.000000e+00> : vector<160x32xf32>
    %56 = tpu.matmul %53, %55, %cst_33 {dimension_numbers = #tpu.dot_dimension_numbers<[1], [0], [0], [1], [0, 0, 1, 1], [], []>} : vector<160x32xbf16>, vector<32x32xbf16>, vector<160x32xf32> -> vector<160x32xf32>
    %57 = vector.extract_strided_slice %41 {offsets = [0, 64], sizes = [160, 32], strides = [1, 1]} : vector<160x128xf32> to vector<160x32xf32>
    %58 = arith.addf %56, %57 : vector<160x32xf32>
    %cst_34 = arith.constant 0.000000e+00 : f32
    %59 = vector.broadcast %cst_34 : f32 to vector<160x32xf32>
    %60 = arith.maximumf %58, %59 : vector<160x32xf32>
    %61 = arith.truncf %60 : vector<160x32xf32> to vector<160x32xbf16>
    %c2_35 = arith.constant 2 : index
    %c0_36 = arith.constant 0 : index
    %c0_37 = arith.constant 0 : index
    %62 = vector.load %arg3[%c2_35, %c0_36, %c0_37] : memref<3x32x32xbf16, #tpu.memory_space<vmem>>, vector<1x32x32xbf16>
    %63 = vector.shape_cast %62 : vector<1x32x32xbf16> to vector<32x32xbf16>
    %cst_38 = arith.constant dense<0.000000e+00> : vector<160x32xf32>
    %64 = tpu.matmul %61, %63, %cst_38 {dimension_numbers = #tpu.dot_dimension_numbers<[1], [0], [0], [1], [0, 0, 1, 1], [], []>} : vector<160x32xbf16>, vector<32x32xbf16>, vector<160x32xf32> -> vector<160x32xf32>
    %65 = vector.extract_strided_slice %41 {offsets = [0, 96], sizes = [160, 32], strides = [1, 1]} : vector<160x128xf32> to vector<160x32xf32>
    %66 = arith.addf %64, %65 : vector<160x32xf32>
    %cst_39 = arith.constant 0.000000e+00 : f32
    %67 = vector.broadcast %cst_39 : f32 to vector<160x32xf32>
    %68 = arith.maximumf %66, %67 : vector<160x32xf32>
    %69 = tpu.concatenate %44, %52, %60, %68 in 1 : vector<160x32xf32>, vector<160x32xf32>, vector<160x32xf32>, vector<160x32xf32> -> vector<160x128xf32>
    %70 = vector.broadcast %39 : vector<160x1xf32> to vector<160x128xf32>
    %71 = arith.mulf %69, %70 : vector<160x128xf32>
    %72 = arith.addf %35, %71 : vector<160x128xf32>
    %c2_40 = arith.constant 2 : index
    %c0_41 = arith.constant 0 : index
    %c0_42 = arith.constant 0 : index
    %73 = vector.load %arg1[%c2_40, %c0_41, %c0_42] : memref<4x160x42xbf16, #tpu.memory_space<vmem>>, vector<1x160x42xbf16>
    %74 = vector.shape_cast %73 : vector<1x160x42xbf16> to vector<160x42xbf16>
    %75 = vector.extract_strided_slice %74 {offsets = [0, 40], sizes = [160, 1], strides = [1, 1]} : vector<160x42xbf16> to vector<160x1xbf16>
    %76 = arith.extf %75 : vector<160x1xbf16> to vector<160x1xf32>
    %c0_43 = arith.constant 0 : index
    %c0_44 = arith.constant 0 : index
    %77 = vector.load %arg2[%c0_43, %c0_44] : memref<42x128xbf16, #tpu.memory_space<vmem>>, vector<42x128xbf16>
    %cst_45 = arith.constant dense<0.000000e+00> : vector<160x128xf32>
    %78 = tpu.matmul %74, %77, %cst_45 {dimension_numbers = #tpu.dot_dimension_numbers<[1], [0], [0], [1], [0, 0, 1, 1], [], []>} : vector<160x42xbf16>, vector<42x128xbf16>, vector<160x128xf32> -> vector<160x128xf32>
    %79 = vector.extract_strided_slice %78 {offsets = [0, 0], sizes = [160, 32], strides = [1, 1]} : vector<160x128xf32> to vector<160x32xf32>
    %cst_46 = arith.constant 0.000000e+00 : f32
    %80 = vector.broadcast %cst_46 : f32 to vector<160x32xf32>
    %81 = arith.maximumf %79, %80 : vector<160x32xf32>
    %82 = arith.truncf %81 : vector<160x32xf32> to vector<160x32xbf16>
    %c0_47 = arith.constant 0 : index
    %c0_48 = arith.constant 0 : index
    %c0_49 = arith.constant 0 : index
    %83 = vector.load %arg3[%c0_47, %c0_48, %c0_49] : memref<3x32x32xbf16, #tpu.memory_space<vmem>>, vector<1x32x32xbf16>
    %84 = vector.shape_cast %83 : vector<1x32x32xbf16> to vector<32x32xbf16>
    %cst_50 = arith.constant dense<0.000000e+00> : vector<160x32xf32>
    %85 = tpu.matmul %82, %84, %cst_50 {dimension_numbers = #tpu.dot_dimension_numbers<[1], [0], [0], [1], [0, 0, 1, 1], [], []>} : vector<160x32xbf16>, vector<32x32xbf16>, vector<160x32xf32> -> vector<160x32xf32>
    %86 = vector.extract_strided_slice %78 {offsets = [0, 32], sizes = [160, 32], strides = [1, 1]} : vector<160x128xf32> to vector<160x32xf32>
    %87 = arith.addf %85, %86 : vector<160x32xf32>
    %cst_51 = arith.constant 0.000000e+00 : f32
    %88 = vector.broadcast %cst_51 : f32 to vector<160x32xf32>
    %89 = arith.maximumf %87, %88 : vector<160x32xf32>
    %90 = arith.truncf %89 : vector<160x32xf32> to vector<160x32xbf16>
    %c1_52 = arith.constant 1 : index
    %c0_53 = arith.constant 0 : index
    %c0_54 = arith.constant 0 : index
    %91 = vector.load %arg3[%c1_52, %c0_53, %c0_54] : memref<3x32x32xbf16, #tpu.memory_space<vmem>>, vector<1x32x32xbf16>
    %92 = vector.shape_cast %91 : vector<1x32x32xbf16> to vector<32x32xbf16>
    %cst_55 = arith.constant dense<0.000000e+00> : vector<160x32xf32>
    %93 = tpu.matmul %90, %92, %cst_55 {dimension_numbers = #tpu.dot_dimension_numbers<[1], [0], [0], [1], [0, 0, 1, 1], [], []>} : vector<160x32xbf16>, vector<32x32xbf16>, vector<160x32xf32> -> vector<160x32xf32>
    %94 = vector.extract_strided_slice %78 {offsets = [0, 64], sizes = [160, 32], strides = [1, 1]} : vector<160x128xf32> to vector<160x32xf32>
    %95 = arith.addf %93, %94 : vector<160x32xf32>
    %cst_56 = arith.constant 0.000000e+00 : f32
    %96 = vector.broadcast %cst_56 : f32 to vector<160x32xf32>
    %97 = arith.maximumf %95, %96 : vector<160x32xf32>
    %98 = arith.truncf %97 : vector<160x32xf32> to vector<160x32xbf16>
    %c2_57 = arith.constant 2 : index
    %c0_58 = arith.constant 0 : index
    %c0_59 = arith.constant 0 : index
    %99 = vector.load %arg3[%c2_57, %c0_58, %c0_59] : memref<3x32x32xbf16, #tpu.memory_space<vmem>>, vector<1x32x32xbf16>
    %100 = vector.shape_cast %99 : vector<1x32x32xbf16> to vector<32x32xbf16>
    %cst_60 = arith.constant dense<0.000000e+00> : vector<160x32xf32>
    %101 = tpu.matmul %98, %100, %cst_60 {dimension_numbers = #tpu.dot_dimension_numbers<[1], [0], [0], [1], [0, 0, 1, 1], [], []>} : vector<160x32xbf16>, vector<32x32xbf16>, vector<160x32xf32> -> vector<160x32xf32>
    %102 = vector.extract_strided_slice %78 {offsets = [0, 96], sizes = [160, 32], strides = [1, 1]} : vector<160x128xf32> to vector<160x32xf32>
    %103 = arith.addf %101, %102 : vector<160x32xf32>
    %cst_61 = arith.constant 0.000000e+00 : f32
    %104 = vector.broadcast %cst_61 : f32 to vector<160x32xf32>
    %105 = arith.maximumf %103, %104 : vector<160x32xf32>
    %106 = tpu.concatenate %81, %89, %97, %105 in 1 : vector<160x32xf32>, vector<160x32xf32>, vector<160x32xf32>, vector<160x32xf32> -> vector<160x128xf32>
    %107 = vector.broadcast %76 : vector<160x1xf32> to vector<160x128xf32>
    %108 = arith.mulf %106, %107 : vector<160x128xf32>
    %109 = arith.addf %72, %108 : vector<160x128xf32>
    %c3 = arith.constant 3 : index
    %c0_62 = arith.constant 0 : index
    %c0_63 = arith.constant 0 : index
    %110 = vector.load %arg1[%c3, %c0_62, %c0_63] : memref<4x160x42xbf16, #tpu.memory_space<vmem>>, vector<1x160x42xbf16>
    %111 = vector.shape_cast %110 : vector<1x160x42xbf16> to vector<160x42xbf16>
    %112 = vector.extract_strided_slice %111 {offsets = [0, 40], sizes = [160, 1], strides = [1, 1]} : vector<160x42xbf16> to vector<160x1xbf16>
    %113 = arith.extf %112 : vector<160x1xbf16> to vector<160x1xf32>
    %c0_64 = arith.constant 0 : index
    %c0_65 = arith.constant 0 : index
    %114 = vector.load %arg2[%c0_64, %c0_65] : memref<42x128xbf16, #tpu.memory_space<vmem>>, vector<42x128xbf16>
    %cst_66 = arith.constant dense<0.000000e+00> : vector<160x128xf32>
    %115 = tpu.matmul %111, %114, %cst_66 {dimension_numbers = #tpu.dot_dimension_numbers<[1], [0], [0], [1], [0, 0, 1, 1], [], []>} : vector<160x42xbf16>, vector<42x128xbf16>, vector<160x128xf32> -> vector<160x128xf32>
    %116 = vector.extract_strided_slice %115 {offsets = [0, 0], sizes = [160, 32], strides = [1, 1]} : vector<160x128xf32> to vector<160x32xf32>
    %cst_67 = arith.constant 0.000000e+00 : f32
    %117 = vector.broadcast %cst_67 : f32 to vector<160x32xf32>
    %118 = arith.maximumf %116, %117 : vector<160x32xf32>
    %119 = arith.truncf %118 : vector<160x32xf32> to vector<160x32xbf16>
    %c0_68 = arith.constant 0 : index
    %c0_69 = arith.constant 0 : index
    %c0_70 = arith.constant 0 : index
    %120 = vector.load %arg3[%c0_68, %c0_69, %c0_70] : memref<3x32x32xbf16, #tpu.memory_space<vmem>>, vector<1x32x32xbf16>
    %121 = vector.shape_cast %120 : vector<1x32x32xbf16> to vector<32x32xbf16>
    %cst_71 = arith.constant dense<0.000000e+00> : vector<160x32xf32>
    %122 = tpu.matmul %119, %121, %cst_71 {dimension_numbers = #tpu.dot_dimension_numbers<[1], [0], [0], [1], [0, 0, 1, 1], [], []>} : vector<160x32xbf16>, vector<32x32xbf16>, vector<160x32xf32> -> vector<160x32xf32>
    %123 = vector.extract_strided_slice %115 {offsets = [0, 32], sizes = [160, 32], strides = [1, 1]} : vector<160x128xf32> to vector<160x32xf32>
    %124 = arith.addf %122, %123 : vector<160x32xf32>
    %cst_72 = arith.constant 0.000000e+00 : f32
    %125 = vector.broadcast %cst_72 : f32 to vector<160x32xf32>
    %126 = arith.maximumf %124, %125 : vector<160x32xf32>
    %127 = arith.truncf %126 : vector<160x32xf32> to vector<160x32xbf16>
    %c1_73 = arith.constant 1 : index
    %c0_74 = arith.constant 0 : index
    %c0_75 = arith.constant 0 : index
    %128 = vector.load %arg3[%c1_73, %c0_74, %c0_75] : memref<3x32x32xbf16, #tpu.memory_space<vmem>>, vector<1x32x32xbf16>
    %129 = vector.shape_cast %128 : vector<1x32x32xbf16> to vector<32x32xbf16>
    %cst_76 = arith.constant dense<0.000000e+00> : vector<160x32xf32>
    %130 = tpu.matmul %127, %129, %cst_76 {dimension_numbers = #tpu.dot_dimension_numbers<[1], [0], [0], [1], [0, 0, 1, 1], [], []>} : vector<160x32xbf16>, vector<32x32xbf16>, vector<160x32xf32> -> vector<160x32xf32>
    %131 = vector.extract_strided_slice %115 {offsets = [0, 64], sizes = [160, 32], strides = [1, 1]} : vector<160x128xf32> to vector<160x32xf32>
    %132 = arith.addf %130, %131 : vector<160x32xf32>
    %cst_77 = arith.constant 0.000000e+00 : f32
    %133 = vector.broadcast %cst_77 : f32 to vector<160x32xf32>
    %134 = arith.maximumf %132, %133 : vector<160x32xf32>
    %135 = arith.truncf %134 : vector<160x32xf32> to vector<160x32xbf16>
    %c2_78 = arith.constant 2 : index
    %c0_79 = arith.constant 0 : index
    %c0_80 = arith.constant 0 : index
    %136 = vector.load %arg3[%c2_78, %c0_79, %c0_80] : memref<3x32x32xbf16, #tpu.memory_space<vmem>>, vector<1x32x32xbf16>
    %137 = vector.shape_cast %136 : vector<1x32x32xbf16> to vector<32x32xbf16>
    %cst_81 = arith.constant dense<0.000000e+00> : vector<160x32xf32>
    %138 = tpu.matmul %135, %137, %cst_81 {dimension_numbers = #tpu.dot_dimension_numbers<[1], [0], [0], [1], [0, 0, 1, 1], [], []>} : vector<160x32xbf16>, vector<32x32xbf16>, vector<160x32xf32> -> vector<160x32xf32>
    %139 = vector.extract_strided_slice %115 {offsets = [0, 96], sizes = [160, 32], strides = [1, 1]} : vector<160x128xf32> to vector<160x32xf32>
    %140 = arith.addf %138, %139 : vector<160x32xf32>
    %cst_82 = arith.constant 0.000000e+00 : f32
    %141 = vector.broadcast %cst_82 : f32 to vector<160x32xf32>
    %142 = arith.maximumf %140, %141 : vector<160x32xf32>
    %143 = tpu.concatenate %118, %126, %134, %142 in 1 : vector<160x32xf32>, vector<160x32xf32>, vector<160x32xf32>, vector<160x32xf32> -> vector<160x128xf32>
    %144 = vector.broadcast %113 : vector<160x1xf32> to vector<160x128xf32>
    %145 = arith.mulf %143, %144 : vector<160x128xf32>
    %146 = arith.addf %109, %145 : vector<160x128xf32>
    %c0_83 = arith.constant 0 : index
    %c0_84 = arith.constant 0 : index
    %147 = vector.load %arg4[%c0_83, %c0_84] : memref<160x128xf32, #tpu.memory_space<vmem>>, vector<160x128xf32>
    tpu.vector_store %arg4[%c0_83, %c0_84], %146 {strides = array<i32>} : memref<160x128xf32, #tpu.memory_space<vmem>>, vector<160x128xf32>,
    return
  }
  func.func @transform_0(%arg0: i32) -> (i32, i32, i32) {
    %c0_i32 = arith.constant 0 : i32
    %c0_i32_0 = arith.constant 0 : i32
    %c0_i32_1 = arith.constant 0 : i32
    return %c0_i32, %arg0, %c0_i32_0 : i32, i32, i32
  }
  func.func @transform_1(%arg0: i32) -> (i32, i32) {
    %c0_i32 = arith.constant 0 : i32
    %c0_i32_0 = arith.constant 0 : i32
    %c0_i32_1 = arith.constant 0 : i32
    return %c0_i32, %c0_i32_0 : i32, i32
  }
  func.func @transform_2(%arg0: i32) -> (i32, i32, i32) {
    %c0_i32 = arith.constant 0 : i32
    %c0_i32_0 = arith.constant 0 : i32
    %c0_i32_1 = arith.constant 0 : i32
    %c0_i32_2 = arith.constant 0 : i32
    return %c0_i32, %c0_i32_0, %c0_i32_1 : i32, i32, i32
  }
  func.func @transform_3(%arg0: i32) -> (i32, i32) {
    %c0_i32 = arith.constant 0 : i32
    %c0_i32_0 = arith.constant 0 : i32
    return %arg0, %c0_i32 : i32, i32
  }
}

</mosaic_0001>

<llo_original>
// kernel: tpu_custom_call.1
$region0: #{tpu_custom_call.1}
  #allocation0 [shape = 'u32[]', space=smem, size = 0x4, offset = 0x4, fixed_abs, tag = 'smem constant byte address 0x4 - core index']
  #allocation1 [shape = 'u32[144,128]{1,0:T(1,128)}', space=vmem, size = 0x12000, scoped, tag = 'internal scratch']
  %s0 = inlined_call_operand.vmem [shape: bf16[4,320,42], index: 0, kind: input, shape index: {}]
  %s1 = inlined_call_operand.vmem [shape: bf16[42,128], index: 1, kind: input, shape index: {}]
  %s2 = inlined_call_operand.vmem [shape: bf16[3,32,32], index: 2, kind: input, shape index: {}]
  %s3 = inlined_call_operand.hbm [shape: f32[320,128], index: 3, kind: output, shape index: {}]
  %s4 = sld [smem:[#allocation0]]
  $region86: #{tpu_custom_call.1} parent=0
    _
  %s6 = ssub.s32 1, %s4
  %s7 = scalar_select 0, %s6, %s4
  $region1: #{tpu_custom_call.1} parent=0
    #allocation2 [shape = 'u8[327680]{0}', space=vmem, size = 0x50000, scoped, tag = 'input window, operand 0']
    #allocation3 [shape = 'u8[163840]{0}', space=vmem, size = 0x28000, scoped, tag = 'output window, operand 0']
    #allocation4 [shape = 's32[2]{0}', space=sflag, size = 0x8, scoped, tag = 'scoped memory for tpu_custom_call.1']
    %8 = vsyncpa [#allocation4], 0
    %s9 = scalar_lea.sflag [#allocation4], 1
    %10 = vsyncpa %s9, 0
    loop: start=0, step=1, limit=4
    $region2: #{tpu_custom_call.1} parent=1 // loop_pre_header
      _
    $region3: #{tpu_custom_call.1} parent=1 // loop_header
      %s12 = sphi 0, %s16
      %p13 = scmp.ge.s32.totalorder %s12, 4
      %s22 = sphi 0, %s24
      %s25 = sphi 0, %s22
      %s26 = sphi 0, %s25
      %s42 = sphi 0, %s26
      %s46 = sphi 0, %s46
      %s48 = sphi 0, %s46
      %s49 = sphi 0, %s48
      %s63 = sphi 0, %s49
      %s67 = sphi 0, %s67
      %s69 = sphi 0, %s67
      %s70 = sphi 0, %s69
      %s84 = sphi 0, %s70
      %s90 = sphi 0, %s92
      %s93 = sphi 0, %s90
      %s94 = sphi 0, %s93
      %s110 = sphi 0, %s94
    $region4: #{tpu_custom_call.1} parent=1 // loop_header_branch
      %15 = sbr.rel (%p13) target = $region8
    $region5: #{tpu_custom_call.1} parent=1 // loop_body
      %s17 = ssub.s32 %s12, 1
      %s18 = ssub.s32 %s12, 2
      %s19 = sadd.s32 %s12, 1
      %s20 = ssub.s32 %s12, %s19
      %p21 = scmp.eq.s32.totalorder %s20, 0
      %s23 = sadd.s32 %s22, 1
      %s24 = scalar_select %p21, %s22, %s23
      %p27 = pneg %p21
      %p28 = scmp.eq.s32.totalorder %s12, 1
      %p29 = por %p27, %p28
      %p30 = scmp.ne.s32.totalorder %s22, %s25
      %p31 = scmp.eq.s32.totalorder %s12, 0
      %p32 = por %p30, %p31
      %p33 = scmp.ne.s32.totalorder %s22, %s25
      %p34 = scmp.eq.s32.totalorder %s17, 1
      %p35 = por %p33, %p34
      %p36 = scmp.ne.s32.totalorder %s25, %s26
      %p37 = scmp.eq.s32.totalorder %s17, 0
      %p38 = por %p36, %p37
      %p39 = scmp.ne.s32.totalorder %s25, %s26
      %p40 = scmp.eq.s32.totalorder %s18, 1
      %p41 = por %p39, %p40
      %p43 = scmp.ne.s32.totalorder %s26, %s42
      %p44 = scmp.eq.s32.totalorder %s18, 0
      %p45 = por %p43, %p44
      %s47 = sadd.s32 %s46, 1
      %p50 = scmp.eq.s32.totalorder %s12, 1
      %p51 = scmp.ne.s32.totalorder %s46, %s48
      %p52 = scmp.eq.s32.totalorder %s12, 0
      %p53 = por %p51, %p52
      %p54 = scmp.ne.s32.totalorder %s46, %s48
      %p55 = scmp.eq.s32.totalorder %s17, 1
      %p56 = por %p54, %p55
      %p57 = scmp.ne.s32.totalorder %s48, %s49
      %p58 = scmp.eq.s32.totalorder %s17, 0
      %p59 = por %p57, %p58
      %p60 = scmp.ne.s32.totalorder %s48, %s49
      %p61 = scmp.eq.s32.totalorder %s18, 1
      %p62 = por %p60, %p61
      %p64 = scmp.ne.s32.totalorder %s49, %s63
      %p65 = scmp.eq.s32.totalorder %s18, 0
      %p66 = por %p64, %p65
      %s68 = sadd.s32 %s67, 1
      %p71 = scmp.eq.s32.totalorder %s12, 1
      %p72 = scmp.ne.s32.totalorder %s67, %s69
      %p73 = scmp.eq.s32.totalorder %s12, 0
      %p74 = por %p72, %p73
      %p75 = scmp.ne.s32.totalorder %s67, %s69
      %p76 = scmp.eq.s32.totalorder %s17, 1
      %p77 = por %p75, %p76
      %p78 = scmp.ne.s32.totalorder %s69, %s70
      %p79 = scmp.eq.s32.totalorder %s17, 0
      %p80 = por %p78, %p79
      %p81 = scmp.ne.s32.totalorder %s69, %s70
      %p82 = scmp.eq.s32.totalorder %s18, 1
      %p83 = por %p81, %p82
      %p85 = scmp.ne.s32.totalorder %s70, %s84
      %p86 = scmp.eq.s32.totalorder %s18, 0
      %p87 = por %p85, %p86
      %s88 = ssub.s32 %s12, %s19
      %p89 = scmp.eq.s32.totalorder %s88, 0
      %s91 = sadd.s32 %s90, 1
      %s92 = scalar_select %p89, %s90, %s91
      %p95 = pneg %p89
      %p96 = scmp.eq.s32.totalorder %s12, 1
      %p97 = por %p95, %p96
      %p98 = scmp.ne.s32.totalorder %s90, %s93
      %p99 = scmp.eq.s32.totalorder %s12, 0
      %p100 = por %p98, %p99
      %p101 = scmp.ne.s32.totalorder %s90, %s93
      %p102 = scmp.eq.s32.totalorder %s17, 1
      %p103 = por %p101, %p102
      %p104 = scmp.ne.s32.totalorder %s93, %s94
      %p105 = scmp.eq.s32.totalorder %s17, 0
      %p106 = por %p104, %p105
      %p107 = scmp.ne.s32.totalorder %s93, %s94
      %p108 = scmp.eq.s32.totalorder %s18, 1
      %p109 = por %p107, %p108
      %p111 = scmp.ne.s32.totalorder %s94, %s110
      %p112 = scmp.eq.s32.totalorder %s18, 0
      %p113 = por %p111, %p112
      %p114 = scmp.le.s32.totalorder 1, %s12
      %p115 = scmp.lt.s32.totalorder %s12, 3
      %p116 = pnand %p114, %p115
      %p117 = pneg %p116
      // Predicated region
      $region9: #{tpu_custom_call.1} parent=5 // pred_check
        _
      $region10: #{tpu_custom_call.1} parent=5 // pred_check_branch
        %119 = sbr.rel (%p116) target = $region12
      $region11: #{tpu_custom_call.1} parent=5 // pred_region
        %s120 = ssub.s32 %s12, 1
        // Predicated region
        $region13: #{tpu_custom_call.1} parent=11 // pred_check
          %p121 = pneg %p59
        $region14: #{tpu_custom_call.1} parent=11 // pred_check_branch
          %123 = sbr.rel (%p121) target = $region16
        $region15: #{tpu_custom_call.1} parent=11 // pred_region
          _
        $region16: #{tpu_custom_call.1} parent=11 // pred_fallthru
          _
        // Predicated region
        $region17: #{tpu_custom_call.1} parent=11 // pred_check
          %p124 = pneg %p80
        $region18: #{tpu_custom_call.1} parent=11 // pred_check_branch
          %126 = sbr.rel (%p124) target = $region20
        $region19: #{tpu_custom_call.1} parent=11 // pred_region
          _
        $region20: #{tpu_custom_call.1} parent=11 // pred_fallthru
          _
      $region12: #{tpu_custom_call.1} parent=5 // pred_fallthru
        _
      %p127 = scmp.lt.s32.totalorder %s12, 2
      // Predicated region
      $region21: #{tpu_custom_call.1} parent=5 // pred_check
        %p128 = pneg %p127
      $region22: #{tpu_custom_call.1} parent=5 // pred_check_branch
        %130 = sbr.rel (%p128) target = $region24
      $region23: #{tpu_custom_call.1} parent=5 // pred_region
        // Predicated region
        $region25: #{tpu_custom_call.1} parent=23 // pred_check
          %p131 = pneg %p32
        $region26: #{tpu_custom_call.1} parent=23 // pred_check_branch
          %133 = sbr.rel (%p131) target = $region28
        $region27: #{tpu_custom_call.1} parent=23 // pred_region
          %s134 = sand.u32 %s22, 1
          %s135 = sand.u32 %s22, 1
          %s136 = smul.addr %s135, 320
          %s137 = scalar_lea.vmem [#allocation2], %s136
          %s138 = smul.u32 20, %s12
          %s139 = smul.addr %s138, 4
          %s140 = scalar_lea.vmem %s0, %s139
          // Predicated region
          $region29: #{tpu_custom_call.1} parent=27 // pred_check
            _
          $region30: #{tpu_custom_call.1} parent=27 // pred_check_branch
            %142 = sbr.rel (0) target = $region32
          $region31: #{tpu_custom_call.1} parent=27 // pred_region
            // Predicated region
            $region33: #{tpu_custom_call.1} parent=31 // pred_check
              _
            $region34: #{tpu_custom_call.1} parent=31 // pred_check_branch
              %144 = sbr.rel target = $region36
            $region35: #{tpu_custom_call.1} parent=31 // pred_region
              // Predicated region
              $region48: #{tpu_custom_call.1} parent=35 // pred_check
                _
              $region49: #{tpu_custom_call.1} parent=35 // pred_check_branch
                %318 = sbr.rel (0) target = $region51
              $region50: #{tpu_custom_call.1} parent=35 // pred_region
                loop: start=0, step=1, limit=1
                $region52: #{tpu_custom_call.1} parent=50 // loop_pre_header
                  _
                $region53: #{tpu_custom_call.1} parent=50 // loop_header
                  %s320 = sphi 0, %s324
                  %p321 = scmp.ge.s32.totalorder %s320, 1
                  %s325 = sphi %s140, %s140
                  %s326 = sphi %s137, %s137
                $region54: #{tpu_custom_call.1} parent=50 // loop_header_branch
                  %323 = sbr.rel (%p321) target = $region58
                $region55: #{tpu_custom_call.1} parent=50 // loop_body
                  _
                $region56: #{tpu_custom_call.1} parent=50 // loop_footer
                  %s324 = sadd.s32 1, %s320
                $region57: #{tpu_custom_call.1} parent=50 // loop_footer_branch
                  %319 = sbr.rel target = $region53
                $region58: #{tpu_custom_call.1} parent=50 // loop_exit
                  _
                %s328 = ssub.s32 16, 1
                loop: start=0, step=1, limit=1
                $region59: #{tpu_custom_call.1} parent=50 // loop_pre_header
                  _
                $region60: #{tpu_custom_call.1} parent=50 // loop_header
                  %s330 = sphi 0, %s334
                  %p331 = scmp.ge.s32.totalorder %s330, 1
                  %s335 = sphi %s140, %s140
                  %s336 = sphi %s137, %s137
                $region61: #{tpu_custom_call.1} parent=50 // loop_header_branch
                  %333 = sbr.rel (%p331) target = $region65
                $region62: #{tpu_custom_call.1} parent=50 // loop_body
                  %v337 = vld [vmem:[%s335] sm:%s328]
                  %338 = vst [vmem:[%s336] sm:%s328] %v337
                  %v339 = vld [vmem:[%s335 + $0x4] sm:%s328]
                  %340 = vst [vmem:[%s336 + $0x4] sm:%s328] %v339
                  %v341 = vld [vmem:[%s335 + $0x8] sm:%s328]
                  %342 = vst [vmem:[%s336 + $0x8] sm:%s328] %v341
                  %v343 = vld [vmem:[%s335 + $0xc] sm:%s328]
                  %344 = vst [vmem:[%s336 + $0xc] sm:%s328] %v343
                  %v345 = vld [vmem:[%s335 + $0x10] sm:%s328]
                  %346 = vst [vmem:[%s336 + $0x10] sm:%s328] %v345
                  %v347 = vld [vmem:[%s335 + $0x14] sm:%s328]
                  %348 = vst [vmem:[%s336 + $0x14] sm:%s328] %v347
                  %v349 = vld [vmem:[%s335 + $0x18] sm:%s328]
                  %350 = vst [vmem:[%s336 + $0x18] sm:%s328] %v349
                  %v351 = vld [vmem:[%s335 + $0x1c] sm:%s328]
                  %352 = vst [vmem:[%s336 + $0x1c] sm:%s328] %v351
                  %v353 = vld [vmem:[%s335 + $0x20] sm:%s328]
                  %354 = vst [vmem:[%s336 + $0x20] sm:%s328] %v353
                  %v355 = vld [vmem:[%s335 + $0x24] sm:%s328]
                  %356 = vst [vmem:[%s336 + $0x24] sm:%s328] %v355
                  %v357 = vld [vmem:[%s335 + $0x28] sm:%s328]
                  %358 = vst [vmem:[%s336 + $0x28] sm:%s328] %v357
                  %v359 = vld [vmem:[%s335 + $0x2c] sm:%s328]
                  %360 = vst [vmem:[%s336 + $0x2c] sm:%s328] %v359
                  %v361 = vld [vmem:[%s335 + $0x30] sm:%s328]
                  %362 = vst [vmem:[%s336 + $0x30] sm:%s328] %v361
                  %v363 = vld [vmem:[%s335 + $0x34] sm:%s328]
                  %364 = vst [vmem:[%s336 + $0x34] sm:%s328] %v363
                  %v365 = vld [vmem:[%s335 + $0x38] sm:%s328]
                  %366 = vst [vmem:[%s336 + $0x38] sm:%s328] %v365
                  %v367 = vld [vmem:[%s335 + $0x3c] sm:%s328]
                  %368 = vst [vmem:[%s336 + $0x3c] sm:%s328] %v367
                  %v369 = vld [vmem:[%s335 + $0x40] sm:%s328]
                  %370 = vst [vmem:[%s336 + $0x40] sm:%s328] %v369
                  %v371 = vld [vmem:[%s335 + $0x44] sm:%s328]
                  %372 = vst [vmem:[%s336 + $0x44] sm:%s328] %v371
                  %v373 = vld [vmem:[%s335 + $0x48] sm:%s328]
                  %374 = vst [vmem:[%s336 + $0x48] sm:%s328] %v373
                  %v375 = vld [vmem:[%s335 + $0x4c] sm:%s328]
                  %376 = vst [vmem:[%s336 + $0x4c] sm:%s328] %v375
                  %v377 = vld [vmem:[%s335 + $0xa0] sm:%s328]
                  %378 = vst [vmem:[%s336 + $0x50] sm:%s328] %v377
                  %v379 = vld [vmem:[%s335 + $0xa4] sm:%s328]
                  %380 = vst [vmem:[%s336 + $0x54] sm:%s328] %v379
                  %v381 = vld [vmem:[%s335 + $0xa8] sm:%s328]
                  %382 = vst [vmem:[%s336 + $0x58] sm:%s328] %v381
                  %v383 = vld [vmem:[%s335 + $0xac] sm:%s328]
                  %384 = vst [vmem:[%s336 + $0x5c] sm:%s328] %v383
                  %v385 = vld [vmem:[%s335 + $0xb0] sm:%s328]
                  %386 = vst [vmem:[%s336 + $0x60] sm:%s328] %v385
                  %v387 = vld [vmem:[%s335 + $0xb4] sm:%s328]
                  %388 = vst [vmem:[%s336 + $0x64] sm:%s328] %v387
                  %v389 = vld [vmem:[%s335 + $0xb8] sm:%s328]
                  %390 = vst [vmem:[%s336 + $0x68] sm:%s328] %v389
                  %v391 = vld [vmem:[%s335 + $0xbc] sm:%s328]
                  %392 = vst [vmem:[%s336 + $0x6c] sm:%s328] %v391
                  %v393 = vld [vmem:[%s335 + $0xc0] sm:%s328]
                  %394 = vst [vmem:[%s336 + $0x70] sm:%s328] %v393
                  %v395 = vld [vmem:[%s335 + $0xc4] sm:%s328]
                  %396 = vst [vmem:[%s336 + $0x74] sm:%s328] %v395
                  %v397 = vld [vmem:[%s335 + $0xc8] sm:%s328]
                  %398 = vst [vmem:[%s336 + $0x78] sm:%s328] %v397
                  %v399 = vld [vmem:[%s335 + $0xcc] sm:%s328]
                  %400 = vst [vmem:[%s336 + $0x7c] sm:%s328] %v399
                  %v401 = vld [vmem:[%s335 + $0xd0] sm:%s328]
                  %402 = vst [vmem:[%s336 + $0x80] sm:%s328] %v401
                  %v403 = vld [vmem:[%s335 + $0xd4] sm:%s328]
                  %404 = vst [vmem:[%s336 + $0x84] sm:%s328] %v403
                  %v405 = vld [vmem:[%s335 + $0xd8] sm:%s328]
                  %406 = vst [vmem:[%s336 + $0x88] sm:%s328] %v405
                  %v407 = vld [vmem:[%s335 + $0xdc] sm:%s328]
                  %408 = vst [vmem:[%s336 + $0x8c] sm:%s328] %v407
                  %v409 = vld [vmem:[%s335 + $0xe0] sm:%s328]
                  %410 = vst [vmem:[%s336 + $0x90] sm:%s328] %v409
                  %v411 = vld [vmem:[%s335 + $0xe4] sm:%s328]
                  %412 = vst [vmem:[%s336 + $0x94] sm:%s328] %v411
                  %v413 = vld [vmem:[%s335 + $0xe8] sm:%s328]
                  %414 = vst [vmem:[%s336 + $0x98] sm:%s328] %v413
                  %v415 = vld [vmem:[%s335 + $0xec] sm:%s328]
                  %416 = vst [vmem:[%s336 + $0x9c] sm:%s328] %v415
                  %v417 = vld [vmem:[%s335 + $0x140] sm:%s328]
                  %418 = vst [vmem:[%s336 + $0xa0] sm:%s328] %v417
                  %v419 = vld [vmem:[%s335 + $0x144] sm:%s328]
                  %420 = vst [vmem:[%s336 + $0xa4] sm:%s328] %v419
                  %v421 = vld [vmem:[%s335 + $0x148] sm:%s328]
                  %422 = vst [vmem:[%s336 + $0xa8] sm:%s328] %v421
                  %v423 = vld [vmem:[%s335 + $0x14c] sm:%s328]
                  %424 = vst [vmem:[%s336 + $0xac] sm:%s328] %v423
                  %v425 = vld [vmem:[%s335 + $0x150] sm:%s328]
                  %426 = vst [vmem:[%s336 + $0xb0] sm:%s328] %v425
                  %v427 = vld [vmem:[%s335 + $0x154] sm:%s328]
                  %428 = vst [vmem:[%s336 + $0xb4] sm:%s328] %v427
                  %v429 = vld [vmem:[%s335 + $0x158] sm:%s328]
                  %430 = vst [vmem:[%s336 + $0xb8] sm:%s328] %v429
                  %v431 = vld [vmem:[%s335 + $0x15c] sm:%s328]
                  %432 = vst [vmem:[%s336 + $0xbc] sm:%s328] %v431
                  %v433 = vld [vmem:[%s335 + $0x160] sm:%s328]
                  %434 = vst [vmem:[%s336 + $0xc0] sm:%s328] %v433
                  %v435 = vld [vmem:[%s335 + $0x164] sm:%s328]
                  %436 = vst [vmem:[%s336 + $0xc4] sm:%s328] %v435
                  %v437 = vld [vmem:[%s335 + $0x168] sm:%s328]
                  %438 = vst [vmem:[%s336 + $0xc8] sm:%s328] %v437
                  %v439 = vld [vmem:[%s335 + $0x16c] sm:%s328]
                  %440 = vst [vmem:[%s336 + $0xcc] sm:%s328] %v439
                  %v441 = vld [vmem:[%s335 + $0x170] sm:%s328]
                  %442 = vst [vmem:[%s336 + $0xd0] sm:%s328] %v441
                  %v443 = vld [vmem:[%s335 + $0x174] sm:%s328]
                  %444 = vst [vmem:[%s336 + $0xd4] sm:%s328] %v443
                  %v445 = vld [vmem:[%s335 + $0x178] sm:%s328]
                  %446 = vst [vmem:[%s336 + $0xd8] sm:%s328] %v445
                  %v447 = vld [vmem:[%s335 + $0x17c] sm:%s328]
                  %448 = vst [vmem:[%s336 + $0xdc] sm:%s328] %v447
                  %v449 = vld [vmem:[%s335 + $0x180] sm:%s328]
                  %450 = vst [vmem:[%s336 + $0xe0] sm:%s328] %v449
                  %v451 = vld [vmem:[%s335 + $0x184] sm:%s328]
                  %452 = vst [vmem:[%s336 + $0xe4] sm:%s328] %v451
                  %v453 = vld [vmem:[%s335 + $0x188] sm:%s328]
                  %454 = vst [vmem:[%s336 + $0xe8] sm:%s328] %v453
                  %v455 = vld [vmem:[%s335 + $0x18c] sm:%s328]
                  %456 = vst [vmem:[%s336 + $0xec] sm:%s328] %v455
                  %v457 = vld [vmem:[%s335 + $0x1e0] sm:%s328]
                  %458 = vst [vmem:[%s336 + $0xf0] sm:%s328] %v457
                  %v459 = vld [vmem:[%s335 + $0x1e4] sm:%s328]
                  %460 = vst [vmem:[%s336 + $0xf4] sm:%s328] %v459
                  %v461 = vld [vmem:[%s335 + $0x1e8] sm:%s328]
                  %462 = vst [vmem:[%s336 + $0xf8] sm:%s328] %v461
                  %v463 = vld [vmem:[%s335 + $0x1ec] sm:%s328]
                  %464 = vst [vmem:[%s336 + $0xfc] sm:%s328] %v463
                  %v465 = vld [vmem:[%s335 + $0x1f0] sm:%s328]
                  %466 = vst [vmem:[%s336 + $0x100] sm:%s328] %v465
                  %v467 = vld [vmem:[%s335 + $0x1f4] sm:%s328]
                  %468 = vst [vmem:[%s336 + $0x104] sm:%s328] %v467
                  %v469 = vld [vmem:[%s335 + $0x1f8] sm:%s328]
                  %470 = vst [vmem:[%s336 + $0x108] sm:%s328] %v469
                  %v471 = vld [vmem:[%s335 + $0x1fc] sm:%s328]
                  %472 = vst [vmem:[%s336 + $0x10c] sm:%s328] %v471
                  %v473 = vld [vmem:[%s335 + $0x200] sm:%s328]
                  %474 = vst [vmem:[%s336 + $0x110] sm:%s328] %v473
                  %v475 = vld [vmem:[%s335 + $0x204] sm:%s328]
                  %476 = vst [vmem:[%s336 + $0x114] sm:%s328] %v475
                  %v477 = vld [vmem:[%s335 + $0x208] sm:%s328]
                  %478 = vst [vmem:[%s336 + $0x118] sm:%s328] %v477
                  %v479 = vld [vmem:[%s335 + $0x20c] sm:%s328]
                  %480 = vst [vmem:[%s336 + $0x11c] sm:%s328] %v479
                  %v481 = vld [vmem:[%s335 + $0x210] sm:%s328]
                  %482 = vst [vmem:[%s336 + $0x120] sm:%s328] %v481
                  %v483 = vld [vmem:[%s335 + $0x214] sm:%s328]
                  %484 = vst [vmem:[%s336 + $0x124] sm:%s328] %v483
                  %v485 = vld [vmem:[%s335 + $0x218] sm:%s328]
                  %486 = vst [vmem:[%s336 + $0x128] sm:%s328] %v485
                  %v487 = vld [vmem:[%s335 + $0x21c] sm:%s328]
                  %488 = vst [vmem:[%s336 + $0x12c] sm:%s328] %v487
                  %v489 = vld [vmem:[%s335 + $0x220] sm:%s328]
                  %490 = vst [vmem:[%s336 + $0x130] sm:%s328] %v489
                  %v491 = vld [vmem:[%s335 + $0x224] sm:%s328]
                  %492 = vst [vmem:[%s336 + $0x134] sm:%s328] %v491
                  %v493 = vld [vmem:[%s335 + $0x228] sm:%s328]
                  %494 = vst [vmem:[%s336 + $0x138] sm:%s328] %v493
                  %v495 = vld [vmem:[%s335 + $0x22c] sm:%s328]
                  %496 = vst [vmem:[%s336 + $0x13c] sm:%s328] %v495
                $region63: #{tpu_custom_call.1} parent=50 // loop_footer
                  %s334 = sadd.s32 1, %s330
                $region64: #{tpu_custom_call.1} parent=50 // loop_footer_branch
                  %329 = sbr.rel target = $region60
                $region65: #{tpu_custom_call.1} parent=50 // loop_exit
                  _
              $region51: #{tpu_custom_call.1} parent=35 // pred_fallthru
                _
            $region36: #{tpu_custom_call.1} parent=31 // pred_fallthru
              _
            // Predicated region
            $region37: #{tpu_custom_call.1} parent=31 // pred_check
              _
            $region38: #{tpu_custom_call.1} parent=31 // pred_check_branch
              %146 = sbr.rel (0) target = $region40
            $region39: #{tpu_custom_call.1} parent=31 // pred_region
              %s148 = ssub.s32 16, 1
              loop: start=0, step=1, limit=1
              $region41: #{tpu_custom_call.1} parent=39 // loop_pre_header
                _
              $region42: #{tpu_custom_call.1} parent=39 // loop_header
                %s150 = sphi 0, %s154
                %p151 = scmp.ge.s32.totalorder %s150, 1
                %s155 = sphi %s140, %s140
                %s156 = sphi %s137, %s137
              $region43: #{tpu_custom_call.1} parent=39 // loop_header_branch
                %153 = sbr.rel (%p151) target = $region47
              $region44: #{tpu_custom_call.1} parent=39 // loop_body
                %v157 = vld [vmem:[%s155] sm:%s148]
                %158 = vst [vmem:[%s156] sm:%s148] %v157
                %v159 = vld [vmem:[%s155 + $0x4] sm:%s148]
                %160 = vst [vmem:[%s156 + $0x4] sm:%s148] %v159
                %v161 = vld [vmem:[%s155 + $0x8] sm:%s148]
                %162 = vst [vmem:[%s156 + $0x8] sm:%s148] %v161
                %v163 = vld [vmem:[%s155 + $0xc] sm:%s148]
                %164 = vst [vmem:[%s156 + $0xc] sm:%s148] %v163
                %v165 = vld [vmem:[%s155 + $0x10] sm:%s148]
                %166 = vst [vmem:[%s156 + $0x10] sm:%s148] %v165
                %v167 = vld [vmem:[%s155 + $0x14] sm:%s148]
                %168 = vst [vmem:[%s156 + $0x14] sm:%s148] %v167
                %v169 = vld [vmem:[%s155 + $0x18] sm:%s148]
                %170 = vst [vmem:[%s156 + $0x18] sm:%s148] %v169
                %v171 = vld [vmem:[%s155 + $0x1c] sm:%s148]
                %172 = vst [vmem:[%s156 + $0x1c] sm:%s148] %v171
                %v173 = vld [vmem:[%s155 + $0x20] sm:%s148]
                %174 = vst [vmem:[%s156 + $0x20] sm:%s148] %v173
                %v175 = vld [vmem:[%s155 + $0x24] sm:%s148]
                %176 = vst [vmem:[%s156 + $0x24] sm:%s148] %v175
                %v177 = vld [vmem:[%s155 + $0x28] sm:%s148]
                %178 = vst [vmem:[%s156 + $0x28] sm:%s148] %v177
                %v179 = vld [vmem:[%s155 + $0x2c] sm:%s148]
                %180 = vst [vmem:[%s156 + $0x2c] sm:%s148] %v179
                %v181 = vld [vmem:[%s155 + $0x30] sm:%s148]
                %182 = vst [vmem:[%s156 + $0x30] sm:%s148] %v181
                %v183 = vld [vmem:[%s155 + $0x34] sm:%s148]
                %184 = vst [vmem:[%s156 + $0x34] sm:%s148] %v183
                %v185 = vld [vmem:[%s155 + $0x38] sm:%s148]
                %186 = vst [vmem:[%s156 + $0x38] sm:%s148] %v185
                %v187 = vld [vmem:[%s155 + $0x3c] sm:%s148]
                %188 = vst [vmem:[%s156 + $0x3c] sm:%s148] %v187
                %v189 = vld [vmem:[%s155 + $0x40] sm:%s148]
                %190 = vst [vmem:[%s156 + $0x40] sm:%s148] %v189
                %v191 = vld [vmem:[%s155 + $0x44] sm:%s148]
                %192 = vst [vmem:[%s156 + $0x44] sm:%s148] %v191
                %v193 = vld [vmem:[%s155 + $0x48] sm:%s148]
                %194 = vst [vmem:[%s156 + $0x48] sm:%s148] %v193
                %v195 = vld [vmem:[%s155 + $0x4c] sm:%s148]
                %196 = vst [vmem:[%s156 + $0x4c] sm:%s148] %v195
                %v197 = vld [vmem:[%s155 + $0xa0] sm:%s148]
                %198 = vst [vmem:[%s156 + $0x50] sm:%s148] %v197
                %v199 = vld [vmem:[%s155 + $0xa4] sm:%s148]
                %200 = vst [vmem:[%s156 + $0x54] sm:%s148] %v199
                %v201 = vld [vmem:[%s155 + $0xa8] sm:%s148]
                %202 = vst [vmem:[%s156 + $0x58] sm:%s148] %v201
                %v203 = vld [vmem:[%s155 + $0xac] sm:%s148]
                %204 = vst [vmem:[%s156 + $0x5c] sm:%s148] %v203
                %v205 = vld [vmem:[%s155 + $0xb0] sm:%s148]
                %206 = vst [vmem:[%s156 + $0x60] sm:%s148] %v205
                %v207 = vld [vmem:[%s155 + $0xb4] sm:%s148]
                %208 = vst [vmem:[%s156 + $0x64] sm:%s148] %v207
                %v209 = vld [vmem:[%s155 + $0xb8] sm:%s148]
                %210 = vst [vmem:[%s156 + $0x68] sm:%s148] %v209
                %v211 = vld [vmem:[%s155 + $0xbc] sm:%s148]
                %212 = vst [vmem:[%s156 + $0x6c] sm:%s148] %v211
                %v213 = vld [vmem:[%s155 + $0xc0] sm:%s148]
                %214 = vst [vmem:[%s156 + $0x70] sm:%s148] %v213
                %v215 = vld [vmem:[%s155 + $0xc4] sm:%s148]
                %216 = vst [vmem:[%s156 + $0x74] sm:%s148] %v215
                %v217 = vld [vmem:[%s155 + $0xc8] sm:%s148]
                %218 = vst [vmem:[%s156 + $0x78] sm:%s148] %v217
                %v219 = vld [vmem:[%s155 + $0xcc] sm:%s148]
                %220 = vst [vmem:[%s156 + $0x7c] sm:%s148] %v219
                %v221 = vld [vmem:[%s155 + $0xd0] sm:%s148]
                %222 = vst [vmem:[%s156 + $0x80] sm:%s148] %v221
                %v223 = vld [vmem:[%s155 + $0xd4] sm:%s148]
                %224 = vst [vmem:[%s156 + $0x84] sm:%s148] %v223
                %v225 = vld [vmem:[%s155 + $0xd8] sm:%s148]
                %226 = vst [vmem:[%s156 + $0x88] sm:%s148] %v225
                %v227 = vld [vmem:[%s155 + $0xdc] sm:%s148]
                %228 = vst [vmem:[%s156 + $0x8c] sm:%s148] %v227
                %v229 = vld [vmem:[%s155 + $0xe0] sm:%s148]
                %230 = vst [vmem:[%s156 + $0x90] sm:%s148] %v229
                %v231 = vld [vmem:[%s155 + $0xe4] sm:%s148]
                %232 = vst [vmem:[%s156 + $0x94] sm:%s148] %v231
                %v233 = vld [vmem:[%s155 + $0xe8] sm:%s148]
                %234 = vst [vmem:[%s156 + $0x98] sm:%s148] %v233
                %v235 = vld [vmem:[%s155 + $0xec] sm:%s148]
                %236 = vst [vmem:[%s156 + $0x9c] sm:%s148] %v235
                %v237 = vld [vmem:[%s155 + $0x140] sm:%s148]
                %238 = vst [vmem:[%s156 + $0xa0] sm:%s148] %v237
                %v239 = vld [vmem:[%s155 + $0x144] sm:%s148]
                %240 = vst [vmem:[%s156 + $0xa4] sm:%s148] %v239
                %v241 = vld [vmem:[%s155 + $0x148] sm:%s148]
                %242 = vst [vmem:[%s156 + $0xa8] sm:%s148] %v241
                %v243 = vld [vmem:[%s155 + $0x14c] sm:%s148]
                %244 = vst [vmem:[%s156 + $0xac] sm:%s148] %v243
                %v245 = vld [vmem:[%s155 + $0x150] sm:%s148]
                %246 = vst [vmem:[%s156 + $0xb0] sm:%s148] %v245
                %v247 = vld [vmem:[%s155 + $0x154] sm:%s148]
                %248 = vst [vmem:[%s156 + $0xb4] sm:%s148] %v247
                %v249 = vld [vmem:[%s155 + $0x158] sm:%s148]
                %250 = vst [vmem:[%s156 + $0xb8] sm:%s148] %v249
                %v251 = vld [vmem:[%s155 + $0x15c] sm:%s148]
                %252 = vst [vmem:[%s156 + $0xbc] sm:%s148] %v251
                %v253 = vld [vmem:[%s155 + $0x160] sm:%s148]
                %254 = vst [vmem:[%s156 + $0xc0] sm:%s148] %v253
                %v255 = vld [vmem:[%s155 + $0x164] sm:%s148]
                %256 = vst [vmem:[%s156 + $0xc4] sm:%s148] %v255
                %v257 = vld [vmem:[%s155 + $0x168] sm:%s148]
                %258 = vst [vmem:[%s156 + $0xc8] sm:%s148] %v257
                %v259 = vld [vmem:[%s155 + $0x16c] sm:%s148]
                %260 = vst [vmem:[%s156 + $0xcc] sm:%s148] %v259
                %v261 = vld [vmem:[%s155 + $0x170] sm:%s148]
                %262 = vst [vmem:[%s156 + $0xd0] sm:%s148] %v261
                %v263 = vld [vmem:[%s155 + $0x174] sm:%s148]
                %264 = vst [vmem:[%s156 + $0xd4] sm:%s148] %v263
                %v265 = vld [vmem:[%s155 + $0x178] sm:%s148]
                %266 = vst [vmem:[%s156 + $0xd8] sm:%s148] %v265
                %v267 = vld [vmem:[%s155 + $0x17c] sm:%s148]
                %268 = vst [vmem:[%s156 + $0xdc] sm:%s148] %v267
                %v269 = vld [vmem:[%s155 + $0x180] sm:%s148]
                %270 = vst [vmem:[%s156 + $0xe0] sm:%s148] %v269
                %v271 = vld [vmem:[%s155 + $0x184] sm:%s148]
                %272 = vst [vmem:[%s156 + $0xe4] sm:%s148] %v271
                %v273 = vld [vmem:[%s155 + $0x188] sm:%s148]
                %274 = vst [vmem:[%s156 + $0xe8] sm:%s148] %v273
                %v275 = vld [vmem:[%s155 + $0x18c] sm:%s148]
                %276 = vst [vmem:[%s156 + $0xec] sm:%s148] %v275
                %v277 = vld [vmem:[%s155 + $0x1e0] sm:%s148]
                %278 = vst [vmem:[%s156 + $0xf0] sm:%s148] %v277
                %v279 = vld [vmem:[%s155 + $0x1e4] sm:%s148]
                %280 = vst [vmem:[%s156 + $0xf4] sm:%s148] %v279
                %v281 = vld [vmem:[%s155 + $0x1e8] sm:%s148]
                %282 = vst [vmem:[%s156 + $0xf8] sm:%s148] %v281
                %v283 = vld [vmem:[%s155 + $0x1ec] sm:%s148]
                %284 = vst [vmem:[%s156 + $0xfc] sm:%s148] %v283
                %v285 = vld [vmem:[%s155 + $0x1f0] sm:%s148]
                %286 = vst [vmem:[%s156 + $0x100] sm:%s148] %v285
                %v287 = vld [vmem:[%s155 + $0x1f4] sm:%s148]
                %288 = vst [vmem:[%s156 + $0x104] sm:%s148] %v287
                %v289 = vld [vmem:[%s155 + $0x1f8] sm:%s148]
                %290 = vst [vmem:[%s156 + $0x108] sm:%s148] %v289
                %v291 = vld [vmem:[%s155 + $0x1fc] sm:%s148]
                %292 = vst [vmem:[%s156 + $0x10c] sm:%s148] %v291
                %v293 = vld [vmem:[%s155 + $0x200] sm:%s148]
                %294 = vst [vmem:[%s156 + $0x110] sm:%s148] %v293
                %v295 = vld [vmem:[%s155 + $0x204] sm:%s148]
                %296 = vst [vmem:[%s156 + $0x114] sm:%s148] %v295
                %v297 = vld [vmem:[%s155 + $0x208] sm:%s148]
                %298 = vst [vmem:[%s156 + $0x118] sm:%s148] %v297
                %v299 = vld [vmem:[%s155 + $0x20c] sm:%s148]
                %300 = vst [vmem:[%s156 + $0x11c] sm:%s148] %v299
                %v301 = vld [vmem:[%s155 + $0x210] sm:%s148]
                %302 = vst [vmem:[%s156 + $0x120] sm:%s148] %v301
                %v303 = vld [vmem:[%s155 + $0x214] sm:%s148]
                %304 = vst [vmem:[%s156 + $0x124] sm:%s148] %v303
                %v305 = vld [vmem:[%s155 + $0x218] sm:%s148]
                %306 = vst [vmem:[%s156 + $0x128] sm:%s148] %v305
                %v307 = vld [vmem:[%s155 + $0x21c] sm:%s148]
                %308 = vst [vmem:[%s156 + $0x12c] sm:%s148] %v307
                %v309 = vld [vmem:[%s155 + $0x220] sm:%s148]
                %310 = vst [vmem:[%s156 + $0x130] sm:%s148] %v309
                %v311 = vld [vmem:[%s155 + $0x224] sm:%s148]
                %312 = vst [vmem:[%s156 + $0x134] sm:%s148] %v311
                %v313 = vld [vmem:[%s155 + $0x228] sm:%s148]
                %314 = vst [vmem:[%s156 + $0x138] sm:%s148] %v313
                %v315 = vld [vmem:[%s155 + $0x22c] sm:%s148]
                %316 = vst [vmem:[%s156 + $0x13c] sm:%s148] %v315
              $region45: #{tpu_custom_call.1} parent=39 // loop_footer
                %s154 = sadd.s32 1, %s150
              $region46: #{tpu_custom_call.1} parent=39 // loop_footer_branch
                %149 = sbr.rel target = $region42
              $region47: #{tpu_custom_call.1} parent=39 // loop_exit
                _
            $region40: #{tpu_custom_call.1} parent=31 // pred_fallthru
              _
          $region32: #{tpu_custom_call.1} parent=27 // pred_fallthru
            _
          %497 = vnop
        $region28: #{tpu_custom_call.1} parent=23 // pred_fallthru
          _
      $region24: #{tpu_custom_call.1} parent=5 // pred_fallthru
        _
      %p498 = scmp.le.s32.totalorder 1, %s12
      %p499 = scmp.lt.s32.totalorder %s12, 3
      %p500 = pnand %p498, %p499
      %p501 = pneg %p500
      // Predicated region
      $region66: #{tpu_custom_call.1} parent=5 // pred_check
        _
      $region67: #{tpu_custom_call.1} parent=5 // pred_check_branch
        %503 = sbr.rel (%p500) target = $region69
      $region68: #{tpu_custom_call.1} parent=5 // pred_region
        %s504 = ssub.s32 %s12, 1
        %s505 = sand.u32 %s25, 1
        %s506 = sand.u32 %s25, 1
        %s507 = smul.addr %s506, 320
        %s508 = scalar_lea.vmem [#allocation2], %s507
        // Predicated region
        $region70: #{tpu_custom_call.1} parent=68 // pred_check
          %p509 = pneg %p38
        $region71: #{tpu_custom_call.1} parent=68 // pred_check_branch
          %511 = sbr.rel (%p509) target = $region73
        $region72: #{tpu_custom_call.1} parent=68 // pred_region
          _
        $region73: #{tpu_custom_call.1} parent=68 // pred_fallthru
          _
        %s512 = sand.u32 %s25, 1
        %s513 = sand.u32 %s25, 1
        %s514 = smul.addr %s513, 320
        %s515 = scalar_lea.vmem [#allocation2], %s514
        %p516 = pneg %p38
        %p517 = pneg %p35
        %p518 = pneg %p59
        %p519 = pneg %p56
        %p520 = pneg %p80
        %p521 = pneg %p77
        %p522 = pneg %p106
        %p523 = pneg %p103
        %s524 = sand.u32 %s93, 1
        %s525 = scalar_lea.sflag [#allocation4], %s524
        %s526 = sand.u32 %s93, 1
        %s527 = smul.addr %s526, 160
        %s528 = scalar_lea.vmem [#allocation3], %s527
        %s529 = smul.u32 20, %s17
        %s530 = smul.u32 20, %s17
        %v532 = vld [vmem:[%s508] sm:$0xf]
        %v533 = vld [vmem:[%s508 + $0x4] sm:$0xf]
        %v534 = vld [vmem:[%s508 + $0x8] sm:$0xf]
        %v535 = vld [vmem:[%s508 + $0xc] sm:$0xf]
        %v536 = vld [vmem:[%s508 + $0x10] sm:$0xf]
        %v537 = vld [vmem:[%s508 + $0x14] sm:$0xf]
        %v538 = vld [vmem:[%s508 + $0x18] sm:$0xf]
        %v539 = vld [vmem:[%s508 + $0x1c] sm:$0xf]
        %v540 = vld [vmem:[%s508 + $0x20] sm:$0xf]
        %v541 = vld [vmem:[%s508 + $0x24] sm:$0xf]
        %v542 = vld [vmem:[%s508 + $0x28] sm:$0xf]
        %v543 = vld [vmem:[%s508 + $0x2c] sm:$0xf]
        %v544 = vld [vmem:[%s508 + $0x30] sm:$0xf]
        %v545 = vld [vmem:[%s508 + $0x34] sm:$0xf]
        %v546 = vld [vmem:[%s508 + $0x38] sm:$0xf]
        %v547 = vld [vmem:[%s508 + $0x3c] sm:$0xf]
        %v548 = vld [vmem:[%s508 + $0x40] sm:$0xf]
        %v549 = vld [vmem:[%s508 + $0x44] sm:$0xf]
        %v550 = vld [vmem:[%s508 + $0x48] sm:$0xf]
        %v551 = vld [vmem:[%s508 + $0x4c] sm:$0xf]
        %v552 = vunpack.c.l.bf16 %v532
        %v553 = vunpack.c.l.bf16 %v533
        %v554 = vunpack.c.l.bf16 %v534
        %v555 = vunpack.c.l.bf16 %v535
        %v556 = vunpack.c.l.bf16 %v536
        %v557 = vunpack.c.l.bf16 %v537
        %v558 = vunpack.c.l.bf16 %v538
        %v559 = vunpack.c.l.bf16 %v539
        %v560 = vunpack.c.l.bf16 %v540
        %v561 = vunpack.c.l.bf16 %v541
        %v562 = vunpack.c.l.bf16 %v542
        %v563 = vunpack.c.l.bf16 %v543
        %v564 = vunpack.c.l.bf16 %v544
        %v565 = vunpack.c.l.bf16 %v545
        %v566 = vunpack.c.l.bf16 %v546
        %v567 = vunpack.c.l.bf16 %v547
        %v568 = vunpack.c.l.bf16 %v548
        %v569 = vunpack.c.l.bf16 %v549
        %v570 = vunpack.c.l.bf16 %v550
        %v571 = vunpack.c.l.bf16 %v551
        %v572 = vld [vmem:[%s1] sm:$0xf]
        %v573 = vld [vmem:[%s1 + $0x4] sm:$0xf]
        %v574 = vld [vmem:[%s1 + $0x8] sm:$0xf]
        %v575 = vld [vmem:[%s1 + $0xc] sm:$0xf]
        %v576 = vld [vmem:[%s1 + $0x10] sm:$0xf]
        %v577 = vld [vmem:[%s1 + $0x14] sm:$0x1]
        %v598 = vunpack.c.l.b16 %v532
        %v599 = vunpack.c.l.b16 %v533
        %v600 = vunpack.c.l.b16 %v534
        %v601 = vunpack.c.l.b16 %v535
        %v602 = vunpack.c.l.b16 %v536
        %v603 = vunpack.c.l.b16 %v537
        %v604 = vunpack.c.l.b16 %v538
        %v605 = vunpack.c.l.b16 %v539
        %v606 = vunpack.c.l.b16 %v540
        %v607 = vunpack.c.l.b16 %v541
        %v608 = vunpack.c.l.b16 %v542
        %v609 = vunpack.c.l.b16 %v543
        %v610 = vunpack.c.l.b16 %v544
        %v611 = vunpack.c.l.b16 %v545
        %v612 = vunpack.c.l.b16 %v546
        %v613 = vunpack.c.l.b16 %v547
        %v614 = vunpack.c.l.b16 %v548
        %v615 = vunpack.c.l.b16 %v549
        %v616 = vunpack.c.l.b16 %v550
        %v617 = vunpack.c.l.b16 %v551
        %v618 = vpack.c.b16 %v599, %v598
        %v619 = vpack.c.b16 %v601, %v600
        %v620 = vpack.c.b16 %v603, %v602
        %v621 = vpack.c.b16 %v605, %v604
        %v622 = vpack.c.b16 %v607, %v606
        %v623 = vpack.c.b16 %v609, %v608
        %v624 = vpack.c.b16 %v611, %v610
        %v625 = vpack.c.b16 %v613, %v612
        %v626 = vpack.c.b16 %v615, %v614
        %v627 = vpack.c.b16 %v617, %v616
        %v634 = vunpack.c.l.b16 %v572
        %v635 = vunpack.c.l.b16 %v573
        %v636 = vunpack.c.l.b16 %v574
        %v637 = vunpack.c.l.b16 %v575
        %v638 = vunpack.c.l.b16 %v576
        %v639 = vunpack.c.l.b16 %v577
        %v640 = vpack.c.b16 %v635, %v634
        %v641 = vpack.c.b16 %v637, %v636
        %v642 = vpack.c.b16 %v639, %v638
        %vm645 = vcmask 343040
        %v647 = vsel %vm645, %v618, 0
        %v650 = vsel %vm645, %v619, 0
        %v653 = vsel %vm645, %v620, 0
        %v656 = vsel %vm645, %v621, 0
        %v659 = vsel %vm645, %v622, 0
        %v662 = vsel %vm645, %v623, 0
        %v665 = vsel %vm645, %v624, 0
        %v668 = vsel %vm645, %v625, 0
        %v671 = vsel %vm645, %v626, 0
        %v674 = vsel %vm645, %v627, 0
        %vm676 = vcmask 1044480
        %v678 = vsel %vm676, %v642, 0
        %680 = vmatprep.subr.bf16.mxu0 0
        %681 = vmatpush1.bf16.msra.mxu0 0
        %682 = vmatprep.subr.bf16.mxu0 0
        %683 = vmatpush1.bf16.msra.mxu0 0
        %684 = vmatprep.subr.bf16.mxu0 0
        %685 = vmatpush1.bf16.msra.mxu0 0
        %686 = vmatprep.subr.bf16.mxu0 0
        %687 = vmatpush1.bf16.msra.mxu0 0
        %688 = vmatprep.subr.bf16.mxu0 0
        %689 = vmatpush1.bf16.msra.mxu0 0
        %690 = vmatprep.subr.bf16.mxu0 0
        %691 = vmatpush1.bf16.msra.mxu0 %v678
        %692 = vmatprep.subr.bf16.mxu0 0
        %693 = vmatpush1.bf16.msra.mxu0 %v641
        %694 = vmatprep.subr.bf16.mxu0 0
        %695 = vmatpush1.bf16.msra.mxu0 %v640
        %696 = vmatprep.subr.bf16.mxu0 0
        %697 = vmatpush2.bf16.msra.mxu0 0
        %698 = vmatprep.subr.bf16.mxu0 0
        %699 = vmatpush2.bf16.msra.mxu0 0
        %700 = vmatprep.subr.bf16.mxu0 0
        %701 = vmatpush2.bf16.msra.mxu0 0
        %702 = vmatprep.subr.bf16.mxu0 0
        %703 = vmatpush2.bf16.msra.mxu0 0
        %704 = vmatprep.subr.bf16.mxu0 0
        %705 = vmatpush2.bf16.msra.mxu0 0
        %706 = vmatprep.subr.bf16.mxu0 0
        %707 = vmatpush2.bf16.msra.mxu0 0
        %708 = vmatprep.subr.bf16.mxu0 0
        %709 = vmatpush2.bf16.msra.mxu0 0
        %710 = vmatprep.subr.bf16.mxu0 0
        %711 = vmatpush2.bf16.msra.mxu0 0
        %712 = vmatprep.mubr.bf16.mxu0 0
        %713 = vmatmul.mubr.bf16.gmra.mxu0 %v647
        %v714 = vpop.f32.mrf.mxu0
        %v715 = vadd.f32 0.0, %v714
        %v716 = vpop.f32.mrf.mxu0
        %v717 = vpop.f32.mrf.mxu0
        %v718 = vadd.f32 0.0, %v717
        %v719 = vpop.f32.mrf.mxu0
        %720 = vmatprep.mubr.bf16.mxu0 0
        %721 = vmatmul.mubr.bf16.gmra.mxu0 %v650
        %v722 = vpop.f32.mrf.mxu0
        %v723 = vadd.f32 0.0, %v722
        %v724 = vpop.f32.mrf.mxu0
        %v725 = vpop.f32.mrf.mxu0
        %v726 = vadd.f32 0.0, %v725
        %v727 = vpop.f32.mrf.mxu0
        %728 = vmatprep.mubr.bf16.mxu0 0
        %729 = vmatmul.mubr.bf16.gmra.mxu0 %v653
        %v730 = vpop.f32.mrf.mxu0
        %v731 = vadd.f32 0.0, %v730
        %v732 = vpop.f32.mrf.mxu0
        %v733 = vpop.f32.mrf.mxu0
        %v734 = vadd.f32 0.0, %v733
        %v735 = vpop.f32.mrf.mxu0
        %736 = vmatprep.mubr.bf16.mxu0 0
        %737 = vmatmul.mubr.bf16.gmra.mxu0 %v656
        %v738 = vpop.f32.mrf.mxu0
        %v739 = vadd.f32 0.0, %v738
        %v740 = vpop.f32.mrf.mxu0
        %v741 = vpop.f32.mrf.mxu0
        %v742 = vadd.f32 0.0, %v741
        %v743 = vpop.f32.mrf.mxu0
        %744 = vmatprep.mubr.bf16.mxu0 0
        %745 = vmatmul.mubr.bf16.gmra.mxu0 %v659
        %v746 = vpop.f32.mrf.mxu0
        %v747 = vadd.f32 0.0, %v746
        %v748 = vpop.f32.mrf.mxu0
        %v749 = vpop.f32.mrf.mxu0
        %v750 = vadd.f32 0.0, %v749
        %v751 = vpop.f32.mrf.mxu0
        %752 = vmatprep.mubr.bf16.mxu0 0
        %753 = vmatmul.mubr.bf16.gmra.mxu0 %v662
        %v754 = vpop.f32.mrf.mxu0
        %v755 = vadd.f32 0.0, %v754
        %v756 = vpop.f32.mrf.mxu0
        %v757 = vpop.f32.mrf.mxu0
        %v758 = vadd.f32 0.0, %v757
        %v759 = vpop.f32.mrf.mxu0
        %760 = vmatprep.mubr.bf16.mxu0 0
        %761 = vmatmul.mubr.bf16.gmra.mxu0 %v665
        %v762 = vpop.f32.mrf.mxu0
        %v763 = vadd.f32 0.0, %v762
        %v764 = vpop.f32.mrf.mxu0
        %v765 = vpop.f32.mrf.mxu0
        %v766 = vadd.f32 0.0, %v765
        %v767 = vpop.f32.mrf.mxu0
        %768 = vmatprep.mubr.bf16.mxu0 0
        %769 = vmatmul.mubr.bf16.gmra.mxu0 %v668
        %v770 = vpop.f32.mrf.mxu0
        %v771 = vadd.f32 0.0, %v770
        %v772 = vpop.f32.mrf.mxu0
        %v773 = vpop.f32.mrf.mxu0
        %v774 = vadd.f32 0.0, %v773
        %v775 = vpop.f32.mrf.mxu0
        %776 = vmatprep.mubr.bf16.mxu0 0
        %777 = vmatmul.mubr.bf16.gmra.mxu0 %v671
        %v778 = vpop.f32.mrf.mxu0
        %v779 = vadd.f32 0.0, %v778
        %v780 = vpop.f32.mrf.mxu0
        %v781 = vpop.f32.mrf.mxu0
        %v782 = vadd.f32 0.0, %v781
        %v783 = vpop.f32.mrf.mxu0
        %784 = vmatprep.mubr.bf16.mxu0 0
        %785 = vmatmul.mubr.bf16.gmra.mxu0 %v674
        %v786 = vpop.f32.mrf.mxu0
        %v787 = vadd.f32 0.0, %v786
        %v788 = vpop.f32.mrf.mxu0
        %v789 = vpop.f32.mrf.mxu0
        %v790 = vadd.f32 0.0, %v789
        %v791 = vpop.f32.mrf.mxu0
        %792 = vdwg.mxu0
        %v793 = vmax.f32 %v715, 0.0
        %v794 = vmax.f32 %v718, 0.0
        %v795 = vmax.f32 %v723, 0.0
        %v796 = vmax.f32 %v726, 0.0
        %v797 = vmax.f32 %v731, 0.0
        %v798 = vmax.f32 %v734, 0.0
        %v799 = vmax.f32 %v739, 0.0
        %v800 = vmax.f32 %v742, 0.0
        %v801 = vmax.f32 %v747, 0.0
        %v802 = vmax.f32 %v750, 0.0
        %v803 = vmax.f32 %v755, 0.0
        %v804 = vmax.f32 %v758, 0.0
        %v805 = vmax.f32 %v763, 0.0
        %v806 = vmax.f32 %v766, 0.0
        %v807 = vmax.f32 %v771, 0.0
        %v808 = vmax.f32 %v774, 0.0
        %v809 = vmax.f32 %v779, 0.0
        %v810 = vmax.f32 %v782, 0.0
        %v811 = vmax.f32 %v787, 0.0
        %v812 = vmax.f32 %v790, 0.0
        %v813 = vpack.c.bf16 %v794, %v793
        %v814 = vpack.c.bf16 %v796, %v795
        %v815 = vpack.c.bf16 %v798, %v797
        %v816 = vpack.c.bf16 %v800, %v799
        %v817 = vpack.c.bf16 %v802, %v801
        %v818 = vpack.c.bf16 %v804, %v803
        %v819 = vpack.c.bf16 %v806, %v805
        %v820 = vpack.c.bf16 %v808, %v807
        %v821 = vpack.c.bf16 %v810, %v809
        %v822 = vpack.c.bf16 %v812, %v811
        %v823 = vld [vmem:[%s2] sm:$0xf]
        %v824 = vld [vmem:[%s2 + $0x4] sm:$0xf]
        %v825 = vld [vmem:[%s2 + $0x8] sm:$0xf]
        %v826 = vld [vmem:[%s2 + $0xc] sm:$0xf]
        %v831 = vunpack.c.l.b16 %v823
        %v832 = vunpack.c.l.b16 %v824
        %v833 = vunpack.c.l.b16 %v825
        %v834 = vunpack.c.l.b16 %v826
        %v835 = vpack.c.b16 %v832, %v831
        %v836 = vpack.c.b16 %v834, %v833
        %859 = vrot.lane.b32.xlu0 %v715, 96
        %v860 = vpop.permute.xlu0 %859
        %861 = vrot.lane.b32.xlu0 %v718, 96
        %v862 = vpop.permute.xlu0 %861
        %863 = vrot.lane.b32.xlu0 %v723, 96
        %v864 = vpop.permute.xlu0 %863
        %865 = vrot.lane.b32.xlu0 %v726, 96
        %v866 = vpop.permute.xlu0 %865
        %867 = vrot.lane.b32.xlu0 %v731, 96
        %v868 = vpop.permute.xlu0 %867
        %869 = vrot.lane.b32.xlu0 %v734, 96
        %v870 = vpop.permute.xlu0 %869
        %871 = vrot.lane.b32.xlu0 %v739, 96
        %v872 = vpop.permute.xlu0 %871
        %873 = vrot.lane.b32.xlu0 %v742, 96
        %v874 = vpop.permute.xlu0 %873
        %875 = vrot.lane.b32.xlu0 %v747, 96
        %v876 = vpop.permute.xlu0 %875
        %877 = vrot.lane.b32.xlu0 %v750, 96
        %v878 = vpop.permute.xlu0 %877
        %879 = vrot.lane.b32.xlu0 %v755, 96
        %v880 = vpop.permute.xlu0 %879
        %881 = vrot.lane.b32.xlu0 %v758, 96
        %v882 = vpop.permute.xlu0 %881
        %883 = vrot.lane.b32.xlu0 %v763, 96
        %v884 = vpop.permute.xlu0 %883
        %885 = vrot.lane.b32.xlu0 %v766, 96
        %v886 = vpop.permute.xlu0 %885
        %887 = vrot.lane.b32.xlu0 %v771, 96
        %v888 = vpop.permute.xlu0 %887
        %889 = vrot.lane.b32.xlu0 %v774, 96
        %v890 = vpop.permute.xlu0 %889
        %891 = vrot.lane.b32.xlu0 %v779, 96
        %v892 = vpop.permute.xlu0 %891
        %893 = vrot.lane.b32.xlu0 %v782, 96
        %v894 = vpop.permute.xlu0 %893
        %895 = vrot.lane.b32.xlu0 %v787, 96
        %v896 = vpop.permute.xlu0 %895
        %897 = vrot.lane.b32.xlu0 %v790, 96
        %v898 = vpop.permute.xlu0 %897
        %vm919 = vcmask 261120
        %v921 = vsel %vm919, %v813, 0
        %v924 = vsel %vm919, %v814, 0
        %v927 = vsel %vm919, %v815, 0
        %v930 = vsel %vm919, %v816, 0
        %v933 = vsel %vm919, %v817, 0
        %v936 = vsel %vm919, %v818, 0
        %v939 = vsel %vm919, %v819, 0
        %v942 = vsel %vm919, %v820, 0
        %v945 = vsel %vm919, %v821, 0
        %v948 = vsel %vm919, %v822, 0
        %950 = vmatprep.subr.bf16.mxu0 0
        %951 = vmatpush1.bf16.msra.mxu0 0
        %952 = vmatprep.subr.bf16.mxu0 0
        %953 = vmatpush1.bf16.msra.mxu0 0
        %954 = vmatprep.subr.bf16.mxu0 0
        %955 = vmatpush1.bf16.msra.mxu0 0
        %956 = vmatprep.subr.bf16.mxu0 0
        %957 = vmatpush1.bf16.msra.mxu0 0
        %958 = vmatprep.subr.bf16.mxu0 0
        %959 = vmatpush1.bf16.msra.mxu0 0
        %960 = vmatprep.subr.bf16.mxu0 0
        %961 = vmatpush1.bf16.msra.mxu0 0
        %962 = vmatprep.subr.bf16.mxu0 0
        %963 = vmatpush1.bf16.msra.mxu0 %v836
        %964 = vmatprep.subr.bf16.mxu0 0
        %965 = vmatpush1.bf16.msra.mxu0 %v835
        %966 = vmatprep.subr.bf16.mxu0 0
        %967 = vmatpush2.bf16.msra.mxu0 0
        %968 = vmatprep.subr.bf16.mxu0 0
        %969 = vmatpush2.bf16.msra.mxu0 0
        %970 = vmatprep.subr.bf16.mxu0 0
        %971 = vmatpush2.bf16.msra.mxu0 0
        %972 = vmatprep.subr.bf16.mxu0 0
        %973 = vmatpush2.bf16.msra.mxu0 0
        %974 = vmatprep.subr.bf16.mxu0 0
        %975 = vmatpush2.bf16.msra.mxu0 0
        %976 = vmatprep.subr.bf16.mxu0 0
        %977 = vmatpush2.bf16.msra.mxu0 0
        %978 = vmatprep.subr.bf16.mxu0 0
        %979 = vmatpush2.bf16.msra.mxu0 0
        %980 = vmatprep.subr.bf16.mxu0 0
        %981 = vmatpush2.bf16.msra.mxu0 0
        %982 = vmatprep.mubr.bf16.mxu0 0
        %983 = vmatmul.mubr.bf16.gmra.mxu0 %v921
        %v984 = vpop.f32.mrf.mxu0
        %v985 = vadd.f32 %v860, %v984
        %v986 = vpop.f32.mrf.mxu0
        %v987 = vpop.f32.mrf.mxu0
        %v988 = vadd.f32 %v862, %v987
        %v989 = vpop.f32.mrf.mxu0
        %990 = vmatprep.mubr.bf16.mxu0 0
        %991 = vmatmul.mubr.bf16.gmra.mxu0 %v924
        %v992 = vpop.f32.mrf.mxu0
        %v993 = vadd.f32 %v864, %v992
        %v994 = vpop.f32.mrf.mxu0
        %v995 = vpop.f32.mrf.mxu0
        %v996 = vadd.f32 %v866, %v995
        %v997 = vpop.f32.mrf.mxu0
        %998 = vmatprep.mubr.bf16.mxu0 0
        %999 = vmatmul.mubr.bf16.gmra.mxu0 %v927
        %v1000 = vpop.f32.mrf.mxu0
        %v1001 = vadd.f32 %v868, %v1000
        %v1002 = vpop.f32.mrf.mxu0
        %v1003 = vpop.f32.mrf.mxu0
        %v1004 = vadd.f32 %v870, %v1003
        %v1005 = vpop.f32.mrf.mxu0
        %1006 = vmatprep.mubr.bf16.mxu0 0
        %1007 = vmatmul.mubr.bf16.gmra.mxu0 %v930
        %v1008 = vpop.f32.mrf.mxu0
        %v1009 = vadd.f32 %v872, %v1008
        %v1010 = vpop.f32.mrf.mxu0
        %v1011 = vpop.f32.mrf.mxu0
        %v1012 = vadd.f32 %v874, %v1011
        %v1013 = vpop.f32.mrf.mxu0
        %1014 = vmatprep.mubr.bf16.mxu0 0
        %1015 = vmatmul.mubr.bf16.gmra.mxu0 %v933
        %v1016 = vpop.f32.mrf.mxu0
        %v1017 = vadd.f32 %v876, %v1016
        %v1018 = vpop.f32.mrf.mxu0
        %v1019 = vpop.f32.mrf.mxu0
        %v1020 = vadd.f32 %v878, %v1019
        %v1021 = vpop.f32.mrf.mxu0
        %1022 = vmatprep.mubr.bf16.mxu0 0
        %1023 = vmatmul.mubr.bf16.gmra.mxu0 %v936
        %v1024 = vpop.f32.mrf.mxu0
        %v1025 = vadd.f32 %v880, %v1024
        %v1026 = vpop.f32.mrf.mxu0
        %v1027 = vpop.f32.mrf.mxu0
        %v1028 = vadd.f32 %v882, %v1027
        %v1029 = vpop.f32.mrf.mxu0
        %1030 = vmatprep.mubr.bf16.mxu0 0
        %1031 = vmatmul.mubr.bf16.gmra.mxu0 %v939
        %v1032 = vpop.f32.mrf.mxu0
        %v1033 = vadd.f32 %v884, %v1032
        %v1034 = vpop.f32.mrf.mxu0
        %v1035 = vpop.f32.mrf.mxu0
        %v1036 = vadd.f32 %v886, %v1035
        %v1037 = vpop.f32.mrf.mxu0
        %1038 = vmatprep.mubr.bf16.mxu0 0
        %1039 = vmatmul.mubr.bf16.gmra.mxu0 %v942
        %v1040 = vpop.f32.mrf.mxu0
        %v1041 = vadd.f32 %v888, %v1040
        %v1042 = vpop.f32.mrf.mxu0
        %v1043 = vpop.f32.mrf.mxu0
        %v1044 = vadd.f32 %v890, %v1043
        %v1045 = vpop.f32.mrf.mxu0
        %1046 = vmatprep.mubr.bf16.mxu0 0
        %1047 = vmatmul.mubr.bf16.gmra.mxu0 %v945
        %v1048 = vpop.f32.mrf.mxu0
        %v1049 = vadd.f32 %v892, %v1048
        %v1050 = vpop.f32.mrf.mxu0
        %v1051 = vpop.f32.mrf.mxu0
        %v1052 = vadd.f32 %v894, %v1051
        %v1053 = vpop.f32.mrf.mxu0
        %1054 = vmatprep.mubr.bf16.mxu0 0
        %1055 = vmatmul.mubr.bf16.gmra.mxu0 %v948
        %v1056 = vpop.f32.mrf.mxu0
        %v1057 = vadd.f32 %v896, %v1056
        %v1058 = vpop.f32.mrf.mxu0
        %v1059 = vpop.f32.mrf.mxu0
        %v1060 = vadd.f32 %v898, %v1059
        %v1061 = vpop.f32.mrf.mxu0
        %1062 = vdwg.mxu0
        %v1063 = vmax.f32 %v985, 0.0
        %v1064 = vmax.f32 %v988, 0.0
        %v1065 = vmax.f32 %v993, 0.0
        %v1066 = vmax.f32 %v996, 0.0
        %v1067 = vmax.f32 %v1001, 0.0
        %v1068 = vmax.f32 %v1004, 0.0
        %v1069 = vmax.f32 %v1009, 0.0
        %v1070 = vmax.f32 %v1012, 0.0
        %v1071 = vmax.f32 %v1017, 0.0
        %v1072 = vmax.f32 %v1020, 0.0
        %v1073 = vmax.f32 %v1025, 0.0
        %v1074 = vmax.f32 %v1028, 0.0
        %v1075 = vmax.f32 %v1033, 0.0
        %v1076 = vmax.f32 %v1036, 0.0
        %v1077 = vmax.f32 %v1041, 0.0
        %v1078 = vmax.f32 %v1044, 0.0
        %v1079 = vmax.f32 %v1049, 0.0
        %v1080 = vmax.f32 %v1052, 0.0
        %v1081 = vmax.f32 %v1057, 0.0
        %v1082 = vmax.f32 %v1060, 0.0
        %v1083 = vpack.c.bf16 %v1064, %v1063
        %v1084 = vpack.c.bf16 %v1066, %v1065
        %v1085 = vpack.c.bf16 %v1068, %v1067
        %v1086 = vpack.c.bf16 %v1070, %v1069
        %v1087 = vpack.c.bf16 %v1072, %v1071
        %v1088 = vpack.c.bf16 %v1074, %v1073
        %v1089 = vpack.c.bf16 %v1076, %v1075
        %v1090 = vpack.c.bf16 %v1078, %v1077
        %v1091 = vpack.c.bf16 %v1080, %v1079
        %v1092 = vpack.c.bf16 %v1082, %v1081
        %s1093 = scalar_lea.vmem %s2, 16
        %v1094 = vld [vmem:[%s1093] sm:$0xf]
        %v1095 = vld [vmem:[%s1093 + $0x4] sm:$0xf]
        %v1096 = vld [vmem:[%s1093 + $0x8] sm:$0xf]
        %v1097 = vld [vmem:[%s1093 + $0xc] sm:$0xf]
        %v1102 = vunpack.c.l.b16 %v1094
        %v1103 = vunpack.c.l.b16 %v1095
        %v1104 = vunpack.c.l.b16 %v1096
        %v1105 = vunpack.c.l.b16 %v1097
        %v1106 = vpack.c.b16 %v1103, %v1102
        %v1107 = vpack.c.b16 %v1105, %v1104
        %1110 = vrot.lane.b32.xlu0 %v715, 64
        %v1111 = vpop.permute.xlu0 %1110
        %1112 = vrot.lane.b32.xlu0 %v718, 64
        %v1113 = vpop.permute.xlu0 %1112
        %1114 = vrot.lane.b32.xlu0 %v723, 64
        %v1115 = vpop.permute.xlu0 %1114
        %1116 = vrot.lane.b32.xlu0 %v726, 64
        %v1117 = vpop.permute.xlu0 %1116
        %1118 = vrot.lane.b32.xlu0 %v731, 64
        %v1119 = vpop.permute.xlu0 %1118
        %1120 = vrot.lane.b32.xlu0 %v734, 64
        %v1121 = vpop.permute.xlu0 %1120
        %1122 = vrot.lane.b32.xlu0 %v739, 64
        %v1123 = vpop.permute.xlu0 %1122
        %1124 = vrot.lane.b32.xlu0 %v742, 64
        %v1125 = vpop.permute.xlu0 %1124
        %1126 = vrot.lane.b32.xlu0 %v747, 64
        %v1127 = vpop.permute.xlu0 %1126
        %1128 = vrot.lane.b32.xlu0 %v750, 64
        %v1129 = vpop.permute.xlu0 %1128
        %1130 = vrot.lane.b32.xlu0 %v755, 64
        %v1131 = vpop.permute.xlu0 %1130
        %1132 = vrot.lane.b32.xlu0 %v758, 64
        %v1133 = vpop.permute.xlu0 %1132
        %1134 = vrot.lane.b32.xlu0 %v763, 64
        %v1135 = vpop.permute.xlu0 %1134
        %1136 = vrot.lane.b32.xlu0 %v766, 64
        %v1137 = vpop.permute.xlu0 %1136
        %1138 = vrot.lane.b32.xlu0 %v771, 64
        %v1139 = vpop.permute.xlu0 %1138
        %1140 = vrot.lane.b32.xlu0 %v774, 64
        %v1141 = vpop.permute.xlu0 %1140
        %1142 = vrot.lane.b32.xlu0 %v779, 64
        %v1143 = vpop.permute.xlu0 %1142
        %1144 = vrot.lane.b32.xlu0 %v782, 64
        %v1145 = vpop.permute.xlu0 %1144
        %1146 = vrot.lane.b32.xlu0 %v787, 64
        %v1147 = vpop.permute.xlu0 %1146
        %1148 = vrot.lane.b32.xlu0 %v790, 64
        %v1149 = vpop.permute.xlu0 %1148
        %v1171 = vsel %vm919, %v1083, 0
        %v1174 = vsel %vm919, %v1084, 0
        %v1177 = vsel %vm919, %v1085, 0
        %v1180 = vsel %vm919, %v1086, 0
        %v1183 = vsel %vm919, %v1087, 0
        %v1186 = vsel %vm919, %v1088, 0
        %v1189 = vsel %vm919, %v1089, 0
        %v1192 = vsel %vm919, %v1090, 0
        %v1195 = vsel %vm919, %v1091, 0
        %v1198 = vsel %vm919, %v1092, 0
        %1200 = vmatprep.subr.bf16.mxu0 0
        %1201 = vmatpush1.bf16.msra.mxu0 0
        %1202 = vmatprep.subr.bf16.mxu0 0
        %1203 = vmatpush1.bf16.msra.mxu0 0
        %1204 = vmatprep.subr.bf16.mxu0 0
        %1205 = vmatpush1.bf16.msra.mxu0 0
        %1206 = vmatprep.subr.bf16.mxu0 0
        %1207 = vmatpush1.bf16.msra.mxu0 0
        %1208 = vmatprep.subr.bf16.mxu0 0
        %1209 = vmatpush1.bf16.msra.mxu0 0
        %1210 = vmatprep.subr.bf16.mxu0 0
        %1211 = vmatpush1.bf16.msra.mxu0 0
        %1212 = vmatprep.subr.bf16.mxu0 0
        %1213 = vmatpush1.bf16.msra.mxu0 %v1107
        %1214 = vmatprep.subr.bf16.mxu0 0
        %1215 = vmatpush1.bf16.msra.mxu0 %v1106
        %1216 = vmatprep.subr.bf16.mxu0 0
        %1217 = vmatpush2.bf16.msra.mxu0 0
        %1218 = vmatprep.subr.bf16.mxu0 0
        %1219 = vmatpush2.bf16.msra.mxu0 0
        %1220 = vmatprep.subr.bf16.mxu0 0
        %1221 = vmatpush2.bf16.msra.mxu0 0
        %1222 = vmatprep.subr.bf16.mxu0 0
        %1223 = vmatpush2.bf16.msra.mxu0 0
        %1224 = vmatprep.subr.bf16.mxu0 0
        %1225 = vmatpush2.bf16.msra.mxu0 0
        %1226 = vmatprep.subr.bf16.mxu0 0
        %1227 = vmatpush2.bf16.msra.mxu0 0
        %1228 = vmatprep.subr.bf16.mxu0 0
        %1229 = vmatpush2.bf16.msra.mxu0 0
        %1230 = vmatprep.subr.bf16.mxu0 0
        %1231 = vmatpush2.bf16.msra.mxu0 0
        %1232 = vmatprep.mubr.bf16.mxu0 0
        %1233 = vmatmul.mubr.bf16.gmra.mxu0 %v1171
        %v1234 = vpop.f32.mrf.mxu0
        %v1235 = vadd.f32 %v1111, %v1234
        %v1236 = vpop.f32.mrf.mxu0
        %v1237 = vpop.f32.mrf.mxu0
        %v1238 = vadd.f32 %v1113, %v1237
        %v1239 = vpop.f32.mrf.mxu0
        %1240 = vmatprep.mubr.bf16.mxu0 0
        %1241 = vmatmul.mubr.bf16.gmra.mxu0 %v1174
        %v1242 = vpop.f32.mrf.mxu0
        %v1243 = vadd.f32 %v1115, %v1242
        %v1244 = vpop.f32.mrf.mxu0
        %v1245 = vpop.f32.mrf.mxu0
        %v1246 = vadd.f32 %v1117, %v1245
        %v1247 = vpop.f32.mrf.mxu0
        %1248 = vmatprep.mubr.bf16.mxu0 0
        %1249 = vmatmul.mubr.bf16.gmra.mxu0 %v1177
        %v1250 = vpop.f32.mrf.mxu0
        %v1251 = vadd.f32 %v1119, %v1250
        %v1252 = vpop.f32.mrf.mxu0
        %v1253 = vpop.f32.mrf.mxu0
        %v1254 = vadd.f32 %v1121, %v1253
        %v1255 = vpop.f32.mrf.mxu0
        %1256 = vmatprep.mubr.bf16.mxu0 0
        %1257 = vmatmul.mubr.bf16.gmra.mxu0 %v1180
        %v1258 = vpop.f32.mrf.mxu0
        %v1259 = vadd.f32 %v1123, %v1258
        %v1260 = vpop.f32.mrf.mxu0
        %v1261 = vpop.f32.mrf.mxu0
        %v1262 = vadd.f32 %v1125, %v1261
        %v1263 = vpop.f32.mrf.mxu0
        %1264 = vmatprep.mubr.bf16.mxu0 0
        %1265 = vmatmul.mubr.bf16.gmra.mxu0 %v1183
        %v1266 = vpop.f32.mrf.mxu0
        %v1267 = vadd.f32 %v1127, %v1266
        %v1268 = vpop.f32.mrf.mxu0
        %v1269 = vpop.f32.mrf.mxu0
        %v1270 = vadd.f32 %v1129, %v1269
        %v1271 = vpop.f32.mrf.mxu0
        %1272 = vmatprep.mubr.bf16.mxu0 0
        %1273 = vmatmul.mubr.bf16.gmra.mxu0 %v1186
        %v1274 = vpop.f32.mrf.mxu0
        %v1275 = vadd.f32 %v1131, %v1274
        %v1276 = vpop.f32.mrf.mxu0
        %v1277 = vpop.f32.mrf.mxu0
        %v1278 = vadd.f32 %v1133, %v1277
        %v1279 = vpop.f32.mrf.mxu0
        %1280 = vmatprep.mubr.bf16.mxu0 0
        %1281 = vmatmul.mubr.bf16.gmra.mxu0 %v1189
        %v1282 = vpop.f32.mrf.mxu0
        %v1283 = vadd.f32 %v1135, %v1282
        %v1284 = vpop.f32.mrf.mxu0
        %v1285 = vpop.f32.mrf.mxu0
        %v1286 = vadd.f32 %v1137, %v1285
        %v1287 = vpop.f32.mrf.mxu0
        %1288 = vmatprep.mubr.bf16.mxu0 0
        %1289 = vmatmul.mubr.bf16.gmra.mxu0 %v1192
        %v1290 = vpop.f32.mrf.mxu0
        %v1291 = vadd.f32 %v1139, %v1290
        %v1292 = vpop.f32.mrf.mxu0
        %v1293 = vpop.f32.mrf.mxu0
        %v1294 = vadd.f32 %v1141, %v1293
        %v1295 = vpop.f32.mrf.mxu0
        %1296 = vmatprep.mubr.bf16.mxu0 0
        %1297 = vmatmul.mubr.bf16.gmra.mxu0 %v1195
        %v1298 = vpop.f32.mrf.mxu0
        %v1299 = vadd.f32 %v1143, %v1298
        %v1300 = vpop.f32.mrf.mxu0
        %v1301 = vpop.f32.mrf.mxu0
        %v1302 = vadd.f32 %v1145, %v1301
        %v1303 = vpop.f32.mrf.mxu0
        %1304 = vmatprep.mubr.bf16.mxu0 0
        %1305 = vmatmul.mubr.bf16.gmra.mxu0 %v1198
        %v1306 = vpop.f32.mrf.mxu0
        %v1307 = vadd.f32 %v1147, %v1306
        %v1308 = vpop.f32.mrf.mxu0
        %v1309 = vpop.f32.mrf.mxu0
        %v1310 = vadd.f32 %v1149, %v1309
        %v1311 = vpop.f32.mrf.mxu0
        %1312 = vdwg.mxu0
        %v1313 = vmax.f32 %v1235, 0.0
        %v1314 = vmax.f32 %v1238, 0.0
        %v1315 = vmax.f32 %v1243, 0.0
        %v1316 = vmax.f32 %v1246, 0.0
        %v1317 = vmax.f32 %v1251, 0.0
        %v1318 = vmax.f32 %v1254, 0.0
        %v1319 = vmax.f32 %v1259, 0.0
        %v1320 = vmax.f32 %v1262, 0.0
        %v1321 = vmax.f32 %v1267, 0.0
        %v1322 = vmax.f32 %v1270, 0.0
        %v1323 = vmax.f32 %v1275, 0.0
        %v1324 = vmax.f32 %v1278, 0.0
        %v1325 = vmax.f32 %v1283, 0.0
        %v1326 = vmax.f32 %v1286, 0.0
        %v1327 = vmax.f32 %v1291, 0.0
        %v1328 = vmax.f32 %v1294, 0.0
        %v1329 = vmax.f32 %v1299, 0.0
        %v1330 = vmax.f32 %v1302, 0.0
        %v1331 = vmax.f32 %v1307, 0.0
        %v1332 = vmax.f32 %v1310, 0.0
        %v1333 = vpack.c.bf16 %v1314, %v1313
        %v1334 = vpack.c.bf16 %v1316, %v1315
        %v1335 = vpack.c.bf16 %v1318, %v1317
        %v1336 = vpack.c.bf16 %v1320, %v1319
        %v1337 = vpack.c.bf16 %v1322, %v1321
        %v1338 = vpack.c.bf16 %v1324, %v1323
        %v1339 = vpack.c.bf16 %v1326, %v1325
        %v1340 = vpack.c.bf16 %v1328, %v1327
        %v1341 = vpack.c.bf16 %v1330, %v1329
        %v1342 = vpack.c.bf16 %v1332, %v1331
        %s1343 = scalar_lea.vmem %s2, 32
        %v1344 = vld [vmem:[%s1343] sm:$0xf]
        %v1345 = vld [vmem:[%s1343 + $0x4] sm:$0xf]
        %v1346 = vld [vmem:[%s1343 + $0x8] sm:$0xf]
        %v1347 = vld [vmem:[%s1343 + $0xc] sm:$0xf]
        %v1352 = vunpack.c.l.b16 %v1344
        %v1353 = vunpack.c.l.b16 %v1345
        %v1354 = vunpack.c.l.b16 %v1346
        %v1355 = vunpack.c.l.b16 %v1347
        %v1356 = vpack.c.b16 %v1353, %v1352
        %v1357 = vpack.c.b16 %v1355, %v1354
        %1360 = vrot.lane.b32.xlu0 %v715, 32
        %v1361 = vpop.permute.xlu0 %1360
        %1362 = vrot.lane.b32.xlu0 %v718, 32
        %v1363 = vpop.permute.xlu0 %1362
        %1364 = vrot.lane.b32.xlu0 %v723, 32
        %v1365 = vpop.permute.xlu0 %1364
        %1366 = vrot.lane.b32.xlu0 %v726, 32
        %v1367 = vpop.permute.xlu0 %1366
        %1368 = vrot.lane.b32.xlu0 %v731, 32
        %v1369 = vpop.permute.xlu0 %1368
        %1370 = vrot.lane.b32.xlu0 %v734, 32
        %v1371 = vpop.permute.xlu0 %1370
        %1372 = vrot.lane.b32.xlu0 %v739, 32
        %v1373 = vpop.permute.xlu0 %1372
        %1374 = vrot.lane.b32.xlu0 %v742, 32
        %v1375 = vpop.permute.xlu0 %1374
        %1376 = vrot.lane.b32.xlu0 %v747, 32
        %v1377 = vpop.permute.xlu0 %1376
        %1378 = vrot.lane.b32.xlu0 %v750, 32
        %v1379 = vpop.permute.xlu0 %1378
        %1380 = vrot.lane.b32.xlu0 %v755, 32
        %v1381 = vpop.permute.xlu0 %1380
        %1382 = vrot.lane.b32.xlu0 %v758, 32
        %v1383 = vpop.permute.xlu0 %1382
        %1384 = vrot.lane.b32.xlu0 %v763, 32
        %v1385 = vpop.permute.xlu0 %1384
        %1386 = vrot.lane.b32.xlu0 %v766, 32
        %v1387 = vpop.permute.xlu0 %1386
        %1388 = vrot.lane.b32.xlu0 %v771, 32
        %v1389 = vpop.permute.xlu0 %1388
        %1390 = vrot.lane.b32.xlu0 %v774, 32
        %v1391 = vpop.permute.xlu0 %1390
        %1392 = vrot.lane.b32.xlu0 %v779, 32
        %v1393 = vpop.permute.xlu0 %1392
        %1394 = vrot.lane.b32.xlu0 %v782, 32
        %v1395 = vpop.permute.xlu0 %1394
        %1396 = vrot.lane.b32.xlu0 %v787, 32
        %v1397 = vpop.permute.xlu0 %1396
        %1398 = vrot.lane.b32.xlu0 %v790, 32
        %v1399 = vpop.permute.xlu0 %1398
        %v1421 = vsel %vm919, %v1333, 0
        %v1424 = vsel %vm919, %v1334, 0
        %v1427 = vsel %vm919, %v1335, 0
        %v1430 = vsel %vm919, %v1336, 0
        %v1433 = vsel %vm919, %v1337, 0
        %v1436 = vsel %vm919, %v1338, 0
        %v1439 = vsel %vm919, %v1339, 0
        %v1442 = vsel %vm919, %v1340, 0
        %v1445 = vsel %vm919, %v1341, 0
        %v1448 = vsel %vm919, %v1342, 0
        %1450 = vmatprep.subr.bf16.mxu0 0
        %1451 = vmatpush1.bf16.msra.mxu0 0
        %1452 = vmatprep.subr.bf16.mxu0 0
        %1453 = vmatpush1.bf16.msra.mxu0 0
        %1454 = vmatprep.subr.bf16.mxu0 0
        %1455 = vmatpush1.bf16.msra.mxu0 0
        %1456 = vmatprep.subr.bf16.mxu0 0
        %1457 = vmatpush1.bf16.msra.mxu0 0
        %1458 = vmatprep.subr.bf16.mxu0 0
        %1459 = vmatpush1.bf16.msra.mxu0 0
        %1460 = vmatprep.subr.bf16.mxu0 0
        %1461 = vmatpush1.bf16.msra.mxu0 0
        %1462 = vmatprep.subr.bf16.mxu0 0
        %1463 = vmatpush1.bf16.msra.mxu0 %v1357
        %1464 = vmatprep.subr.bf16.mxu0 0
        %1465 = vmatpush1.bf16.msra.mxu0 %v1356
        %1466 = vmatprep.subr.bf16.mxu0 0
        %1467 = vmatpush2.bf16.msra.mxu0 0
        %1468 = vmatprep.subr.bf16.mxu0 0
        %1469 = vmatpush2.bf16.msra.mxu0 0
        %1470 = vmatprep.subr.bf16.mxu0 0
        %1471 = vmatpush2.bf16.msra.mxu0 0
        %1472 = vmatprep.subr.bf16.mxu0 0
        %1473 = vmatpush2.bf16.msra.mxu0 0
        %1474 = vmatprep.subr.bf16.mxu0 0
        %1475 = vmatpush2.bf16.msra.mxu0 0
        %1476 = vmatprep.subr.bf16.mxu0 0
        %1477 = vmatpush2.bf16.msra.mxu0 0
        %1478 = vmatprep.subr.bf16.mxu0 0
        %1479 = vmatpush2.bf16.msra.mxu0 0
        %1480 = vmatprep.subr.bf16.mxu0 0
        %1481 = vmatpush2.bf16.msra.mxu0 0
        %1482 = vmatprep.mubr.bf16.mxu0 0
        %1483 = vmatmul.mubr.bf16.gmra.mxu0 %v1421
        %v1484 = vpop.f32.mrf.mxu0
        %v1485 = vadd.f32 %v1361, %v1484
        %v1486 = vpop.f32.mrf.mxu0
        %v1487 = vpop.f32.mrf.mxu0
        %v1488 = vadd.f32 %v1363, %v1487
        %v1489 = vpop.f32.mrf.mxu0
        %1490 = vmatprep.mubr.bf16.mxu0 0
        %1491 = vmatmul.mubr.bf16.gmra.mxu0 %v1424
        %v1492 = vpop.f32.mrf.mxu0
        %v1493 = vadd.f32 %v1365, %v1492
        %v1494 = vpop.f32.mrf.mxu0
        %v1495 = vpop.f32.mrf.mxu0
        %v1496 = vadd.f32 %v1367, %v1495
        %v1497 = vpop.f32.mrf.mxu0
        %1498 = vmatprep.mubr.bf16.mxu0 0
        %1499 = vmatmul.mubr.bf16.gmra.mxu0 %v1427
        %v1500 = vpop.f32.mrf.mxu0
        %v1501 = vadd.f32 %v1369, %v1500
        %v1502 = vpop.f32.mrf.mxu0
        %v1503 = vpop.f32.mrf.mxu0
        %v1504 = vadd.f32 %v1371, %v1503
        %v1505 = vpop.f32.mrf.mxu0
        %1506 = vmatprep.mubr.bf16.mxu0 0
        %1507 = vmatmul.mubr.bf16.gmra.mxu0 %v1430
        %v1508 = vpop.f32.mrf.mxu0
        %v1509 = vadd.f32 %v1373, %v1508
        %v1510 = vpop.f32.mrf.mxu0
        %v1511 = vpop.f32.mrf.mxu0
        %v1512 = vadd.f32 %v1375, %v1511
        %v1513 = vpop.f32.mrf.mxu0
        %1514 = vmatprep.mubr.bf16.mxu0 0
        %1515 = vmatmul.mubr.bf16.gmra.mxu0 %v1433
        %v1516 = vpop.f32.mrf.mxu0
        %v1517 = vadd.f32 %v1377, %v1516
        %v1518 = vpop.f32.mrf.mxu0
        %v1519 = vpop.f32.mrf.mxu0
        %v1520 = vadd.f32 %v1379, %v1519
        %v1521 = vpop.f32.mrf.mxu0
        %1522 = vmatprep.mubr.bf16.mxu0 0
        %1523 = vmatmul.mubr.bf16.gmra.mxu0 %v1436
        %v1524 = vpop.f32.mrf.mxu0
        %v1525 = vadd.f32 %v1381, %v1524
        %v1526 = vpop.f32.mrf.mxu0
        %v1527 = vpop.f32.mrf.mxu0
        %v1528 = vadd.f32 %v1383, %v1527
        %v1529 = vpop.f32.mrf.mxu0
        %1530 = vmatprep.mubr.bf16.mxu0 0
        %1531 = vmatmul.mubr.bf16.gmra.mxu0 %v1439
        %v1532 = vpop.f32.mrf.mxu0
        %v1533 = vadd.f32 %v1385, %v1532
        %v1534 = vpop.f32.mrf.mxu0
        %v1535 = vpop.f32.mrf.mxu0
        %v1536 = vadd.f32 %v1387, %v1535
        %v1537 = vpop.f32.mrf.mxu0
        %1538 = vmatprep.mubr.bf16.mxu0 0
        %1539 = vmatmul.mubr.bf16.gmra.mxu0 %v1442
        %v1540 = vpop.f32.mrf.mxu0
        %v1541 = vadd.f32 %v1389, %v1540
        %v1542 = vpop.f32.mrf.mxu0
        %v1543 = vpop.f32.mrf.mxu0
        %v1544 = vadd.f32 %v1391, %v1543
        %v1545 = vpop.f32.mrf.mxu0
        %1546 = vmatprep.mubr.bf16.mxu0 0
        %1547 = vmatmul.mubr.bf16.gmra.mxu0 %v1445
        %v1548 = vpop.f32.mrf.mxu0
        %v1549 = vadd.f32 %v1393, %v1548
        %v1550 = vpop.f32.mrf.mxu0
        %v1551 = vpop.f32.mrf.mxu0
        %v1552 = vadd.f32 %v1395, %v1551
        %v1553 = vpop.f32.mrf.mxu0
        %1554 = vmatprep.mubr.bf16.mxu0 0
        %1555 = vmatmul.mubr.bf16.gmra.mxu0 %v1448
        %v1556 = vpop.f32.mrf.mxu0
        %v1557 = vadd.f32 %v1397, %v1556
        %v1558 = vpop.f32.mrf.mxu0
        %v1559 = vpop.f32.mrf.mxu0
        %v1560 = vadd.f32 %v1399, %v1559
        %v1561 = vpop.f32.mrf.mxu0
        %1562 = vdwg.mxu0
        %v1563 = vmax.f32 %v1485, 0.0
        %v1564 = vmax.f32 %v1488, 0.0
        %v1565 = vmax.f32 %v1493, 0.0
        %v1566 = vmax.f32 %v1496, 0.0
        %v1567 = vmax.f32 %v1501, 0.0
        %v1568 = vmax.f32 %v1504, 0.0
        %v1569 = vmax.f32 %v1509, 0.0
        %v1570 = vmax.f32 %v1512, 0.0
        %v1571 = vmax.f32 %v1517, 0.0
        %v1572 = vmax.f32 %v1520, 0.0
        %v1573 = vmax.f32 %v1525, 0.0
        %v1574 = vmax.f32 %v1528, 0.0
        %v1575 = vmax.f32 %v1533, 0.0
        %v1576 = vmax.f32 %v1536, 0.0
        %v1577 = vmax.f32 %v1541, 0.0
        %v1578 = vmax.f32 %v1544, 0.0
        %v1579 = vmax.f32 %v1549, 0.0
        %v1580 = vmax.f32 %v1552, 0.0
        %v1581 = vmax.f32 %v1557, 0.0
        %v1582 = vmax.f32 %v1560, 0.0
        %1603 = vrot.lane.b32.xlu0 %v1063, 32
        %v1604 = vpop.permute.xlu0 %1603
        %1605 = vrot.lane.b32.xlu0 %v1064, 32
        %v1606 = vpop.permute.xlu0 %1605
        %1607 = vrot.lane.b32.xlu0 %v1065, 32
        %v1608 = vpop.permute.xlu0 %1607
        %1609 = vrot.lane.b32.xlu0 %v1066, 32
        %v1610 = vpop.permute.xlu0 %1609
        %1611 = vrot.lane.b32.xlu0 %v1067, 32
        %v1612 = vpop.permute.xlu0 %1611
        %1613 = vrot.lane.b32.xlu0 %v1068, 32
        %v1614 = vpop.permute.xlu0 %1613
        %1615 = vrot.lane.b32.xlu0 %v1069, 32
        %v1616 = vpop.permute.xlu0 %1615
        %1617 = vrot.lane.b32.xlu0 %v1070, 32
        %v1618 = vpop.permute.xlu0 %1617
        %1619 = vrot.lane.b32.xlu0 %v1071, 32
        %v1620 = vpop.permute.xlu0 %1619
        %1621 = vrot.lane.b32.xlu0 %v1072, 32
        %v1622 = vpop.permute.xlu0 %1621
        %1623 = vrot.lane.b32.xlu0 %v1073, 32
        %v1624 = vpop.permute.xlu0 %1623
        %1625 = vrot.lane.b32.xlu0 %v1074, 32
        %v1626 = vpop.permute.xlu0 %1625
        %1627 = vrot.lane.b32.xlu0 %v1075, 32
        %v1628 = vpop.permute.xlu0 %1627
        %1629 = vrot.lane.b32.xlu0 %v1076, 32
        %v1630 = vpop.permute.xlu0 %1629
        %1631 = vrot.lane.b32.xlu0 %v1077, 32
        %v1632 = vpop.permute.xlu0 %1631
        %1633 = vrot.lane.b32.xlu0 %v1078, 32
        %v1634 = vpop.permute.xlu0 %1633
        %1635 = vrot.lane.b32.xlu0 %v1079, 32
        %v1636 = vpop.permute.xlu0 %1635
        %1637 = vrot.lane.b32.xlu0 %v1080, 32
        %v1638 = vpop.permute.xlu0 %1637
        %1639 = vrot.lane.b32.xlu0 %v1081, 32
        %v1640 = vpop.permute.xlu0 %1639
        %1641 = vrot.lane.b32.xlu0 %v1082, 32
        %v1642 = vpop.permute.xlu0 %1641
        %1683 = vrot.lane.b32.xlu0 %v1313, 64
        %v1684 = vpop.permute.xlu0 %1683
        %1685 = vrot.lane.b32.xlu0 %v1314, 64
        %v1686 = vpop.permute.xlu0 %1685
        %1687 = vrot.lane.b32.xlu0 %v1315, 64
        %v1688 = vpop.permute.xlu0 %1687
        %1689 = vrot.lane.b32.xlu0 %v1316, 64
        %v1690 = vpop.permute.xlu0 %1689
        %1691 = vrot.lane.b32.xlu0 %v1317, 64
        %v1692 = vpop.permute.xlu0 %1691
        %1693 = vrot.lane.b32.xlu0 %v1318, 64
        %v1694 = vpop.permute.xlu0 %1693
        %1695 = vrot.lane.b32.xlu0 %v1319, 64
        %v1696 = vpop.permute.xlu0 %1695
        %1697 = vrot.lane.b32.xlu0 %v1320, 64
        %v1698 = vpop.permute.xlu0 %1697
        %1699 = vrot.lane.b32.xlu0 %v1321, 64
        %v1700 = vpop.permute.xlu0 %1699
        %1701 = vrot.lane.b32.xlu0 %v1322, 64
        %v1702 = vpop.permute.xlu0 %1701
        %1703 = vrot.lane.b32.xlu0 %v1323, 64
        %v1704 = vpop.permute.xlu0 %1703
        %1705 = vrot.lane.b32.xlu0 %v1324, 64
        %v1706 = vpop.permute.xlu0 %1705
        %1707 = vrot.lane.b32.xlu0 %v1325, 64
        %v1708 = vpop.permute.xlu0 %1707
        %1709 = vrot.lane.b32.xlu0 %v1326, 64
        %v1710 = vpop.permute.xlu0 %1709
        %1711 = vrot.lane.b32.xlu0 %v1327, 64
        %v1712 = vpop.permute.xlu0 %1711
        %1713 = vrot.lane.b32.xlu0 %v1328, 64
        %v1714 = vpop.permute.xlu0 %1713
        %1715 = vrot.lane.b32.xlu0 %v1329, 64
        %v1716 = vpop.permute.xlu0 %1715
        %1717 = vrot.lane.b32.xlu0 %v1330, 64
        %v1718 = vpop.permute.xlu0 %1717
        %1719 = vrot.lane.b32.xlu0 %v1331, 64
        %v1720 = vpop.permute.xlu0 %1719
        %1721 = vrot.lane.b32.xlu0 %v1332, 64
        %v1722 = vpop.permute.xlu0 %1721
        %1763 = vrot.lane.b32.xlu0 %v1563, 96
        %v1764 = vpop.permute.xlu0 %1763
        %1765 = vrot.lane.b32.xlu0 %v1564, 96
        %v1766 = vpop.permute.xlu0 %1765
        %1767 = vrot.lane.b32.xlu0 %v1565, 96
        %v1768 = vpop.permute.xlu0 %1767
        %1769 = vrot.lane.b32.xlu0 %v1566, 96
        %v1770 = vpop.permute.xlu0 %1769
        %1771 = vrot.lane.b32.xlu0 %v1567, 96
        %v1772 = vpop.permute.xlu0 %1771
        %1773 = vrot.lane.b32.xlu0 %v1568, 96
        %v1774 = vpop.permute.xlu0 %1773
        %1775 = vrot.lane.b32.xlu0 %v1569, 96
        %v1776 = vpop.permute.xlu0 %1775
        %1777 = vrot.lane.b32.xlu0 %v1570, 96
        %v1778 = vpop.permute.xlu0 %1777
        %1779 = vrot.lane.b32.xlu0 %v1571, 96
        %v1780 = vpop.permute.xlu0 %1779
        %1781 = vrot.lane.b32.xlu0 %v1572, 96
        %v1782 = vpop.permute.xlu0 %1781
        %1783 = vrot.lane.b32.xlu0 %v1573, 96
        %v1784 = vpop.permute.xlu0 %1783
        %1785 = vrot.lane.b32.xlu0 %v1574, 96
        %v1786 = vpop.permute.xlu0 %1785
        %1787 = vrot.lane.b32.xlu0 %v1575, 96
        %v1788 = vpop.permute.xlu0 %1787
        %1789 = vrot.lane.b32.xlu0 %v1576, 96
        %v1790 = vpop.permute.xlu0 %1789
        %1791 = vrot.lane.b32.xlu0 %v1577, 96
        %v1792 = vpop.permute.xlu0 %1791
        %1793 = vrot.lane.b32.xlu0 %v1578, 96
        %v1794 = vpop.permute.xlu0 %1793
        %1795 = vrot.lane.b32.xlu0 %v1579, 96
        %v1796 = vpop.permute.xlu0 %1795
        %1797 = vrot.lane.b32.xlu0 %v1580, 96
        %v1798 = vpop.permute.xlu0 %1797
        %1799 = vrot.lane.b32.xlu0 %v1581, 96
        %v1800 = vpop.permute.xlu0 %1799
        %1801 = vrot.lane.b32.xlu0 %v1582, 96
        %v1802 = vpop.permute.xlu0 %1801
        %v1823 = vsel %vm919, %v793, %v1604
        %v1824 = vsel %vm919, %v794, %v1606
        %v1825 = vsel %vm919, %v795, %v1608
        %v1826 = vsel %vm919, %v796, %v1610
        %v1827 = vsel %vm919, %v797, %v1612
        %v1828 = vsel %vm919, %v798, %v1614
        %v1829 = vsel %vm919, %v799, %v1616
        %v1830 = vsel %vm919, %v800, %v1618
        %v1831 = vsel %vm919, %v801, %v1620
        %v1832 = vsel %vm919, %v802, %v1622
        %v1833 = vsel %vm919, %v803, %v1624
        %v1834 = vsel %vm919, %v804, %v1626
        %v1835 = vsel %vm919, %v805, %v1628
        %v1836 = vsel %vm919, %v806, %v1630
        %v1837 = vsel %vm919, %v807, %v1632
        %v1838 = vsel %vm919, %v808, %v1634
        %v1839 = vsel %vm919, %v809, %v1636
        %v1840 = vsel %vm919, %v810, %v1638
        %v1841 = vsel %vm919, %v811, %v1640
        %v1842 = vsel %vm919, %v812, %v1642
        %vm1843 = vcmask 523264
        %v1844 = vsel %vm1843, %v1823, %v1684
        %v1845 = vsel %vm1843, %v1824, %v1686
        %v1846 = vsel %vm1843, %v1825, %v1688
        %v1847 = vsel %vm1843, %v1826, %v1690
        %v1848 = vsel %vm1843, %v1827, %v1692
        %v1849 = vsel %vm1843, %v1828, %v1694
        %v1850 = vsel %vm1843, %v1829, %v1696
        %v1851 = vsel %vm1843, %v1830, %v1698
        %v1852 = vsel %vm1843, %v1831, %v1700
        %v1853 = vsel %vm1843, %v1832, %v1702
        %v1854 = vsel %vm1843, %v1833, %v1704
        %v1855 = vsel %vm1843, %v1834, %v1706
        %v1856 = vsel %vm1843, %v1835, %v1708
        %v1857 = vsel %vm1843, %v1836, %v1710
        %v1858 = vsel %vm1843, %v1837, %v1712
        %v1859 = vsel %vm1843, %v1838, %v1714
        %v1860 = vsel %vm1843, %v1839, %v1716
        %v1861 = vsel %vm1843, %v1840, %v1718
        %v1862 = vsel %vm1843, %v1841, %v1720
        %v1863 = vsel %vm1843, %v1842, %v1722
        %vm1864 = vcmask 785408
        %v1865 = vsel %vm1864, %v1844, %v1764
        %v1866 = vsel %vm1864, %v1845, %v1766
        %v1867 = vsel %vm1864, %v1846, %v1768
        %v1868 = vsel %vm1864, %v1847, %v1770
        %v1869 = vsel %vm1864, %v1848, %v1772
        %v1870 = vsel %vm1864, %v1849, %v1774
        %v1871 = vsel %vm1864, %v1850, %v1776
        %v1872 = vsel %vm1864, %v1851, %v1778
        %v1873 = vsel %vm1864, %v1852, %v1780
        %v1874 = vsel %vm1864, %v1853, %v1782
        %v1875 = vsel %vm1864, %v1854, %v1784
        %v1876 = vsel %vm1864, %v1855, %v1786
        %v1877 = vsel %vm1864, %v1856, %v1788
        %v1878 = vsel %vm1864, %v1857, %v1790
        %v1879 = vsel %vm1864, %v1858, %v1792
        %v1880 = vsel %vm1864, %v1859, %v1794
        %v1881 = vsel %vm1864, %v1860, %v1796
        %v1882 = vsel %vm1864, %v1861, %v1798
        %v1883 = vsel %vm1864, %v1862, %v1800
        %v1884 = vsel %vm1864, %v1863, %v1802
        %1886 = vset.pattern.permute.xlu0 40
        %1887 = vperm.xlu0 %1886, %v552
        %v1888 = vpop.permute.xlu0 %1887
        %1891 = vset.pattern.permute.xlu0 40
        %1892 = vperm.xlu0 %1891, %v553
        %v1893 = vpop.permute.xlu0 %1892
        %1896 = vset.pattern.permute.xlu0 40
        %1897 = vperm.xlu0 %1896, %v554
        %v1898 = vpop.permute.xlu0 %1897
        %1901 = vset.pattern.permute.xlu0 40
        %1902 = vperm.xlu0 %1901, %v555
        %v1903 = vpop.permute.xlu0 %1902
        %1906 = vset.pattern.permute.xlu0 40
        %1907 = vperm.xlu0 %1906, %v556
        %v1908 = vpop.permute.xlu0 %1907
        %1911 = vset.pattern.permute.xlu0 40
        %1912 = vperm.xlu0 %1911, %v557
        %v1913 = vpop.permute.xlu0 %1912
        %1916 = vset.pattern.permute.xlu0 40
        %1917 = vperm.xlu0 %1916, %v558
        %v1918 = vpop.permute.xlu0 %1917
        %1921 = vset.pattern.permute.xlu0 40
        %1922 = vperm.xlu0 %1921, %v559
        %v1923 = vpop.permute.xlu0 %1922
        %1926 = vset.pattern.permute.xlu0 40
        %1927 = vperm.xlu0 %1926, %v560
        %v1928 = vpop.permute.xlu0 %1927
        %1931 = vset.pattern.permute.xlu0 40
        %1932 = vperm.xlu0 %1931, %v561
        %v1933 = vpop.permute.xlu0 %1932
        %1936 = vset.pattern.permute.xlu0 40
        %1937 = vperm.xlu0 %1936, %v562
        %v1938 = vpop.permute.xlu0 %1937
        %1941 = vset.pattern.permute.xlu0 40
        %1942 = vperm.xlu0 %1941, %v563
        %v1943 = vpop.permute.xlu0 %1942
        %1946 = vset.pattern.permute.xlu0 40
        %1947 = vperm.xlu0 %1946, %v564
        %v1948 = vpop.permute.xlu0 %1947
        %1951 = vset.pattern.permute.xlu0 40
        %1952 = vperm.xlu0 %1951, %v565
        %v1953 = vpop.permute.xlu0 %1952
        %1956 = vset.pattern.permute.xlu0 40
        %1957 = vperm.xlu0 %1956, %v566
        %v1958 = vpop.permute.xlu0 %1957
        %1961 = vset.pattern.permute.xlu0 40
        %1962 = vperm.xlu0 %1961, %v567
        %v1963 = vpop.permute.xlu0 %1962
        %1966 = vset.pattern.permute.xlu0 40
        %1967 = vperm.xlu0 %1966, %v568
        %v1968 = vpop.permute.xlu0 %1967
        %1971 = vset.pattern.permute.xlu0 40
        %1972 = vperm.xlu0 %1971, %v569
        %v1973 = vpop.permute.xlu0 %1972
        %1976 = vset.pattern.permute.xlu0 40
        %1977 = vperm.xlu0 %1976, %v570
        %v1978 = vpop.permute.xlu0 %1977
        %1981 = vset.pattern.permute.xlu0 40
        %1982 = vperm.xlu0 %1981, %v571
        %v1983 = vpop.permute.xlu0 %1982
        %v1985 = vmul.f32 %v1865, %v1888
        %v1986 = vmul.f32 %v1866, %v1893
        %v1987 = vmul.f32 %v1867, %v1898
        %v1988 = vmul.f32 %v1868, %v1903
        %v1989 = vmul.f32 %v1869, %v1908
        %v1990 = vmul.f32 %v1870, %v1913
        %v1991 = vmul.f32 %v1871, %v1918
        %v1992 = vmul.f32 %v1872, %v1923
        %v1993 = vmul.f32 %v1873, %v1928
        %v1994 = vmul.f32 %v1874, %v1933
        %v1995 = vmul.f32 %v1875, %v1938
        %v1996 = vmul.f32 %v1876, %v1943
        %v1997 = vmul.f32 %v1877, %v1948
        %v1998 = vmul.f32 %v1878, %v1953
        %v1999 = vmul.f32 %v1879, %v1958
        %v2000 = vmul.f32 %v1880, %v1963
        %v2001 = vmul.f32 %v1881, %v1968
        %v2002 = vmul.f32 %v1882, %v1973
        %v2003 = vmul.f32 %v1883, %v1978
        %v2004 = vmul.f32 %v1884, %v1983
        %s2005 = scalar_lea.vmem %s508, 80 [#allocation2]
        %v2006 = vld [vmem:[%s2005] sm:$0xf]
        %v2007 = vld [vmem:[%s2005 + $0x4] sm:$0xf]
        %v2008 = vld [vmem:[%s2005 + $0x8] sm:$0xf]
        %v2009 = vld [vmem:[%s2005 + $0xc] sm:$0xf]
        %v2010 = vld [vmem:[%s2005 + $0x10] sm:$0xf]
        %v2011 = vld [vmem:[%s2005 + $0x14] sm:$0xf]
        %v2012 = vld [vmem:[%s2005 + $0x18] sm:$0xf]
        %v2013 = vld [vmem:[%s2005 + $0x1c] sm:$0xf]
        %v2014 = vld [vmem:[%s2005 + $0x20] sm:$0xf]
        %v2015 = vld [vmem:[%s2005 + $0x24] sm:$0xf]
        %v2016 = vld [vmem:[%s2005 + $0x28] sm:$0xf]
        %v2017 = vld [vmem:[%s2005 + $0x2c] sm:$0xf]
        %v2018 = vld [vmem:[%s2005 + $0x30] sm:$0xf]
        %v2019 = vld [vmem:[%s2005 + $0x34] sm:$0xf]
        %v2020 = vld [vmem:[%s2005 + $0x38] sm:$0xf]
        %v2021 = vld [vmem:[%s2005 + $0x3c] sm:$0xf]
        %v2022 = vld [vmem:[%s2005 + $0x40] sm:$0xf]
        %v2023 = vld [vmem:[%s2005 + $0x44] sm:$0xf]
        %v2024 = vld [vmem:[%s2005 + $0x48] sm:$0xf]
        %v2025 = vld [vmem:[%s2005 + $0x4c] sm:$0xf]
        %v2026 = vunpack.c.l.bf16 %v2006
        %v2027 = vunpack.c.l.bf16 %v2007
        %v2028 = vunpack.c.l.bf16 %v2008
        %v2029 = vunpack.c.l.bf16 %v2009
        %v2030 = vunpack.c.l.bf16 %v2010
        %v2031 = vunpack.c.l.bf16 %v2011
        %v2032 = vunpack.c.l.bf16 %v2012
        %v2033 = vunpack.c.l.bf16 %v2013
        %v2034 = vunpack.c.l.bf16 %v2014
        %v2035 = vunpack.c.l.bf16 %v2015
        %v2036 = vunpack.c.l.bf16 %v2016
        %v2037 = vunpack.c.l.bf16 %v2017
        %v2038 = vunpack.c.l.bf16 %v2018
        %v2039 = vunpack.c.l.bf16 %v2019
        %v2040 = vunpack.c.l.bf16 %v2020
        %v2041 = vunpack.c.l.bf16 %v2021
        %v2042 = vunpack.c.l.bf16 %v2022
        %v2043 = vunpack.c.l.bf16 %v2023
        %v2044 = vunpack.c.l.bf16 %v2024
        %v2045 = vunpack.c.l.bf16 %v2025
        %v2066 = vunpack.c.l.b16 %v2006
        %v2067 = vunpack.c.l.b16 %v2007
        %v2068 = vunpack.c.l.b16 %v2008
        %v2069 = vunpack.c.l.b16 %v2009
        %v2070 = vunpack.c.l.b16 %v2010
        %v2071 = vunpack.c.l.b16 %v2011
        %v2072 = vunpack.c.l.b16 %v2012
        %v2073 = vunpack.c.l.b16 %v2013
        %v2074 = vunpack.c.l.b16 %v2014
        %v2075 = vunpack.c.l.b16 %v2015
        %v2076 = vunpack.c.l.b16 %v2016
        %v2077 = vunpack.c.l.b16 %v2017
        %v2078 = vunpack.c.l.b16 %v2018
        %v2079 = vunpack.c.l.b16 %v2019
        %v2080 = vunpack.c.l.b16 %v2020
        %v2081 = vunpack.c.l.b16 %v2021
        %v2082 = vunpack.c.l.b16 %v2022
        %v2083 = vunpack.c.l.b16 %v2023
        %v2084 = vunpack.c.l.b16 %v2024
        %v2085 = vunpack.c.l.b16 %v2025
        %v2086 = vpack.c.b16 %v2067, %v2066
        %v2087 = vpack.c.b16 %v2069, %v2068
        %v2088 = vpack.c.b16 %v2071, %v2070
        %v2089 = vpack.c.b16 %v2073, %v2072
        %v2090 = vpack.c.b16 %v2075, %v2074
        %v2091 = vpack.c.b16 %v2077, %v2076
        %v2092 = vpack.c.b16 %v2079, %v2078
        %v2093 = vpack.c.b16 %v2081, %v2080
        %v2094 = vpack.c.b16 %v2083, %v2082
        %v2095 = vpack.c.b16 %v2085, %v2084
        %v2097 = vsel %vm645, %v2086, 0
        %v2100 = vsel %vm645, %v2087, 0
        %v2103 = vsel %vm645, %v2088, 0
        %v2106 = vsel %vm645, %v2089, 0
        %v2109 = vsel %vm645, %v2090, 0
        %v2112 = vsel %vm645, %v2091, 0
        %v2115 = vsel %vm645, %v2092, 0
        %v2118 = vsel %vm645, %v2093, 0
        %v2121 = vsel %vm645, %v2094, 0
        %v2124 = vsel %vm645, %v2095, 0
        %2126 = vmatprep.subr.bf16.mxu0 0
        %2127 = vmatpush1.bf16.msra.mxu0 0
        %2128 = vmatprep.subr.bf16.mxu0 0
        %2129 = vmatpush1.bf16.msra.mxu0 0
        %2130 = vmatprep.subr.bf16.mxu0 0
        %2131 = vmatpush1.bf16.msra.mxu0 0
        %2132 = vmatprep.subr.bf16.mxu0 0
        %2133 = vmatpush1.bf16.msra.mxu0 0
        %2134 = vmatprep.subr.bf16.mxu0 0
        %2135 = vmatpush1.bf16.msra.mxu0 0
        %2136 = vmatprep.subr.bf16.mxu0 0
        %2137 = vmatpush1.bf16.msra.mxu0 %v678
        %2138 = vmatprep.subr.bf16.mxu0 0
        %2139 = vmatpush1.bf16.msra.mxu0 %v641
        %2140 = vmatprep.subr.bf16.mxu0 0
        %2141 = vmatpush1.bf16.msra.mxu0 %v640
        %2142 = vmatprep.subr.bf16.mxu0 0
        %2143 = vmatpush2.bf16.msra.mxu0 0
        %2144 = vmatprep.subr.bf16.mxu0 0
        %2145 = vmatpush2.bf16.msra.mxu0 0
        %2146 = vmatprep.subr.bf16.mxu0 0
        %2147 = vmatpush2.bf16.msra.mxu0 0
        %2148 = vmatprep.subr.bf16.mxu0 0
        %2149 = vmatpush2.bf16.msra.mxu0 0
        %2150 = vmatprep.subr.bf16.mxu0 0
        %2151 = vmatpush2.bf16.msra.mxu0 0
        %2152 = vmatprep.subr.bf16.mxu0 0
        %2153 = vmatpush2.bf16.msra.mxu0 0
        %2154 = vmatprep.subr.bf16.mxu0 0
        %2155 = vmatpush2.bf16.msra.mxu0 0
        %2156 = vmatprep.subr.bf16.mxu0 0
        %2157 = vmatpush2.bf16.msra.mxu0 0
        %2158 = vmatprep.mubr.bf16.mxu0 0
        %2159 = vmatmul.mubr.bf16.gmra.mxu0 %v2097
        %v2160 = vpop.f32.mrf.mxu0
        %v2161 = vadd.f32 0.0, %v2160
        %v2162 = vpop.f32.mrf.mxu0
        %v2163 = vpop.f32.mrf.mxu0
        %v2164 = vadd.f32 0.0, %v2163
        %v2165 = vpop.f32.mrf.mxu0
        %2166 = vmatprep.mubr.bf16.mxu0 0
        %2167 = vmatmul.mubr.bf16.gmra.mxu0 %v2100
        %v2168 = vpop.f32.mrf.mxu0
        %v2169 = vadd.f32 0.0, %v2168
        %v2170 = vpop.f32.mrf.mxu0
        %v2171 = vpop.f32.mrf.mxu0
        %v2172 = vadd.f32 0.0, %v2171
        %v2173 = vpop.f32.mrf.mxu0
        %2174 = vmatprep.mubr.bf16.mxu0 0
        %2175 = vmatmul.mubr.bf16.gmra.mxu0 %v2103
        %v2176 = vpop.f32.mrf.mxu0
        %v2177 = vadd.f32 0.0, %v2176
        %v2178 = vpop.f32.mrf.mxu0
        %v2179 = vpop.f32.mrf.mxu0
        %v2180 = vadd.f32 0.0, %v2179
        %v2181 = vpop.f32.mrf.mxu0
        %2182 = vmatprep.mubr.bf16.mxu0 0
        %2183 = vmatmul.mubr.bf16.gmra.mxu0 %v2106
        %v2184 = vpop.f32.mrf.mxu0
        %v2185 = vadd.f32 0.0, %v2184
        %v2186 = vpop.f32.mrf.mxu0
        %v2187 = vpop.f32.mrf.mxu0
        %v2188 = vadd.f32 0.0, %v2187
        %v2189 = vpop.f32.mrf.mxu0
        %2190 = vmatprep.mubr.bf16.mxu0 0
        %2191 = vmatmul.mubr.bf16.gmra.mxu0 %v2109
        %v2192 = vpop.f32.mrf.mxu0
        %v2193 = vadd.f32 0.0, %v2192
        %v2194 = vpop.f32.mrf.mxu0
        %v2195 = vpop.f32.mrf.mxu0
        %v2196 = vadd.f32 0.0, %v2195
        %v2197 = vpop.f32.mrf.mxu0
        %2198 = vmatprep.mubr.bf16.mxu0 0
        %2199 = vmatmul.mubr.bf16.gmra.mxu0 %v2112
        %v2200 = vpop.f32.mrf.mxu0
        %v2201 = vadd.f32 0.0, %v2200
        %v2202 = vpop.f32.mrf.mxu0
        %v2203 = vpop.f32.mrf.mxu0
        %v2204 = vadd.f32 0.0, %v2203
        %v2205 = vpop.f32.mrf.mxu0
        %2206 = vmatprep.mubr.bf16.mxu0 0
        %2207 = vmatmul.mubr.bf16.gmra.mxu0 %v2115
        %v2208 = vpop.f32.mrf.mxu0
        %v2209 = vadd.f32 0.0, %v2208
        %v2210 = vpop.f32.mrf.mxu0
        %v2211 = vpop.f32.mrf.mxu0
        %v2212 = vadd.f32 0.0, %v2211
        %v2213 = vpop.f32.mrf.mxu0
        %2214 = vmatprep.mubr.bf16.mxu0 0
        %2215 = vmatmul.mubr.bf16.gmra.mxu0 %v2118
        %v2216 = vpop.f32.mrf.mxu0
        %v2217 = vadd.f32 0.0, %v2216
        %v2218 = vpop.f32.mrf.mxu0
        %v2219 = vpop.f32.mrf.mxu0
        %v2220 = vadd.f32 0.0, %v2219
        %v2221 = vpop.f32.mrf.mxu0
        %2222 = vmatprep.mubr.bf16.mxu0 0
        %2223 = vmatmul.mubr.bf16.gmra.mxu0 %v2121
        %v2224 = vpop.f32.mrf.mxu0
        %v2225 = vadd.f32 0.0, %v2224
        %v2226 = vpop.f32.mrf.mxu0
        %v2227 = vpop.f32.mrf.mxu0
        %v2228 = vadd.f32 0.0, %v2227
        %v2229 = vpop.f32.mrf.mxu0
        %2230 = vmatprep.mubr.bf16.mxu0 0
        %2231 = vmatmul.mubr.bf16.gmra.mxu0 %v2124
        %v2232 = vpop.f32.mrf.mxu0
        %v2233 = vadd.f32 0.0, %v2232
        %v2234 = vpop.f32.mrf.mxu0
        %v2235 = vpop.f32.mrf.mxu0
        %v2236 = vadd.f32 0.0, %v2235
        %v2237 = vpop.f32.mrf.mxu0
        %2238 = vdwg.mxu0
        %v2239 = vmax.f32 %v2161, 0.0
        %v2240 = vmax.f32 %v2164, 0.0
        %v2241 = vmax.f32 %v2169, 0.0
        %v2242 = vmax.f32 %v2172, 0.0
        %v2243 = vmax.f32 %v2177, 0.0
        %v2244 = vmax.f32 %v2180, 0.0
        %v2245 = vmax.f32 %v2185, 0.0
        %v2246 = vmax.f32 %v2188, 0.0
        %v2247 = vmax.f32 %v2193, 0.0
        %v2248 = vmax.f32 %v2196, 0.0
        %v2249 = vmax.f32 %v2201, 0.0
        %v2250 = vmax.f32 %v2204, 0.0
        %v2251 = vmax.f32 %v2209, 0.0
        %v2252 = vmax.f32 %v2212, 0.0
        %v2253 = vmax.f32 %v2217, 0.0
        %v2254 = vmax.f32 %v2220, 0.0
        %v2255 = vmax.f32 %v2225, 0.0
        %v2256 = vmax.f32 %v2228, 0.0
        %v2257 = vmax.f32 %v2233, 0.0
        %v2258 = vmax.f32 %v2236, 0.0
        %v2259 = vpack.c.bf16 %v2240, %v2239
        %v2260 = vpack.c.bf16 %v2242, %v2241
        %v2261 = vpack.c.bf16 %v2244, %v2243
        %v2262 = vpack.c.bf16 %v2246, %v2245
        %v2263 = vpack.c.bf16 %v2248, %v2247
        %v2264 = vpack.c.bf16 %v2250, %v2249
        %v2265 = vpack.c.bf16 %v2252, %v2251
        %v2266 = vpack.c.bf16 %v2254, %v2253
        %v2267 = vpack.c.bf16 %v2256, %v2255
        %v2268 = vpack.c.bf16 %v2258, %v2257
        %2289 = vrot.lane.b32.xlu0 %v2161, 96
        %v2290 = vpop.permute.xlu0 %2289
        %2291 = vrot.lane.b32.xlu0 %v2164, 96
        %v2292 = vpop.permute.xlu0 %2291
        %2293 = vrot.lane.b32.xlu0 %v2169, 96
        %v2294 = vpop.permute.xlu0 %2293
        %2295 = vrot.lane.b32.xlu0 %v2172, 96
        %v2296 = vpop.permute.xlu0 %2295
        %2297 = vrot.lane.b32.xlu0 %v2177, 96
        %v2298 = vpop.permute.xlu0 %2297
        %2299 = vrot.lane.b32.xlu0 %v2180, 96
        %v2300 = vpop.permute.xlu0 %2299
        %2301 = vrot.lane.b32.xlu0 %v2185, 96
        %v2302 = vpop.permute.xlu0 %2301
        %2303 = vrot.lane.b32.xlu0 %v2188, 96
        %v2304 = vpop.permute.xlu0 %2303
        %2305 = vrot.lane.b32.xlu0 %v2193, 96
        %v2306 = vpop.permute.xlu0 %2305
        %2307 = vrot.lane.b32.xlu0 %v2196, 96
        %v2308 = vpop.permute.xlu0 %2307
        %2309 = vrot.lane.b32.xlu0 %v2201, 96
        %v2310 = vpop.permute.xlu0 %2309
        %2311 = vrot.lane.b32.xlu0 %v2204, 96
        %v2312 = vpop.permute.xlu0 %2311
        %2313 = vrot.lane.b32.xlu0 %v2209, 96
        %v2314 = vpop.permute.xlu0 %2313
        %2315 = vrot.lane.b32.xlu0 %v2212, 96
        %v2316 = vpop.permute.xlu0 %2315
        %2317 = vrot.lane.b32.xlu0 %v2217, 96
        %v2318 = vpop.permute.xlu0 %2317
        %2319 = vrot.lane.b32.xlu0 %v2220, 96
        %v2320 = vpop.permute.xlu0 %2319
        %2321 = vrot.lane.b32.xlu0 %v2225, 96
        %v2322 = vpop.permute.xlu0 %2321
        %2323 = vrot.lane.b32.xlu0 %v2228, 96
        %v2324 = vpop.permute.xlu0 %2323
        %2325 = vrot.lane.b32.xlu0 %v2233, 96
        %v2326 = vpop.permute.xlu0 %2325
        %2327 = vrot.lane.b32.xlu0 %v2236, 96
        %v2328 = vpop.permute.xlu0 %2327
        %v2350 = vsel %vm919, %v2259, 0
        %v2353 = vsel %vm919, %v2260, 0
        %v2356 = vsel %vm919, %v2261, 0
        %v2359 = vsel %vm919, %v2262, 0
        %v2362 = vsel %vm919, %v2263, 0
        %v2365 = vsel %vm919, %v2264, 0
        %v2368 = vsel %vm919, %v2265, 0
        %v2371 = vsel %vm919, %v2266, 0
        %v2374 = vsel %vm919, %v2267, 0
        %v2377 = vsel %vm919, %v2268, 0
        %2379 = vmatprep.subr.bf16.mxu0 0
        %2380 = vmatpush1.bf16.msra.mxu0 0
        %2381 = vmatprep.subr.bf16.mxu0 0
        %2382 = vmatpush1.bf16.msra.mxu0 0
        %2383 = vmatprep.subr.bf16.mxu0 0
        %2384 = vmatpush1.bf16.msra.mxu0 0
        %2385 = vmatprep.subr.bf16.mxu0 0
        %2386 = vmatpush1.bf16.msra.mxu0 0
        %2387 = vmatprep.subr.bf16.mxu0 0
        %2388 = vmatpush1.bf16.msra.mxu0 0
        %2389 = vmatprep.subr.bf16.mxu0 0
        %2390 = vmatpush1.bf16.msra.mxu0 0
        %2391 = vmatprep.subr.bf16.mxu0 0
        %2392 = vmatpush1.bf16.msra.mxu0 %v836
        %2393 = vmatprep.subr.bf16.mxu0 0
        %2394 = vmatpush1.bf16.msra.mxu0 %v835
        %2395 = vmatprep.subr.bf16.mxu0 0
        %2396 = vmatpush2.bf16.msra.mxu0 0
        %2397 = vmatprep.subr.bf16.mxu0 0
        %2398 = vmatpush2.bf16.msra.mxu0 0
        %2399 = vmatprep.subr.bf16.mxu0 0
        %2400 = vmatpush2.bf16.msra.mxu0 0
        %2401 = vmatprep.subr.bf16.mxu0 0
        %2402 = vmatpush2.bf16.msra.mxu0 0
        %2403 = vmatprep.subr.bf16.mxu0 0
        %2404 = vmatpush2.bf16.msra.mxu0 0
        %2405 = vmatprep.subr.bf16.mxu0 0
        %2406 = vmatpush2.bf16.msra.mxu0 0
        %2407 = vmatprep.subr.bf16.mxu0 0
        %2408 = vmatpush2.bf16.msra.mxu0 0
        %2409 = vmatprep.subr.bf16.mxu0 0
        %2410 = vmatpush2.bf16.msra.mxu0 0
        %2411 = vmatprep.mubr.bf16.mxu0 0
        %2412 = vmatmul.mubr.bf16.gmra.mxu0 %v2350
        %v2413 = vpop.f32.mrf.mxu0
        %v2414 = vadd.f32 %v2290, %v2413
        %v2415 = vpop.f32.mrf.mxu0
        %v2416 = vpop.f32.mrf.mxu0
        %v2417 = vadd.f32 %v2292, %v2416
        %v2418 = vpop.f32.mrf.mxu0
        %2419 = vmatprep.mubr.bf16.mxu0 0
        %2420 = vmatmul.mubr.bf16.gmra.mxu0 %v2353
        %v2421 = vpop.f32.mrf.mxu0
        %v2422 = vadd.f32 %v2294, %v2421
        %v2423 = vpop.f32.mrf.mxu0
        %v2424 = vpop.f32.mrf.mxu0
        %v2425 = vadd.f32 %v2296, %v2424
        %v2426 = vpop.f32.mrf.mxu0
        %2427 = vmatprep.mubr.bf16.mxu0 0
        %2428 = vmatmul.mubr.bf16.gmra.mxu0 %v2356
        %v2429 = vpop.f32.mrf.mxu0
        %v2430 = vadd.f32 %v2298, %v2429
        %v2431 = vpop.f32.mrf.mxu0
        %v2432 = vpop.f32.mrf.mxu0
        %v2433 = vadd.f32 %v2300, %v2432
        %v2434 = vpop.f32.mrf.mxu0
        %2435 = vmatprep.mubr.bf16.mxu0 0
        %2436 = vmatmul.mubr.bf16.gmra.mxu0 %v2359
        %v2437 = vpop.f32.mrf.mxu0
        %v2438 = vadd.f32 %v2302, %v2437
        %v2439 = vpop.f32.mrf.mxu0
        %v2440 = vpop.f32.mrf.mxu0
        %v2441 = vadd.f32 %v2304, %v2440
        %v2442 = vpop.f32.mrf.mxu0
        %2443 = vmatprep.mubr.bf16.mxu0 0
        %2444 = vmatmul.mubr.bf16.gmra.mxu0 %v2362
        %v2445 = vpop.f32.mrf.mxu0
        %v2446 = vadd.f32 %v2306, %v2445
        %v2447 = vpop.f32.mrf.mxu0
        %v2448 = vpop.f32.mrf.mxu0
        %v2449 = vadd.f32 %v2308, %v2448
        %v2450 = vpop.f32.mrf.mxu0
        %2451 = vmatprep.mubr.bf16.mxu0 0
        %2452 = vmatmul.mubr.bf16.gmra.mxu0 %v2365
        %v2453 = vpop.f32.mrf.mxu0
        %v2454 = vadd.f32 %v2310, %v2453
        %v2455 = vpop.f32.mrf.mxu0
        %v2456 = vpop.f32.mrf.mxu0
        %v2457 = vadd.f32 %v2312, %v2456
        %v2458 = vpop.f32.mrf.mxu0
        %2459 = vmatprep.mubr.bf16.mxu0 0
        %2460 = vmatmul.mubr.bf16.gmra.mxu0 %v2368
        %v2461 = vpop.f32.mrf.mxu0
        %v2462 = vadd.f32 %v2314, %v2461
        %v2463 = vpop.f32.mrf.mxu0
        %v2464 = vpop.f32.mrf.mxu0
        %v2465 = vadd.f32 %v2316, %v2464
        %v2466 = vpop.f32.mrf.mxu0
        %2467 = vmatprep.mubr.bf16.mxu0 0
        %2468 = vmatmul.mubr.bf16.gmra.mxu0 %v2371
        %v2469 = vpop.f32.mrf.mxu0
        %v2470 = vadd.f32 %v2318, %v2469
        %v2471 = vpop.f32.mrf.mxu0
        %v2472 = vpop.f32.mrf.mxu0
        %v2473 = vadd.f32 %v2320, %v2472
        %v2474 = vpop.f32.mrf.mxu0
        %2475 = vmatprep.mubr.bf16.mxu0 0
        %2476 = vmatmul.mubr.bf16.gmra.mxu0 %v2374
        %v2477 = vpop.f32.mrf.mxu0
        %v2478 = vadd.f32 %v2322, %v2477
        %v2479 = vpop.f32.mrf.mxu0
        %v2480 = vpop.f32.mrf.mxu0
        %v2481 = vadd.f32 %v2324, %v2480
        %v2482 = vpop.f32.mrf.mxu0
        %2483 = vmatprep.mubr.bf16.mxu0 0
        %2484 = vmatmul.mubr.bf16.gmra.mxu0 %v2377
        %v2485 = vpop.f32.mrf.mxu0
        %v2486 = vadd.f32 %v2326, %v2485
        %v2487 = vpop.f32.mrf.mxu0
        %v2488 = vpop.f32.mrf.mxu0
        %v2489 = vadd.f32 %v2328, %v2488
        %v2490 = vpop.f32.mrf.mxu0
        %2491 = vdwg.mxu0
        %v2492 = vmax.f32 %v2414, 0.0
        %v2493 = vmax.f32 %v2417, 0.0
        %v2494 = vmax.f32 %v2422, 0.0
        %v2495 = vmax.f32 %v2425, 0.0
        %v2496 = vmax.f32 %v2430, 0.0
        %v2497 = vmax.f32 %v2433, 0.0
        %v2498 = vmax.f32 %v2438, 0.0
        %v2499 = vmax.f32 %v2441, 0.0
        %v2500 = vmax.f32 %v2446, 0.0
        %v2501 = vmax.f32 %v2449, 0.0
        %v2502 = vmax.f32 %v2454, 0.0
        %v2503 = vmax.f32 %v2457, 0.0
        %v2504 = vmax.f32 %v2462, 0.0
        %v2505 = vmax.f32 %v2465, 0.0
        %v2506 = vmax.f32 %v2470, 0.0
        %v2507 = vmax.f32 %v2473, 0.0
        %v2508 = vmax.f32 %v2478, 0.0
        %v2509 = vmax.f32 %v2481, 0.0
        %v2510 = vmax.f32 %v2486, 0.0
        %v2511 = vmax.f32 %v2489, 0.0
        %v2512 = vpack.c.bf16 %v2493, %v2492
        %v2513 = vpack.c.bf16 %v2495, %v2494
        %v2514 = vpack.c.bf16 %v2497, %v2496
        %v2515 = vpack.c.bf16 %v2499, %v2498
        %v2516 = vpack.c.bf16 %v2501, %v2500
        %v2517 = vpack.c.bf16 %v2503, %v2502
        %v2518 = vpack.c.bf16 %v2505, %v2504
        %v2519 = vpack.c.bf16 %v2507, %v2506
        %v2520 = vpack.c.bf16 %v2509, %v2508
        %v2521 = vpack.c.bf16 %v2511, %v2510
        %2522 = vrot.lane.b32.xlu0 %v2161, 64
        %v2523 = vpop.permute.xlu0 %2522
        %2524 = vrot.lane.b32.xlu0 %v2164, 64
        %v2525 = vpop.permute.xlu0 %2524
        %2526 = vrot.lane.b32.xlu0 %v2169, 64
        %v2527 = vpop.permute.xlu0 %2526
        %2528 = vrot.lane.b32.xlu0 %v2172, 64
        %v2529 = vpop.permute.xlu0 %2528
        %2530 = vrot.lane.b32.xlu0 %v2177, 64
        %v2531 = vpop.permute.xlu0 %2530
        %2532 = vrot.lane.b32.xlu0 %v2180, 64
        %v2533 = vpop.permute.xlu0 %2532
        %2534 = vrot.lane.b32.xlu0 %v2185, 64
        %v2535 = vpop.permute.xlu0 %2534
        %2536 = vrot.lane.b32.xlu0 %v2188, 64
        %v2537 = vpop.permute.xlu0 %2536
        %2538 = vrot.lane.b32.xlu0 %v2193, 64
        %v2539 = vpop.permute.xlu0 %2538
        %2540 = vrot.lane.b32.xlu0 %v2196, 64
        %v2541 = vpop.permute.xlu0 %2540
        %2542 = vrot.lane.b32.xlu0 %v2201, 64
        %v2543 = vpop.permute.xlu0 %2542
        %2544 = vrot.lane.b32.xlu0 %v2204, 64
        %v2545 = vpop.permute.xlu0 %2544
        %2546 = vrot.lane.b32.xlu0 %v2209, 64
        %v2547 = vpop.permute.xlu0 %2546
        %2548 = vrot.lane.b32.xlu0 %v2212, 64
        %v2549 = vpop.permute.xlu0 %2548
        %2550 = vrot.lane.b32.xlu0 %v2217, 64
        %v2551 = vpop.permute.xlu0 %2550
        %2552 = vrot.lane.b32.xlu0 %v2220, 64
        %v2553 = vpop.permute.xlu0 %2552
        %2554 = vrot.lane.b32.xlu0 %v2225, 64
        %v2555 = vpop.permute.xlu0 %2554
        %2556 = vrot.lane.b32.xlu0 %v2228, 64
        %v2557 = vpop.permute.xlu0 %2556
        %2558 = vrot.lane.b32.xlu0 %v2233, 64
        %v2559 = vpop.permute.xlu0 %2558
        %2560 = vrot.lane.b32.xlu0 %v2236, 64
        %v2561 = vpop.permute.xlu0 %2560
        %v2583 = vsel %vm919, %v2512, 0
        %v2586 = vsel %vm919, %v2513, 0
        %v2589 = vsel %vm919, %v2514, 0
        %v2592 = vsel %vm919, %v2515, 0
        %v2595 = vsel %vm919, %v2516, 0
        %v2598 = vsel %vm919, %v2517, 0
        %v2601 = vsel %vm919, %v2518, 0
        %v2604 = vsel %vm919, %v2519, 0
        %v2607 = vsel %vm919, %v2520, 0
        %v2610 = vsel %vm919, %v2521, 0
        %2612 = vmatprep.subr.bf16.mxu0 0
        %2613 = vmatpush1.bf16.msra.mxu0 0
        %2614 = vmatprep.subr.bf16.mxu0 0
        %2615 = vmatpush1.bf16.msra.mxu0 0
        %2616 = vmatprep.subr.bf16.mxu0 0
        %2617 = vmatpush1.bf16.msra.mxu0 0
        %2618 = vmatprep.subr.bf16.mxu0 0
        %2619 = vmatpush1.bf16.msra.mxu0 0
        %2620 = vmatprep.subr.bf16.mxu0 0
        %2621 = vmatpush1.bf16.msra.mxu0 0
        %2622 = vmatprep.subr.bf16.mxu0 0
        %2623 = vmatpush1.bf16.msra.mxu0 0
        %2624 = vmatprep.subr.bf16.mxu0 0
        %2625 = vmatpush1.bf16.msra.mxu0 %v1107
        %2626 = vmatprep.subr.bf16.mxu0 0
        %2627 = vmatpush1.bf16.msra.mxu0 %v1106
        %2628 = vmatprep.subr.bf16.mxu0 0
        %2629 = vmatpush2.bf16.msra.mxu0 0
        %2630 = vmatprep.subr.bf16.mxu0 0
        %2631 = vmatpush2.bf16.msra.mxu0 0
        %2632 = vmatprep.subr.bf16.mxu0 0
        %2633 = vmatpush2.bf16.msra.mxu0 0
        %2634 = vmatprep.subr.bf16.mxu0 0
        %2635 = vmatpush2.bf16.msra.mxu0 0
        %2636 = vmatprep.subr.bf16.mxu0 0
        %2637 = vmatpush2.bf16.msra.mxu0 0
        %2638 = vmatprep.subr.bf16.mxu0 0
        %2639 = vmatpush2.bf16.msra.mxu0 0
        %2640 = vmatprep.subr.bf16.mxu0 0
        %2641 = vmatpush2.bf16.msra.mxu0 0
        %2642 = vmatprep.subr.bf16.mxu0 0
        %2643 = vmatpush2.bf16.msra.mxu0 0
        %2644 = vmatprep.mubr.bf16.mxu0 0
        %2645 = vmatmul.mubr.bf16.gmra.mxu0 %v2583
        %v2646 = vpop.f32.mrf.mxu0
        %v2647 = vadd.f32 %v2523, %v2646
        %v2648 = vpop.f32.mrf.mxu0
        %v2649 = vpop.f32.mrf.mxu0
        %v2650 = vadd.f32 %v2525, %v2649
        %v2651 = vpop.f32.mrf.mxu0
        %2652 = vmatprep.mubr.bf16.mxu0 0
        %2653 = vmatmul.mubr.bf16.gmra.mxu0 %v2586
        %v2654 = vpop.f32.mrf.mxu0
        %v2655 = vadd.f32 %v2527, %v2654
        %v2656 = vpop.f32.mrf.mxu0
        %v2657 = vpop.f32.mrf.mxu0
        %v2658 = vadd.f32 %v2529, %v2657
        %v2659 = vpop.f32.mrf.mxu0
        %2660 = vmatprep.mubr.bf16.mxu0 0
        %2661 = vmatmul.mubr.bf16.gmra.mxu0 %v2589
        %v2662 = vpop.f32.mrf.mxu0
        %v2663 = vadd.f32 %v2531, %v2662
        %v2664 = vpop.f32.mrf.mxu0
        %v2665 = vpop.f32.mrf.mxu0
        %v2666 = vadd.f32 %v2533, %v2665
        %v2667 = vpop.f32.mrf.mxu0
        %2668 = vmatprep.mubr.bf16.mxu0 0
        %2669 = vmatmul.mubr.bf16.gmra.mxu0 %v2592
        %v2670 = vpop.f32.mrf.mxu0
        %v2671 = vadd.f32 %v2535, %v2670
        %v2672 = vpop.f32.mrf.mxu0
        %v2673 = vpop.f32.mrf.mxu0
        %v2674 = vadd.f32 %v2537, %v2673
        %v2675 = vpop.f32.mrf.mxu0
        %2676 = vmatprep.mubr.bf16.mxu0 0
        %2677 = vmatmul.mubr.bf16.gmra.mxu0 %v2595
        %v2678 = vpop.f32.mrf.mxu0
        %v2679 = vadd.f32 %v2539, %v2678
        %v2680 = vpop.f32.mrf.mxu0
        %v2681 = vpop.f32.mrf.mxu0
        %v2682 = vadd.f32 %v2541, %v2681
        %v2683 = vpop.f32.mrf.mxu0
        %2684 = vmatprep.mubr.bf16.mxu0 0
        %2685 = vmatmul.mubr.bf16.gmra.mxu0 %v2598
        %v2686 = vpop.f32.mrf.mxu0
        %v2687 = vadd.f32 %v2543, %v2686
        %v2688 = vpop.f32.mrf.mxu0
        %v2689 = vpop.f32.mrf.mxu0
        %v2690 = vadd.f32 %v2545, %v2689
        %v2691 = vpop.f32.mrf.mxu0
        %2692 = vmatprep.mubr.bf16.mxu0 0
        %2693 = vmatmul.mubr.bf16.gmra.mxu0 %v2601
        %v2694 = vpop.f32.mrf.mxu0
        %v2695 = vadd.f32 %v2547, %v2694
        %v2696 = vpop.f32.mrf.mxu0
        %v2697 = vpop.f32.mrf.mxu0
        %v2698 = vadd.f32 %v2549, %v2697
        %v2699 = vpop.f32.mrf.mxu0
        %2700 = vmatprep.mubr.bf16.mxu0 0
        %2701 = vmatmul.mubr.bf16.gmra.mxu0 %v2604
        %v2702 = vpop.f32.mrf.mxu0
        %v2703 = vadd.f32 %v2551, %v2702
        %v2704 = vpop.f32.mrf.mxu0
        %v2705 = vpop.f32.mrf.mxu0
        %v2706 = vadd.f32 %v2553, %v2705
        %v2707 = vpop.f32.mrf.mxu0
        %2708 = vmatprep.mubr.bf16.mxu0 0
        %2709 = vmatmul.mubr.bf16.gmra.mxu0 %v2607
        %v2710 = vpop.f32.mrf.mxu0
        %v2711 = vadd.f32 %v2555, %v2710
        %v2712 = vpop.f32.mrf.mxu0
        %v2713 = vpop.f32.mrf.mxu0
        %v2714 = vadd.f32 %v2557, %v2713
        %v2715 = vpop.f32.mrf.mxu0
        %2716 = vmatprep.mubr.bf16.mxu0 0
        %2717 = vmatmul.mubr.bf16.gmra.mxu0 %v2610
        %v2718 = vpop.f32.mrf.mxu0
        %v2719 = vadd.f32 %v2559, %v2718
        %v2720 = vpop.f32.mrf.mxu0
        %v2721 = vpop.f32.mrf.mxu0
        %v2722 = vadd.f32 %v2561, %v2721
        %v2723 = vpop.f32.mrf.mxu0
        %2724 = vdwg.mxu0
        %v2725 = vmax.f32 %v2647, 0.0
        %v2726 = vmax.f32 %v2650, 0.0
        %v2727 = vmax.f32 %v2655, 0.0
        %v2728 = vmax.f32 %v2658, 0.0
        %v2729 = vmax.f32 %v2663, 0.0
        %v2730 = vmax.f32 %v2666, 0.0
        %v2731 = vmax.f32 %v2671, 0.0
        %v2732 = vmax.f32 %v2674, 0.0
        %v2733 = vmax.f32 %v2679, 0.0
        %v2734 = vmax.f32 %v2682, 0.0
        %v2735 = vmax.f32 %v2687, 0.0
        %v2736 = vmax.f32 %v2690, 0.0
        %v2737 = vmax.f32 %v2695, 0.0
        %v2738 = vmax.f32 %v2698, 0.0
        %v2739 = vmax.f32 %v2703, 0.0
        %v2740 = vmax.f32 %v2706, 0.0
        %v2741 = vmax.f32 %v2711, 0.0
        %v2742 = vmax.f32 %v2714, 0.0
        %v2743 = vmax.f32 %v2719, 0.0
        %v2744 = vmax.f32 %v2722, 0.0
        %v2745 = vpack.c.bf16 %v2726, %v2725
        %v2746 = vpack.c.bf16 %v2728, %v2727
        %v2747 = vpack.c.bf16 %v2730, %v2729
        %v2748 = vpack.c.bf16 %v2732, %v2731
        %v2749 = vpack.c.bf16 %v2734, %v2733
        %v2750 = vpack.c.bf16 %v2736, %v2735
        %v2751 = vpack.c.bf16 %v2738, %v2737
        %v2752 = vpack.c.bf16 %v2740, %v2739
        %v2753 = vpack.c.bf16 %v2742, %v2741
        %v2754 = vpack.c.bf16 %v2744, %v2743
        %2755 = vrot.lane.b32.xlu0 %v2161, 32
        %v2756 = vpop.permute.xlu0 %2755
        %2757 = vrot.lane.b32.xlu0 %v2164, 32
        %v2758 = vpop.permute.xlu0 %2757
        %2759 = vrot.lane.b32.xlu0 %v2169, 32
        %v2760 = vpop.permute.xlu0 %2759
        %2761 = vrot.lane.b32.xlu0 %v2172, 32
        %v2762 = vpop.permute.xlu0 %2761
        %2763 = vrot.lane.b32.xlu0 %v2177, 32
        %v2764 = vpop.permute.xlu0 %2763
        %2765 = vrot.lane.b32.xlu0 %v2180, 32
        %v2766 = vpop.permute.xlu0 %2765
        %2767 = vrot.lane.b32.xlu0 %v2185, 32
        %v2768 = vpop.permute.xlu0 %2767
        %2769 = vrot.lane.b32.xlu0 %v2188, 32
        %v2770 = vpop.permute.xlu0 %2769
        %2771 = vrot.lane.b32.xlu0 %v2193, 32
        %v2772 = vpop.permute.xlu0 %2771
        %2773 = vrot.lane.b32.xlu0 %v2196, 32
        %v2774 = vpop.permute.xlu0 %2773
        %2775 = vrot.lane.b32.xlu0 %v2201, 32
        %v2776 = vpop.permute.xlu0 %2775
        %2777 = vrot.lane.b32.xlu0 %v2204, 32
        %v2778 = vpop.permute.xlu0 %2777
        %2779 = vrot.lane.b32.xlu0 %v2209, 32
        %v2780 = vpop.permute.xlu0 %2779
        %2781 = vrot.lane.b32.xlu0 %v2212, 32
        %v2782 = vpop.permute.xlu0 %2781
        %2783 = vrot.lane.b32.xlu0 %v2217, 32
        %v2784 = vpop.permute.xlu0 %2783
        %2785 = vrot.lane.b32.xlu0 %v2220, 32
        %v2786 = vpop.permute.xlu0 %2785
        %2787 = vrot.lane.b32.xlu0 %v2225, 32
        %v2788 = vpop.permute.xlu0 %2787
        %2789 = vrot.lane.b32.xlu0 %v2228, 32
        %v2790 = vpop.permute.xlu0 %2789
        %2791 = vrot.lane.b32.xlu0 %v2233, 32
        %v2792 = vpop.permute.xlu0 %2791
        %2793 = vrot.lane.b32.xlu0 %v2236, 32
        %v2794 = vpop.permute.xlu0 %2793
        %v2816 = vsel %vm919, %v2745, 0
        %v2819 = vsel %vm919, %v2746, 0
        %v2822 = vsel %vm919, %v2747, 0
        %v2825 = vsel %vm919, %v2748, 0
        %v2828 = vsel %vm919, %v2749, 0
        %v2831 = vsel %vm919, %v2750, 0
        %v2834 = vsel %vm919, %v2751, 0
        %v2837 = vsel %vm919, %v2752, 0
        %v2840 = vsel %vm919, %v2753, 0
        %v2843 = vsel %vm919, %v2754, 0
        %2845 = vmatprep.subr.bf16.mxu0 0
        %2846 = vmatpush1.bf16.msra.mxu0 0
        %2847 = vmatprep.subr.bf16.mxu0 0
        %2848 = vmatpush1.bf16.msra.mxu0 0
        %2849 = vmatprep.subr.bf16.mxu0 0
        %2850 = vmatpush1.bf16.msra.mxu0 0
        %2851 = vmatprep.subr.bf16.mxu0 0
        %2852 = vmatpush1.bf16.msra.mxu0 0
        %2853 = vmatprep.subr.bf16.mxu0 0
        %2854 = vmatpush1.bf16.msra.mxu0 0
        %2855 = vmatprep.subr.bf16.mxu0 0
        %2856 = vmatpush1.bf16.msra.mxu0 0
        %2857 = vmatprep.subr.bf16.mxu0 0
        %2858 = vmatpush1.bf16.msra.mxu0 %v1357
        %2859 = vmatprep.subr.bf16.mxu0 0
        %2860 = vmatpush1.bf16.msra.mxu0 %v1356
        %2861 = vmatprep.subr.bf16.mxu0 0
        %2862 = vmatpush2.bf16.msra.mxu0 0
        %2863 = vmatprep.subr.bf16.mxu0 0
        %2864 = vmatpush2.bf16.msra.mxu0 0
        %2865 = vmatprep.subr.bf16.mxu0 0
        %2866 = vmatpush2.bf16.msra.mxu0 0
        %2867 = vmatprep.subr.bf16.mxu0 0
        %2868 = vmatpush2.bf16.msra.mxu0 0
        %2869 = vmatprep.subr.bf16.mxu0 0
        %2870 = vmatpush2.bf16.msra.mxu0 0
        %2871 = vmatprep.subr.bf16.mxu0 0
        %2872 = vmatpush2.bf16.msra.mxu0 0
        %2873 = vmatprep.subr.bf16.mxu0 0
        %2874 = vmatpush2.bf16.msra.mxu0 0
        %2875 = vmatprep.subr.bf16.mxu0 0
        %2876 = vmatpush2.bf16.msra.mxu0 0
        %2877 = vmatprep.mubr.bf16.mxu0 0
        %2878 = vmatmul.mubr.bf16.gmra.mxu0 %v2816
        %v2879 = vpop.f32.mrf.mxu0
        %v2880 = vadd.f32 %v2756, %v2879
        %v2881 = vpop.f32.mrf.mxu0
        %v2882 = vpop.f32.mrf.mxu0
        %v2883 = vadd.f32 %v2758, %v2882
        %v2884 = vpop.f32.mrf.mxu0
        %2885 = vmatprep.mubr.bf16.mxu0 0
        %2886 = vmatmul.mubr.bf16.gmra.mxu0 %v2819
        %v2887 = vpop.f32.mrf.mxu0
        %v2888 = vadd.f32 %v2760, %v2887
        %v2889 = vpop.f32.mrf.mxu0
        %v2890 = vpop.f32.mrf.mxu0
        %v2891 = vadd.f32 %v2762, %v2890
        %v2892 = vpop.f32.mrf.mxu0
        %2893 = vmatprep.mubr.bf16.mxu0 0
        %2894 = vmatmul.mubr.bf16.gmra.mxu0 %v2822
        %v2895 = vpop.f32.mrf.mxu0
        %v2896 = vadd.f32 %v2764, %v2895
        %v2897 = vpop.f32.mrf.mxu0
        %v2898 = vpop.f32.mrf.mxu0
        %v2899 = vadd.f32 %v2766, %v2898
        %v2900 = vpop.f32.mrf.mxu0
        %2901 = vmatprep.mubr.bf16.mxu0 0
        %2902 = vmatmul.mubr.bf16.gmra.mxu0 %v2825
        %v2903 = vpop.f32.mrf.mxu0
        %v2904 = vadd.f32 %v2768, %v2903
        %v2905 = vpop.f32.mrf.mxu0
        %v2906 = vpop.f32.mrf.mxu0
        %v2907 = vadd.f32 %v2770, %v2906
        %v2908 = vpop.f32.mrf.mxu0
        %2909 = vmatprep.mubr.bf16.mxu0 0
        %2910 = vmatmul.mubr.bf16.gmra.mxu0 %v2828
        %v2911 = vpop.f32.mrf.mxu0
        %v2912 = vadd.f32 %v2772, %v2911
        %v2913 = vpop.f32.mrf.mxu0
        %v2914 = vpop.f32.mrf.mxu0
        %v2915 = vadd.f32 %v2774, %v2914
        %v2916 = vpop.f32.mrf.mxu0
        %2917 = vmatprep.mubr.bf16.mxu0 0
        %2918 = vmatmul.mubr.bf16.gmra.mxu0 %v2831
        %v2919 = vpop.f32.mrf.mxu0
        %v2920 = vadd.f32 %v2776, %v2919
        %v2921 = vpop.f32.mrf.mxu0
        %v2922 = vpop.f32.mrf.mxu0
        %v2923 = vadd.f32 %v2778, %v2922
        %v2924 = vpop.f32.mrf.mxu0
        %2925 = vmatprep.mubr.bf16.mxu0 0
        %2926 = vmatmul.mubr.bf16.gmra.mxu0 %v2834
        %v2927 = vpop.f32.mrf.mxu0
        %v2928 = vadd.f32 %v2780, %v2927
        %v2929 = vpop.f32.mrf.mxu0
        %v2930 = vpop.f32.mrf.mxu0
        %v2931 = vadd.f32 %v2782, %v2930
        %v2932 = vpop.f32.mrf.mxu0
        %2933 = vmatprep.mubr.bf16.mxu0 0
        %2934 = vmatmul.mubr.bf16.gmra.mxu0 %v2837
        %v2935 = vpop.f32.mrf.mxu0
        %v2936 = vadd.f32 %v2784, %v2935
        %v2937 = vpop.f32.mrf.mxu0
        %v2938 = vpop.f32.mrf.mxu0
        %v2939 = vadd.f32 %v2786, %v2938
        %v2940 = vpop.f32.mrf.mxu0
        %2941 = vmatprep.mubr.bf16.mxu0 0
        %2942 = vmatmul.mubr.bf16.gmra.mxu0 %v2840
        %v2943 = vpop.f32.mrf.mxu0
        %v2944 = vadd.f32 %v2788, %v2943
        %v2945 = vpop.f32.mrf.mxu0
        %v2946 = vpop.f32.mrf.mxu0
        %v2947 = vadd.f32 %v2790, %v2946
        %v2948 = vpop.f32.mrf.mxu0
        %2949 = vmatprep.mubr.bf16.mxu0 0
        %2950 = vmatmul.mubr.bf16.gmra.mxu0 %v2843
        %v2951 = vpop.f32.mrf.mxu0
        %v2952 = vadd.f32 %v2792, %v2951
        %v2953 = vpop.f32.mrf.mxu0
        %v2954 = vpop.f32.mrf.mxu0
        %v2955 = vadd.f32 %v2794, %v2954
        %v2956 = vpop.f32.mrf.mxu0
        %2957 = vdwg.mxu0
        %v2958 = vmax.f32 %v2880, 0.0
        %v2959 = vmax.f32 %v2883, 0.0
        %v2960 = vmax.f32 %v2888, 0.0
        %v2961 = vmax.f32 %v2891, 0.0
        %v2962 = vmax.f32 %v2896, 0.0
        %v2963 = vmax.f32 %v2899, 0.0
        %v2964 = vmax.f32 %v2904, 0.0
        %v2965 = vmax.f32 %v2907, 0.0
        %v2966 = vmax.f32 %v2912, 0.0
        %v2967 = vmax.f32 %v2915, 0.0
        %v2968 = vmax.f32 %v2920, 0.0
        %v2969 = vmax.f32 %v2923, 0.0
        %v2970 = vmax.f32 %v2928, 0.0
        %v2971 = vmax.f32 %v2931, 0.0
        %v2972 = vmax.f32 %v2936, 0.0
        %v2973 = vmax.f32 %v2939, 0.0
        %v2974 = vmax.f32 %v2944, 0.0
        %v2975 = vmax.f32 %v2947, 0.0
        %v2976 = vmax.f32 %v2952, 0.0
        %v2977 = vmax.f32 %v2955, 0.0
        %2998 = vrot.lane.b32.xlu0 %v2492, 32
        %v2999 = vpop.permute.xlu0 %2998
        %3000 = vrot.lane.b32.xlu0 %v2493, 32
        %v3001 = vpop.permute.xlu0 %3000
        %3002 = vrot.lane.b32.xlu0 %v2494, 32
        %v3003 = vpop.permute.xlu0 %3002
        %3004 = vrot.lane.b32.xlu0 %v2495, 32
        %v3005 = vpop.permute.xlu0 %3004
        %3006 = vrot.lane.b32.xlu0 %v2496, 32
        %v3007 = vpop.permute.xlu0 %3006
        %3008 = vrot.lane.b32.xlu0 %v2497, 32
        %v3009 = vpop.permute.xlu0 %3008
        %3010 = vrot.lane.b32.xlu0 %v2498, 32
        %v3011 = vpop.permute.xlu0 %3010
        %3012 = vrot.lane.b32.xlu0 %v2499, 32
        %v3013 = vpop.permute.xlu0 %3012
        %3014 = vrot.lane.b32.xlu0 %v2500, 32
        %v3015 = vpop.permute.xlu0 %3014
        %3016 = vrot.lane.b32.xlu0 %v2501, 32
        %v3017 = vpop.permute.xlu0 %3016
        %3018 = vrot.lane.b32.xlu0 %v2502, 32
        %v3019 = vpop.permute.xlu0 %3018
        %3020 = vrot.lane.b32.xlu0 %v2503, 32
        %v3021 = vpop.permute.xlu0 %3020
        %3022 = vrot.lane.b32.xlu0 %v2504, 32
        %v3023 = vpop.permute.xlu0 %3022
        %3024 = vrot.lane.b32.xlu0 %v2505, 32
        %v3025 = vpop.permute.xlu0 %3024
        %3026 = vrot.lane.b32.xlu0 %v2506, 32
        %v3027 = vpop.permute.xlu0 %3026
        %3028 = vrot.lane.b32.xlu0 %v2507, 32
        %v3029 = vpop.permute.xlu0 %3028
        %3030 = vrot.lane.b32.xlu0 %v2508, 32
        %v3031 = vpop.permute.xlu0 %3030
        %3032 = vrot.lane.b32.xlu0 %v2509, 32
        %v3033 = vpop.permute.xlu0 %3032
        %3034 = vrot.lane.b32.xlu0 %v2510, 32
        %v3035 = vpop.permute.xlu0 %3034
        %3036 = vrot.lane.b32.xlu0 %v2511, 32
        %v3037 = vpop.permute.xlu0 %3036
        %3078 = vrot.lane.b32.xlu0 %v2725, 64
        %v3079 = vpop.permute.xlu0 %3078
        %3080 = vrot.lane.b32.xlu0 %v2726, 64
        %v3081 = vpop.permute.xlu0 %3080
        %3082 = vrot.lane.b32.xlu0 %v2727, 64
        %v3083 = vpop.permute.xlu0 %3082
        %3084 = vrot.lane.b32.xlu0 %v2728, 64
        %v3085 = vpop.permute.xlu0 %3084
        %3086 = vrot.lane.b32.xlu0 %v2729, 64
        %v3087 = vpop.permute.xlu0 %3086
        %3088 = vrot.lane.b32.xlu0 %v2730, 64
        %v3089 = vpop.permute.xlu0 %3088
        %3090 = vrot.lane.b32.xlu0 %v2731, 64
        %v3091 = vpop.permute.xlu0 %3090
        %3092 = vrot.lane.b32.xlu0 %v2732, 64
        %v3093 = vpop.permute.xlu0 %3092
        %3094 = vrot.lane.b32.xlu0 %v2733, 64
        %v3095 = vpop.permute.xlu0 %3094
        %3096 = vrot.lane.b32.xlu0 %v2734, 64
        %v3097 = vpop.permute.xlu0 %3096
        %3098 = vrot.lane.b32.xlu0 %v2735, 64
        %v3099 = vpop.permute.xlu0 %3098
        %3100 = vrot.lane.b32.xlu0 %v2736, 64
        %v3101 = vpop.permute.xlu0 %3100
        %3102 = vrot.lane.b32.xlu0 %v2737, 64
        %v3103 = vpop.permute.xlu0 %3102
        %3104 = vrot.lane.b32.xlu0 %v2738, 64
        %v3105 = vpop.permute.xlu0 %3104
        %3106 = vrot.lane.b32.xlu0 %v2739, 64
        %v3107 = vpop.permute.xlu0 %3106
        %3108 = vrot.lane.b32.xlu0 %v2740, 64
        %v3109 = vpop.permute.xlu0 %3108
        %3110 = vrot.lane.b32.xlu0 %v2741, 64
        %v3111 = vpop.permute.xlu0 %3110
        %3112 = vrot.lane.b32.xlu0 %v2742, 64
        %v3113 = vpop.permute.xlu0 %3112
        %3114 = vrot.lane.b32.xlu0 %v2743, 64
        %v3115 = vpop.permute.xlu0 %3114
        %3116 = vrot.lane.b32.xlu0 %v2744, 64
        %v3117 = vpop.permute.xlu0 %3116
        %3158 = vrot.lane.b32.xlu0 %v2958, 96
        %v3159 = vpop.permute.xlu0 %3158
        %3160 = vrot.lane.b32.xlu0 %v2959, 96
        %v3161 = vpop.permute.xlu0 %3160
        %3162 = vrot.lane.b32.xlu0 %v2960, 96
        %v3163 = vpop.permute.xlu0 %3162
        %3164 = vrot.lane.b32.xlu0 %v2961, 96
        %v3165 = vpop.permute.xlu0 %3164
        %3166 = vrot.lane.b32.xlu0 %v2962, 96
        %v3167 = vpop.permute.xlu0 %3166
        %3168 = vrot.lane.b32.xlu0 %v2963, 96
        %v3169 = vpop.permute.xlu0 %3168
        %3170 = vrot.lane.b32.xlu0 %v2964, 96
        %v3171 = vpop.permute.xlu0 %3170
        %3172 = vrot.lane.b32.xlu0 %v2965, 96
        %v3173 = vpop.permute.xlu0 %3172
        %3174 = vrot.lane.b32.xlu0 %v2966, 96
        %v3175 = vpop.permute.xlu0 %3174
        %3176 = vrot.lane.b32.xlu0 %v2967, 96
        %v3177 = vpop.permute.xlu0 %3176
        %3178 = vrot.lane.b32.xlu0 %v2968, 96
        %v3179 = vpop.permute.xlu0 %3178
        %3180 = vrot.lane.b32.xlu0 %v2969, 96
        %v3181 = vpop.permute.xlu0 %3180
        %3182 = vrot.lane.b32.xlu0 %v2970, 96
        %v3183 = vpop.permute.xlu0 %3182
        %3184 = vrot.lane.b32.xlu0 %v2971, 96
        %v3185 = vpop.permute.xlu0 %3184
        %3186 = vrot.lane.b32.xlu0 %v2972, 96
        %v3187 = vpop.permute.xlu0 %3186
        %3188 = vrot.lane.b32.xlu0 %v2973, 96
        %v3189 = vpop.permute.xlu0 %3188
        %3190 = vrot.lane.b32.xlu0 %v2974, 96
        %v3191 = vpop.permute.xlu0 %3190
        %3192 = vrot.lane.b32.xlu0 %v2975, 96
        %v3193 = vpop.permute.xlu0 %3192
        %3194 = vrot.lane.b32.xlu0 %v2976, 96
        %v3195 = vpop.permute.xlu0 %3194
        %3196 = vrot.lane.b32.xlu0 %v2977, 96
        %v3197 = vpop.permute.xlu0 %3196
        %v3218 = vsel %vm919, %v2239, %v2999
        %v3219 = vsel %vm919, %v2240, %v3001
        %v3220 = vsel %vm919, %v2241, %v3003
        %v3221 = vsel %vm919, %v2242, %v3005
        %v3222 = vsel %vm919, %v2243, %v3007
        %v3223 = vsel %vm919, %v2244, %v3009
        %v3224 = vsel %vm919, %v2245, %v3011
        %v3225 = vsel %vm919, %v2246, %v3013
        %v3226 = vsel %vm919, %v2247, %v3015
        %v3227 = vsel %vm919, %v2248, %v3017
        %v3228 = vsel %vm919, %v2249, %v3019
        %v3229 = vsel %vm919, %v2250, %v3021
        %v3230 = vsel %vm919, %v2251, %v3023
        %v3231 = vsel %vm919, %v2252, %v3025
        %v3232 = vsel %vm919, %v2253, %v3027
        %v3233 = vsel %vm919, %v2254, %v3029
        %v3234 = vsel %vm919, %v2255, %v3031
        %v3235 = vsel %vm919, %v2256, %v3033
        %v3236 = vsel %vm919, %v2257, %v3035
        %v3237 = vsel %vm919, %v2258, %v3037
        %v3238 = vsel %vm1843, %v3218, %v3079
        %v3239 = vsel %vm1843, %v3219, %v3081
        %v3240 = vsel %vm1843, %v3220, %v3083
        %v3241 = vsel %vm1843, %v3221, %v3085
        %v3242 = vsel %vm1843, %v3222, %v3087
        %v3243 = vsel %vm1843, %v3223, %v3089
        %v3244 = vsel %vm1843, %v3224, %v3091
        %v3245 = vsel %vm1843, %v3225, %v3093
        %v3246 = vsel %vm1843, %v3226, %v3095
        %v3247 = vsel %vm1843, %v3227, %v3097
        %v3248 = vsel %vm1843, %v3228, %v3099
        %v3249 = vsel %vm1843, %v3229, %v3101
        %v3250 = vsel %vm1843, %v3230, %v3103
        %v3251 = vsel %vm1843, %v3231, %v3105
        %v3252 = vsel %vm1843, %v3232, %v3107
        %v3253 = vsel %vm1843, %v3233, %v3109
        %v3254 = vsel %vm1843, %v3234, %v3111
        %v3255 = vsel %vm1843, %v3235, %v3113
        %v3256 = vsel %vm1843, %v3236, %v3115
        %v3257 = vsel %vm1843, %v3237, %v3117
        %v3258 = vsel %vm1864, %v3238, %v3159
        %v3259 = vsel %vm1864, %v3239, %v3161
        %v3260 = vsel %vm1864, %v3240, %v3163
        %v3261 = vsel %vm1864, %v3241, %v3165
        %v3262 = vsel %vm1864, %v3242, %v3167
        %v3263 = vsel %vm1864, %v3243, %v3169
        %v3264 = vsel %vm1864, %v3244, %v3171
        %v3265 = vsel %vm1864, %v3245, %v3173
        %v3266 = vsel %vm1864, %v3246, %v3175
        %v3267 = vsel %vm1864, %v3247, %v3177
        %v3268 = vsel %vm1864, %v3248, %v3179
        %v3269 = vsel %vm1864, %v3249, %v3181
        %v3270 = vsel %vm1864, %v3250, %v3183
        %v3271 = vsel %vm1864, %v3251, %v3185
        %v3272 = vsel %vm1864, %v3252, %v3187
        %v3273 = vsel %vm1864, %v3253, %v3189
        %v3274 = vsel %vm1864, %v3254, %v3191
        %v3275 = vsel %vm1864, %v3255, %v3193
        %v3276 = vsel %vm1864, %v3256, %v3195
        %v3277 = vsel %vm1864, %v3257, %v3197
        %3279 = vset.pattern.permute.xlu0 40
        %3280 = vperm.xlu0 %3279, %v2026
        %v3281 = vpop.permute.xlu0 %3280
        %3284 = vset.pattern.permute.xlu0 40
        %3285 = vperm.xlu0 %3284, %v2027
        %v3286 = vpop.permute.xlu0 %3285
        %3289 = vset.pattern.permute.xlu0 40
        %3290 = vperm.xlu0 %3289, %v2028
        %v3291 = vpop.permute.xlu0 %3290
        %3294 = vset.pattern.permute.xlu0 40
        %3295 = vperm.xlu0 %3294, %v2029
        %v3296 = vpop.permute.xlu0 %3295
        %3299 = vset.pattern.permute.xlu0 40
        %3300 = vperm.xlu0 %3299, %v2030
        %v3301 = vpop.permute.xlu0 %3300
        %3304 = vset.pattern.permute.xlu0 40
        %3305 = vperm.xlu0 %3304, %v2031
        %v3306 = vpop.permute.xlu0 %3305
        %3309 = vset.pattern.permute.xlu0 40
        %3310 = vperm.xlu0 %3309, %v2032
        %v3311 = vpop.permute.xlu0 %3310
        %3314 = vset.pattern.permute.xlu0 40
        %3315 = vperm.xlu0 %3314, %v2033
        %v3316 = vpop.permute.xlu0 %3315
        %3319 = vset.pattern.permute.xlu0 40
        %3320 = vperm.xlu0 %3319, %v2034
        %v3321 = vpop.permute.xlu0 %3320
        %3324 = vset.pattern.permute.xlu0 40
        %3325 = vperm.xlu0 %3324, %v2035
        %v3326 = vpop.permute.xlu0 %3325
        %3329 = vset.pattern.permute.xlu0 40
        %3330 = vperm.xlu0 %3329, %v2036
        %v3331 = vpop.permute.xlu0 %3330
        %3334 = vset.pattern.permute.xlu0 40
        %3335 = vperm.xlu0 %3334, %v2037
        %v3336 = vpop.permute.xlu0 %3335
        %3339 = vset.pattern.permute.xlu0 40
        %3340 = vperm.xlu0 %3339, %v2038
        %v3341 = vpop.permute.xlu0 %3340
        %3344 = vset.pattern.permute.xlu0 40
        %3345 = vperm.xlu0 %3344, %v2039
        %v3346 = vpop.permute.xlu0 %3345
        %3349 = vset.pattern.permute.xlu0 40
        %3350 = vperm.xlu0 %3349, %v2040
        %v3351 = vpop.permute.xlu0 %3350
        %3354 = vset.pattern.permute.xlu0 40
        %3355 = vperm.xlu0 %3354, %v2041
        %v3356 = vpop.permute.xlu0 %3355
        %3359 = vset.pattern.permute.xlu0 40
        %3360 = vperm.xlu0 %3359, %v2042
        %v3361 = vpop.permute.xlu0 %3360
        %3364 = vset.pattern.permute.xlu0 40
        %3365 = vperm.xlu0 %3364, %v2043
        %v3366 = vpop.permute.xlu0 %3365
        %3369 = vset.pattern.permute.xlu0 40
        %3370 = vperm.xlu0 %3369, %v2044
        %v3371 = vpop.permute.xlu0 %3370
        %3374 = vset.pattern.permute.xlu0 40
        %3375 = vperm.xlu0 %3374, %v2045
        %v3376 = vpop.permute.xlu0 %3375
        %v3378 = vmul.f32 %v3258, %v3281
        %v3379 = vmul.f32 %v3259, %v3286
        %v3380 = vmul.f32 %v3260, %v3291
        %v3381 = vmul.f32 %v3261, %v3296
        %v3382 = vmul.f32 %v3262, %v3301
        %v3383 = vmul.f32 %v3263, %v3306
        %v3384 = vmul.f32 %v3264, %v3311
        %v3385 = vmul.f32 %v3265, %v3316
        %v3386 = vmul.f32 %v3266, %v3321
        %v3387 = vmul.f32 %v3267, %v3326
        %v3388 = vmul.f32 %v3268, %v3331
        %v3389 = vmul.f32 %v3269, %v3336
        %v3390 = vmul.f32 %v3270, %v3341
        %v3391 = vmul.f32 %v3271, %v3346
        %v3392 = vmul.f32 %v3272, %v3351
        %v3393 = vmul.f32 %v3273, %v3356
        %v3394 = vmul.f32 %v3274, %v3361
        %v3395 = vmul.f32 %v3275, %v3366
        %v3396 = vmul.f32 %v3276, %v3371
        %v3397 = vmul.f32 %v3277, %v3376
        %v3398 = vadd.f32 %v1985, %v3378
        %v3399 = vadd.f32 %v1986, %v3379
        %v3400 = vadd.f32 %v1987, %v3380
        %v3401 = vadd.f32 %v1988, %v3381
        %v3402 = vadd.f32 %v1989, %v3382
        %v3403 = vadd.f32 %v1990, %v3383
        %v3404 = vadd.f32 %v1991, %v3384
        %v3405 = vadd.f32 %v1992, %v3385
        %v3406 = vadd.f32 %v1993, %v3386
        %v3407 = vadd.f32 %v1994, %v3387
        %v3408 = vadd.f32 %v1995, %v3388
        %v3409 = vadd.f32 %v1996, %v3389
        %v3410 = vadd.f32 %v1997, %v3390
        %v3411 = vadd.f32 %v1998, %v3391
        %v3412 = vadd.f32 %v1999, %v3392
        %v3413 = vadd.f32 %v2000, %v3393
        %v3414 = vadd.f32 %v2001, %v3394
        %v3415 = vadd.f32 %v2002, %v3395
        %v3416 = vadd.f32 %v2003, %v3396
        %v3417 = vadd.f32 %v2004, %v3397
        %s3418 = scalar_lea.vmem %s508, 160 [#allocation2]
        %v3419 = vld [vmem:[%s3418] sm:$0xf]
        %v3420 = vld [vmem:[%s3418 + $0x4] sm:$0xf]
        %v3421 = vld [vmem:[%s3418 + $0x8] sm:$0xf]
        %v3422 = vld [vmem:[%s3418 + $0xc] sm:$0xf]
        %v3423 = vld [vmem:[%s3418 + $0x10] sm:$0xf]
        %v3424 = vld [vmem:[%s3418 + $0x14] sm:$0xf]
        %v3425 = vld [vmem:[%s3418 + $0x18] sm:$0xf]
        %v3426 = vld [vmem:[%s3418 + $0x1c] sm:$0xf]
        %v3427 = vld [vmem:[%s3418 + $0x20] sm:$0xf]
        %v3428 = vld [vmem:[%s3418 + $0x24] sm:$0xf]
        %v3429 = vld [vmem:[%s3418 + $0x28] sm:$0xf]
        %v3430 = vld [vmem:[%s3418 + $0x2c] sm:$0xf]
        %v3431 = vld [vmem:[%s3418 + $0x30] sm:$0xf]
        %v3432 = vld [vmem:[%s3418 + $0x34] sm:$0xf]
        %v3433 = vld [vmem:[%s3418 + $0x38] sm:$0xf]
        %v3434 = vld [vmem:[%s3418 + $0x3c] sm:$0xf]
        %v3435 = vld [vmem:[%s3418 + $0x40] sm:$0xf]
        %v3436 = vld [vmem:[%s3418 + $0x44] sm:$0xf]
        %v3437 = vld [vmem:[%s3418 + $0x48] sm:$0xf]
        %v3438 = vld [vmem:[%s3418 + $0x4c] sm:$0xf]
        %v3439 = vunpack.c.l.bf16 %v3419
        %v3440 = vunpack.c.l.bf16 %v3420
        %v3441 = vunpack.c.l.bf16 %v3421
        %v3442 = vunpack.c.l.bf16 %v3422
        %v3443 = vunpack.c.l.bf16 %v3423
        %v3444 = vunpack.c.l.bf16 %v3424
        %v3445 = vunpack.c.l.bf16 %v3425
        %v3446 = vunpack.c.l.bf16 %v3426
        %v3447 = vunpack.c.l.bf16 %v3427
        %v3448 = vunpack.c.l.bf16 %v3428
        %v3449 = vunpack.c.l.bf16 %v3429
        %v3450 = vunpack.c.l.bf16 %v3430
        %v3451 = vunpack.c.l.bf16 %v3431
        %v3452 = vunpack.c.l.bf16 %v3432
        %v3453 = vunpack.c.l.bf16 %v3433
        %v3454 = vunpack.c.l.bf16 %v3434
        %v3455 = vunpack.c.l.bf16 %v3435
        %v3456 = vunpack.c.l.bf16 %v3436
        %v3457 = vunpack.c.l.bf16 %v3437
        %v3458 = vunpack.c.l.bf16 %v3438
        %v3479 = vunpack.c.l.b16 %v3419
        %v3480 = vunpack.c.l.b16 %v3420
        %v3481 = vunpack.c.l.b16 %v3421
        %v3482 = vunpack.c.l.b16 %v3422
        %v3483 = vunpack.c.l.b16 %v3423
        %v3484 = vunpack.c.l.b16 %v3424
        %v3485 = vunpack.c.l.b16 %v3425
        %v3486 = vunpack.c.l.b16 %v3426
        %v3487 = vunpack.c.l.b16 %v3427
        %v3488 = vunpack.c.l.b16 %v3428
        %v3489 = vunpack.c.l.b16 %v3429
        %v3490 = vunpack.c.l.b16 %v3430
        %v3491 = vunpack.c.l.b16 %v3431
        %v3492 = vunpack.c.l.b16 %v3432
        %v3493 = vunpack.c.l.b16 %v3433
        %v3494 = vunpack.c.l.b16 %v3434
        %v3495 = vunpack.c.l.b16 %v3435
        %v3496 = vunpack.c.l.b16 %v3436
        %v3497 = vunpack.c.l.b16 %v3437
        %v3498 = vunpack.c.l.b16 %v3438
        %v3499 = vpack.c.b16 %v3480, %v3479
        %v3500 = vpack.c.b16 %v3482, %v3481
        %v3501 = vpack.c.b16 %v3484, %v3483
        %v3502 = vpack.c.b16 %v3486, %v3485
        %v3503 = vpack.c.b16 %v3488, %v3487
        %v3504 = vpack.c.b16 %v3490, %v3489
        %v3505 = vpack.c.b16 %v3492, %v3491
        %v3506 = vpack.c.b16 %v3494, %v3493
        %v3507 = vpack.c.b16 %v3496, %v3495
        %v3508 = vpack.c.b16 %v3498, %v3497
        %v3510 = vsel %vm645, %v3499, 0
        %v3513 = vsel %vm645, %v3500, 0
        %v3516 = vsel %vm645, %v3501, 0
        %v3519 = vsel %vm645, %v3502, 0
        %v3522 = vsel %vm645, %v3503, 0
        %v3525 = vsel %vm645, %v3504, 0
        %v3528 = vsel %vm645, %v3505, 0
        %v3531 = vsel %vm645, %v3506, 0
        %v3534 = vsel %vm645, %v3507, 0
        %v3537 = vsel %vm645, %v3508, 0
        %3539 = vmatprep.subr.bf16.mxu0 0
        %3540 = vmatpush1.bf16.msra.mxu0 0
        %3541 = vmatprep.subr.bf16.mxu0 0
        %3542 = vmatpush1.bf16.msra.mxu0 0
        %3543 = vmatprep.subr.bf16.mxu0 0
        %3544 = vmatpush1.bf16.msra.mxu0 0
        %3545 = vmatprep.subr.bf16.mxu0 0
        %3546 = vmatpush1.bf16.msra.mxu0 0
        %3547 = vmatprep.subr.bf16.mxu0 0
        %3548 = vmatpush1.bf16.msra.mxu0 0
        %3549 = vmatprep.subr.bf16.mxu0 0
        %3550 = vmatpush1.bf16.msra.mxu0 %v678
        %3551 = vmatprep.subr.bf16.mxu0 0
        %3552 = vmatpush1.bf16.msra.mxu0 %v641
        %3553 = vmatprep.subr.bf16.mxu0 0
        %3554 = vmatpush1.bf16.msra.mxu0 %v640
        %3555 = vmatprep.subr.bf16.mxu0 0
        %3556 = vmatpush2.bf16.msra.mxu0 0
        %3557 = vmatprep.subr.bf16.mxu0 0
        %3558 = vmatpush2.bf16.msra.mxu0 0
        %3559 = vmatprep.subr.bf16.mxu0 0
        %3560 = vmatpush2.bf16.msra.mxu0 0
        %3561 = vmatprep.subr.bf16.mxu0 0
        %3562 = vmatpush2.bf16.msra.mxu0 0
        %3563 = vmatprep.subr.bf16.mxu0 0
        %3564 = vmatpush2.bf16.msra.mxu0 0
        %3565 = vmatprep.subr.bf16.mxu0 0
        %3566 = vmatpush2.bf16.msra.mxu0 0
        %3567 = vmatprep.subr.bf16.mxu0 0
        %3568 = vmatpush2.bf16.msra.mxu0 0
        %3569 = vmatprep.subr.bf16.mxu0 0
        %3570 = vmatpush2.bf16.msra.mxu0 0
        %3571 = vmatprep.mubr.bf16.mxu0 0
        %3572 = vmatmul.mubr.bf16.gmra.mxu0 %v3510
        %v3573 = vpop.f32.mrf.mxu0
        %v3574 = vadd.f32 0.0, %v3573
        %v3575 = vpop.f32.mrf.mxu0
        %v3576 = vpop.f32.mrf.mxu0
        %v3577 = vadd.f32 0.0, %v3576
        %v3578 = vpop.f32.mrf.mxu0
        %3579 = vmatprep.mubr.bf16.mxu0 0
        %3580 = vmatmul.mubr.bf16.gmra.mxu0 %v3513
        %v3581 = vpop.f32.mrf.mxu0
        %v3582 = vadd.f32 0.0, %v3581
        %v3583 = vpop.f32.mrf.mxu0
        %v3584 = vpop.f32.mrf.mxu0
        %v3585 = vadd.f32 0.0, %v3584
        %v3586 = vpop.f32.mrf.mxu0
        %3587 = vmatprep.mubr.bf16.mxu0 0
        %3588 = vmatmul.mubr.bf16.gmra.mxu0 %v3516
        %v3589 = vpop.f32.mrf.mxu0
        %v3590 = vadd.f32 0.0, %v3589
        %v3591 = vpop.f32.mrf.mxu0
        %v3592 = vpop.f32.mrf.mxu0
        %v3593 = vadd.f32 0.0, %v3592
        %v3594 = vpop.f32.mrf.mxu0
        %3595 = vmatprep.mubr.bf16.mxu0 0
        %3596 = vmatmul.mubr.bf16.gmra.mxu0 %v3519
        %v3597 = vpop.f32.mrf.mxu0
        %v3598 = vadd.f32 0.0, %v3597
        %v3599 = vpop.f32.mrf.mxu0
        %v3600 = vpop.f32.mrf.mxu0
        %v3601 = vadd.f32 0.0, %v3600
        %v3602 = vpop.f32.mrf.mxu0
        %3603 = vmatprep.mubr.bf16.mxu0 0
        %3604 = vmatmul.mubr.bf16.gmra.mxu0 %v3522
        %v3605 = vpop.f32.mrf.mxu0
        %v3606 = vadd.f32 0.0, %v3605
        %v3607 = vpop.f32.mrf.mxu0
        %v3608 = vpop.f32.mrf.mxu0
        %v3609 = vadd.f32 0.0, %v3608
        %v3610 = vpop.f32.mrf.mxu0
        %3611 = vmatprep.mubr.bf16.mxu0 0
        %3612 = vmatmul.mubr.bf16.gmra.mxu0 %v3525
        %v3613 = vpop.f32.mrf.mxu0
        %v3614 = vadd.f32 0.0, %v3613
        %v3615 = vpop.f32.mrf.mxu0
        %v3616 = vpop.f32.mrf.mxu0
        %v3617 = vadd.f32 0.0, %v3616
        %v3618 = vpop.f32.mrf.mxu0
        %3619 = vmatprep.mubr.bf16.mxu0 0
        %3620 = vmatmul.mubr.bf16.gmra.mxu0 %v3528
        %v3621 = vpop.f32.mrf.mxu0
        %v3622 = vadd.f32 0.0, %v3621
        %v3623 = vpop.f32.mrf.mxu0
        %v3624 = vpop.f32.mrf.mxu0
        %v3625 = vadd.f32 0.0, %v3624
        %v3626 = vpop.f32.mrf.mxu0
        %3627 = vmatprep.mubr.bf16.mxu0 0
        %3628 = vmatmul.mubr.bf16.gmra.mxu0 %v3531
        %v3629 = vpop.f32.mrf.mxu0
        %v3630 = vadd.f32 0.0, %v3629
        %v3631 = vpop.f32.mrf.mxu0
        %v3632 = vpop.f32.mrf.mxu0
        %v3633 = vadd.f32 0.0, %v3632
        %v3634 = vpop.f32.mrf.mxu0
        %3635 = vmatprep.mubr.bf16.mxu0 0
        %3636 = vmatmul.mubr.bf16.gmra.mxu0 %v3534
        %v3637 = vpop.f32.mrf.mxu0
        %v3638 = vadd.f32 0.0, %v3637
        %v3639 = vpop.f32.mrf.mxu0
        %v3640 = vpop.f32.mrf.mxu0
        %v3641 = vadd.f32 0.0, %v3640
        %v3642 = vpop.f32.mrf.mxu0
        %3643 = vmatprep.mubr.bf16.mxu0 0
        %3644 = vmatmul.mubr.bf16.gmra.mxu0 %v3537
        %v3645 = vpop.f32.mrf.mxu0
        %v3646 = vadd.f32 0.0, %v3645
        %v3647 = vpop.f32.mrf.mxu0
        %v3648 = vpop.f32.mrf.mxu0
        %v3649 = vadd.f32 0.0, %v3648
        %v3650 = vpop.f32.mrf.mxu0
        %3651 = vdwg.mxu0
        %v3652 = vmax.f32 %v3574, 0.0
        %v3653 = vmax.f32 %v3577, 0.0
        %v3654 = vmax.f32 %v3582, 0.0
        %v3655 = vmax.f32 %v3585, 0.0
        %v3656 = vmax.f32 %v3590, 0.0
        %v3657 = vmax.f32 %v3593, 0.0
        %v3658 = vmax.f32 %v3598, 0.0
        %v3659 = vmax.f32 %v3601, 0.0
        %v3660 = vmax.f32 %v3606, 0.0
        %v3661 = vmax.f32 %v3609, 0.0
        %v3662 = vmax.f32 %v3614, 0.0
        %v3663 = vmax.f32 %v3617, 0.0
        %v3664 = vmax.f32 %v3622, 0.0
        %v3665 = vmax.f32 %v3625, 0.0
        %v3666 = vmax.f32 %v3630, 0.0
        %v3667 = vmax.f32 %v3633, 0.0
        %v3668 = vmax.f32 %v3638, 0.0
        %v3669 = vmax.f32 %v3641, 0.0
        %v3670 = vmax.f32 %v3646, 0.0
        %v3671 = vmax.f32 %v3649, 0.0
        %v3672 = vpack.c.bf16 %v3653, %v3652
        %v3673 = vpack.c.bf16 %v3655, %v3654
        %v3674 = vpack.c.bf16 %v3657, %v3656
        %v3675 = vpack.c.bf16 %v3659, %v3658
        %v3676 = vpack.c.bf16 %v3661, %v3660
        %v3677 = vpack.c.bf16 %v3663, %v3662
        %v3678 = vpack.c.bf16 %v3665, %v3664
        %v3679 = vpack.c.bf16 %v3667, %v3666
        %v3680 = vpack.c.bf16 %v3669, %v3668
        %v3681 = vpack.c.bf16 %v3671, %v3670
        %3702 = vrot.lane.b32.xlu0 %v3574, 96
        %v3703 = vpop.permute.xlu0 %3702
        %3704 = vrot.lane.b32.xlu0 %v3577, 96
        %v3705 = vpop.permute.xlu0 %3704
        %3706 = vrot.lane.b32.xlu0 %v3582, 96
        %v3707 = vpop.permute.xlu0 %3706
        %3708 = vrot.lane.b32.xlu0 %v3585, 96
        %v3709 = vpop.permute.xlu0 %3708
        %3710 = vrot.lane.b32.xlu0 %v3590, 96
        %v3711 = vpop.permute.xlu0 %3710
        %3712 = vrot.lane.b32.xlu0 %v3593, 96
        %v3713 = vpop.permute.xlu0 %3712
        %3714 = vrot.lane.b32.xlu0 %v3598, 96
        %v3715 = vpop.permute.xlu0 %3714
        %3716 = vrot.lane.b32.xlu0 %v3601, 96
        %v3717 = vpop.permute.xlu0 %3716
        %3718 = vrot.lane.b32.xlu0 %v3606, 96
        %v3719 = vpop.permute.xlu0 %3718
        %3720 = vrot.lane.b32.xlu0 %v3609, 96
        %v3721 = vpop.permute.xlu0 %3720
        %3722 = vrot.lane.b32.xlu0 %v3614, 96
        %v3723 = vpop.permute.xlu0 %3722
        %3724 = vrot.lane.b32.xlu0 %v3617, 96
        %v3725 = vpop.permute.xlu0 %3724
        %3726 = vrot.lane.b32.xlu0 %v3622, 96
        %v3727 = vpop.permute.xlu0 %3726
        %3728 = vrot.lane.b32.xlu0 %v3625, 96
        %v3729 = vpop.permute.xlu0 %3728
        %3730 = vrot.lane.b32.xlu0 %v3630, 96
        %v3731 = vpop.permute.xlu0 %3730
        %3732 = vrot.lane.b32.xlu0 %v3633, 96
        %v3733 = vpop.permute.xlu0 %3732
        %3734 = vrot.lane.b32.xlu0 %v3638, 96
        %v3735 = vpop.permute.xlu0 %3734
        %3736 = vrot.lane.b32.xlu0 %v3641, 96
        %v3737 = vpop.permute.xlu0 %3736
        %3738 = vrot.lane.b32.xlu0 %v3646, 96
        %v3739 = vpop.permute.xlu0 %3738
        %3740 = vrot.lane.b32.xlu0 %v3649, 96
        %v3741 = vpop.permute.xlu0 %3740
        %v3763 = vsel %vm919, %v3672, 0
        %v3766 = vsel %vm919, %v3673, 0
        %v3769 = vsel %vm919, %v3674, 0
        %v3772 = vsel %vm919, %v3675, 0
        %v3775 = vsel %vm919, %v3676, 0
        %v3778 = vsel %vm919, %v3677, 0
        %v3781 = vsel %vm919, %v3678, 0
        %v3784 = vsel %vm919, %v3679, 0
        %v3787 = vsel %vm919, %v3680, 0
        %v3790 = vsel %vm919, %v3681, 0
        %3792 = vmatprep.subr.bf16.mxu0 0
        %3793 = vmatpush1.bf16.msra.mxu0 0
        %3794 = vmatprep.subr.bf16.mxu0 0
        %3795 = vmatpush1.bf16.msra.mxu0 0
        %3796 = vmatprep.subr.bf16.mxu0 0
        %3797 = vmatpush1.bf16.msra.mxu0 0
        %3798 = vmatprep.subr.bf16.mxu0 0
        %3799 = vmatpush1.bf16.msra.mxu0 0
        %3800 = vmatprep.subr.bf16.mxu0 0
        %3801 = vmatpush1.bf16.msra.mxu0 0
        %3802 = vmatprep.subr.bf16.mxu0 0
        %3803 = vmatpush1.bf16.msra.mxu0 0
        %3804 = vmatprep.subr.bf16.mxu0 0
        %3805 = vmatpush1.bf16.msra.mxu0 %v836
        %3806 = vmatprep.subr.bf16.mxu0 0
        %3807 = vmatpush1.bf16.msra.mxu0 %v835
        %3808 = vmatprep.subr.bf16.mxu0 0
        %3809 = vmatpush2.bf16.msra.mxu0 0
        %3810 = vmatprep.subr.bf16.mxu0 0
        %3811 = vmatpush2.bf16.msra.mxu0 0
        %3812 = vmatprep.subr.bf16.mxu0 0
        %3813 = vmatpush2.bf16.msra.mxu0 0
        %3814 = vmatprep.subr.bf16.mxu0 0
        %3815 = vmatpush2.bf16.msra.mxu0 0
        %3816 = vmatprep.subr.bf16.mxu0 0
        %3817 = vmatpush2.bf16.msra.mxu0 0
        %3818 = vmatprep.subr.bf16.mxu0 0
        %3819 = vmatpush2.bf16.msra.mxu0 0
        %3820 = vmatprep.subr.bf16.mxu0 0
        %3821 = vmatpush2.bf16.msra.mxu0 0
        %3822 = vmatprep.subr.bf16.mxu0 0
        %3823 = vmatpush2.bf16.msra.mxu0 0
        %3824 = vmatprep.mubr.bf16.mxu0 0
        %3825 = vmatmul.mubr.bf16.gmra.mxu0 %v3763
        %v3826 = vpop.f32.mrf.mxu0
        %v3827 = vadd.f32 %v3703, %v3826
        %v3828 = vpop.f32.mrf.mxu0
        %v3829 = vpop.f32.mrf.mxu0
        %v3830 = vadd.f32 %v3705, %v3829
        %v3831 = vpop.f32.mrf.mxu0
        %3832 = vmatprep.mubr.bf16.mxu0 0
        %3833 = vmatmul.mubr.bf16.gmra.mxu0 %v3766
        %v3834 = vpop.f32.mrf.mxu0
        %v3835 = vadd.f32 %v3707, %v3834
        %v3836 = vpop.f32.mrf.mxu0
        %v3837 = vpop.f32.mrf.mxu0
        %v3838 = vadd.f32 %v3709, %v3837
        %v3839 = vpop.f32.mrf.mxu0
        %3840 = vmatprep.mubr.bf16.mxu0 0
        %3841 = vmatmul.mubr.bf16.gmra.mxu0 %v3769
        %v3842 = vpop.f32.mrf.mxu0
        %v3843 = vadd.f32 %v3711, %v3842
        %v3844 = vpop.f32.mrf.mxu0
        %v3845 = vpop.f32.mrf.mxu0
        %v3846 = vadd.f32 %v3713, %v3845
        %v3847 = vpop.f32.mrf.mxu0
        %3848 = vmatprep.mubr.bf16.mxu0 0
        %3849 = vmatmul.mubr.bf16.gmra.mxu0 %v3772
        %v3850 = vpop.f32.mrf.mxu0
        %v3851 = vadd.f32 %v3715, %v3850
        %v3852 = vpop.f32.mrf.mxu0
        %v3853 = vpop.f32.mrf.mxu0
        %v3854 = vadd.f32 %v3717, %v3853
        %v3855 = vpop.f32.mrf.mxu0
        %3856 = vmatprep.mubr.bf16.mxu0 0
        %3857 = vmatmul.mubr.bf16.gmra.mxu0 %v3775
        %v3858 = vpop.f32.mrf.mxu0
        %v3859 = vadd.f32 %v3719, %v3858
        %v3860 = vpop.f32.mrf.mxu0
        %v3861 = vpop.f32.mrf.mxu0
        %v3862 = vadd.f32 %v3721, %v3861
        %v3863 = vpop.f32.mrf.mxu0
        %3864 = vmatprep.mubr.bf16.mxu0 0
        %3865 = vmatmul.mubr.bf16.gmra.mxu0 %v3778
        %v3866 = vpop.f32.mrf.mxu0
        %v3867 = vadd.f32 %v3723, %v3866
        %v3868 = vpop.f32.mrf.mxu0
        %v3869 = vpop.f32.mrf.mxu0
        %v3870 = vadd.f32 %v3725, %v3869
        %v3871 = vpop.f32.mrf.mxu0
        %3872 = vmatprep.mubr.bf16.mxu0 0
        %3873 = vmatmul.mubr.bf16.gmra.mxu0 %v3781
        %v3874 = vpop.f32.mrf.mxu0
        %v3875 = vadd.f32 %v3727, %v3874
        %v3876 = vpop.f32.mrf.mxu0
        %v3877 = vpop.f32.mrf.mxu0
        %v3878 = vadd.f32 %v3729, %v3877
        %v3879 = vpop.f32.mrf.mxu0
        %3880 = vmatprep.mubr.bf16.mxu0 0
        %3881 = vmatmul.mubr.bf16.gmra.mxu0 %v3784
        %v3882 = vpop.f32.mrf.mxu0
        %v3883 = vadd.f32 %v3731, %v3882
        %v3884 = vpop.f32.mrf.mxu0
        %v3885 = vpop.f32.mrf.mxu0
        %v3886 = vadd.f32 %v3733, %v3885
        %v3887 = vpop.f32.mrf.mxu0
        %3888 = vmatprep.mubr.bf16.mxu0 0
        %3889 = vmatmul.mubr.bf16.gmra.mxu0 %v3787
        %v3890 = vpop.f32.mrf.mxu0
        %v3891 = vadd.f32 %v3735, %v3890
        %v3892 = vpop.f32.mrf.mxu0
        %v3893 = vpop.f32.mrf.mxu0
        %v3894 = vadd.f32 %v3737, %v3893
        %v3895 = vpop.f32.mrf.mxu0
        %3896 = vmatprep.mubr.bf16.mxu0 0
        %3897 = vmatmul.mubr.bf16.gmra.mxu0 %v3790
        %v3898 = vpop.f32.mrf.mxu0
        %v3899 = vadd.f32 %v3739, %v3898
        %v3900 = vpop.f32.mrf.mxu0
        %v3901 = vpop.f32.mrf.mxu0
        %v3902 = vadd.f32 %v3741, %v3901
        %v3903 = vpop.f32.mrf.mxu0
        %3904 = vdwg.mxu0
        %v3905 = vmax.f32 %v3827, 0.0
        %v3906 = vmax.f32 %v3830, 0.0
        %v3907 = vmax.f32 %v3835, 0.0
        %v3908 = vmax.f32 %v3838, 0.0
        %v3909 = vmax.f32 %v3843, 0.0
        %v3910 = vmax.f32 %v3846, 0.0
        %v3911 = vmax.f32 %v3851, 0.0
        %v3912 = vmax.f32 %v3854, 0.0
        %v3913 = vmax.f32 %v3859, 0.0
        %v3914 = vmax.f32 %v3862, 0.0
        %v3915 = vmax.f32 %v3867, 0.0
        %v3916 = vmax.f32 %v3870, 0.0
        %v3917 = vmax.f32 %v3875, 0.0
        %v3918 = vmax.f32 %v3878, 0.0
        %v3919 = vmax.f32 %v3883, 0.0
        %v3920 = vmax.f32 %v3886, 0.0
        %v3921 = vmax.f32 %v3891, 0.0
        %v3922 = vmax.f32 %v3894, 0.0
        %v3923 = vmax.f32 %v3899, 0.0
        %v3924 = vmax.f32 %v3902, 0.0
        %v3925 = vpack.c.bf16 %v3906, %v3905
        %v3926 = vpack.c.bf16 %v3908, %v3907
        %v3927 = vpack.c.bf16 %v3910, %v3909
        %v3928 = vpack.c.bf16 %v3912, %v3911
        %v3929 = vpack.c.bf16 %v3914, %v3913
        %v3930 = vpack.c.bf16 %v3916, %v3915
        %v3931 = vpack.c.bf16 %v3918, %v3917
        %v3932 = vpack.c.bf16 %v3920, %v3919
        %v3933 = vpack.c.bf16 %v3922, %v3921
        %v3934 = vpack.c.bf16 %v3924, %v3923
        %3935 = vrot.lane.b32.xlu0 %v3574, 64
        %v3936 = vpop.permute.xlu0 %3935
        %3937 = vrot.lane.b32.xlu0 %v3577, 64
        %v3938 = vpop.permute.xlu0 %3937
        %3939 = vrot.lane.b32.xlu0 %v3582, 64
        %v3940 = vpop.permute.xlu0 %3939
        %3941 = vrot.lane.b32.xlu0 %v3585, 64
        %v3942 = vpop.permute.xlu0 %3941
        %3943 = vrot.lane.b32.xlu0 %v3590, 64
        %v3944 = vpop.permute.xlu0 %3943
        %3945 = vrot.lane.b32.xlu0 %v3593, 64
        %v3946 = vpop.permute.xlu0 %3945
        %3947 = vrot.lane.b32.xlu0 %v3598, 64
        %v3948 = vpop.permute.xlu0 %3947
        %3949 = vrot.lane.b32.xlu0 %v3601, 64
        %v3950 = vpop.permute.xlu0 %3949
        %3951 = vrot.lane.b32.xlu0 %v3606, 64
        %v3952 = vpop.permute.xlu0 %3951
        %3953 = vrot.lane.b32.xlu0 %v3609, 64
        %v3954 = vpop.permute.xlu0 %3953
        %3955 = vrot.lane.b32.xlu0 %v3614, 64
        %v3956 = vpop.permute.xlu0 %3955
        %3957 = vrot.lane.b32.xlu0 %v3617, 64
        %v3958 = vpop.permute.xlu0 %3957
        %3959 = vrot.lane.b32.xlu0 %v3622, 64
        %v3960 = vpop.permute.xlu0 %3959
        %3961 = vrot.lane.b32.xlu0 %v3625, 64
        %v3962 = vpop.permute.xlu0 %3961
        %3963 = vrot.lane.b32.xlu0 %v3630, 64
        %v3964 = vpop.permute.xlu0 %3963
        %3965 = vrot.lane.b32.xlu0 %v3633, 64
        %v3966 = vpop.permute.xlu0 %3965
        %3967 = vrot.lane.b32.xlu0 %v3638, 64
        %v3968 = vpop.permute.xlu0 %3967
        %3969 = vrot.lane.b32.xlu0 %v3641, 64
        %v3970 = vpop.permute.xlu0 %3969
        %3971 = vrot.lane.b32.xlu0 %v3646, 64
        %v3972 = vpop.permute.xlu0 %3971
        %3973 = vrot.lane.b32.xlu0 %v3649, 64
        %v3974 = vpop.permute.xlu0 %3973
        %v3996 = vsel %vm919, %v3925, 0
        %v3999 = vsel %vm919, %v3926, 0
        %v4002 = vsel %vm919, %v3927, 0
        %v4005 = vsel %vm919, %v3928, 0
        %v4008 = vsel %vm919, %v3929, 0
        %v4011 = vsel %vm919, %v3930, 0
        %v4014 = vsel %vm919, %v3931, 0
        %v4017 = vsel %vm919, %v3932, 0
        %v4020 = vsel %vm919, %v3933, 0
        %v4023 = vsel %vm919, %v3934, 0
        %4025 = vmatprep.subr.bf16.mxu0 0
        %4026 = vmatpush1.bf16.msra.mxu0 0
        %4027 = vmatprep.subr.bf16.mxu0 0
        %4028 = vmatpush1.bf16.msra.mxu0 0
        %4029 = vmatprep.subr.bf16.mxu0 0
        %4030 = vmatpush1.bf16.msra.mxu0 0
        %4031 = vmatprep.subr.bf16.mxu0 0
        %4032 = vmatpush1.bf16.msra.mxu0 0
        %4033 = vmatprep.subr.bf16.mxu0 0
        %4034 = vmatpush1.bf16.msra.mxu0 0
        %4035 = vmatprep.subr.bf16.mxu0 0
        %4036 = vmatpush1.bf16.msra.mxu0 0
        %4037 = vmatprep.subr.bf16.mxu0 0
        %4038 = vmatpush1.bf16.msra.mxu0 %v1107
        %4039 = vmatprep.subr.bf16.mxu0 0
        %4040 = vmatpush1.bf16.msra.mxu0 %v1106
        %4041 = vmatprep.subr.bf16.mxu0 0
        %4042 = vmatpush2.bf16.msra.mxu0 0
        %4043 = vmatprep.subr.bf16.mxu0 0
        %4044 = vmatpush2.bf16.msra.mxu0 0
        %4045 = vmatprep.subr.bf16.mxu0 0
        %4046 = vmatpush2.bf16.msra.mxu0 0
        %4047 = vmatprep.subr.bf16.mxu0 0
        %4048 = vmatpush2.bf16.msra.mxu0 0
        %4049 = vmatprep.subr.bf16.mxu0 0
        %4050 = vmatpush2.bf16.msra.mxu0 0
        %4051 = vmatprep.subr.bf16.mxu0 0
        %4052 = vmatpush2.bf16.msra.mxu0 0
        %4053 = vmatprep.subr.bf16.mxu0 0
        %4054 = vmatpush2.bf16.msra.mxu0 0
        %4055 = vmatprep.subr.bf16.mxu0 0
        %4056 = vmatpush2.bf16.msra.mxu0 0
        %4057 = vmatprep.mubr.bf16.mxu0 0
        %4058 = vmatmul.mubr.bf16.gmra.mxu0 %v3996
        %v4059 = vpop.f32.mrf.mxu0
        %v4060 = vadd.f32 %v3936, %v4059
        %v4061 = vpop.f32.mrf.mxu0
        %v4062 = vpop.f32.mrf.mxu0
        %v4063 = vadd.f32 %v3938, %v4062
        %v4064 = vpop.f32.mrf.mxu0
        %4065 = vmatprep.mubr.bf16.mxu0 0
        %4066 = vmatmul.mubr.bf16.gmra.mxu0 %v3999
        %v4067 = vpop.f32.mrf.mxu0
        %v4068 = vadd.f32 %v3940, %v4067
        %v4069 = vpop.f32.mrf.mxu0
        %v4070 = vpop.f32.mrf.mxu0
        %v4071 = vadd.f32 %v3942, %v4070
        %v4072 = vpop.f32.mrf.mxu0
        %4073 = vmatprep.mubr.bf16.mxu0 0
        %4074 = vmatmul.mubr.bf16.gmra.mxu0 %v4002
        %v4075 = vpop.f32.mrf.mxu0
        %v4076 = vadd.f32 %v3944, %v4075
        %v4077 = vpop.f32.mrf.mxu0
        %v4078 = vpop.f32.mrf.mxu0
        %v4079 = vadd.f32 %v3946, %v4078
        %v4080 = vpop.f32.mrf.mxu0
        %4081 = vmatprep.mubr.bf16.mxu0 0
        %4082 = vmatmul.mubr.bf16.gmra.mxu0 %v4005
        %v4083 = vpop.f32.mrf.mxu0
        %v4084 = vadd.f32 %v3948, %v4083
        %v4085 = vpop.f32.mrf.mxu0
        %v4086 = vpop.f32.mrf.mxu0
        %v4087 = vadd.f32 %v3950, %v4086
        %v4088 = vpop.f32.mrf.mxu0
        %4089 = vmatprep.mubr.bf16.mxu0 0
        %4090 = vmatmul.mubr.bf16.gmra.mxu0 %v4008
        %v4091 = vpop.f32.mrf.mxu0
        %v4092 = vadd.f32 %v3952, %v4091
        %v4093 = vpop.f32.mrf.mxu0
        %v4094 = vpop.f32.mrf.mxu0
        %v4095 = vadd.f32 %v3954, %v4094
        %v4096 = vpop.f32.mrf.mxu0
        %4097 = vmatprep.mubr.bf16.mxu0 0
        %4098 = vmatmul.mubr.bf16.gmra.mxu0 %v4011
        %v4099 = vpop.f32.mrf.mxu0
        %v4100 = vadd.f32 %v3956, %v4099
        %v4101 = vpop.f32.mrf.mxu0
        %v4102 = vpop.f32.mrf.mxu0
        %v4103 = vadd.f32 %v3958, %v4102
        %v4104 = vpop.f32.mrf.mxu0
        %4105 = vmatprep.mubr.bf16.mxu0 0
        %4106 = vmatmul.mubr.bf16.gmra.mxu0 %v4014
        %v4107 = vpop.f32.mrf.mxu0
        %v4108 = vadd.f32 %v3960, %v4107
        %v4109 = vpop.f32.mrf.mxu0
        %v4110 = vpop.f32.mrf.mxu0
        %v4111 = vadd.f32 %v3962, %v4110
        %v4112 = vpop.f32.mrf.mxu0
        %4113 = vmatprep.mubr.bf16.mxu0 0
        %4114 = vmatmul.mubr.bf16.gmra.mxu0 %v4017
        %v4115 = vpop.f32.mrf.mxu0
        %v4116 = vadd.f32 %v3964, %v4115
        %v4117 = vpop.f32.mrf.mxu0
        %v4118 = vpop.f32.mrf.mxu0
        %v4119 = vadd.f32 %v3966, %v4118
        %v4120 = vpop.f32.mrf.mxu0
        %4121 = vmatprep.mubr.bf16.mxu0 0
        %4122 = vmatmul.mubr.bf16.gmra.mxu0 %v4020
        %v4123 = vpop.f32.mrf.mxu0
        %v4124 = vadd.f32 %v3968, %v4123
        %v4125 = vpop.f32.mrf.mxu0
        %v4126 = vpop.f32.mrf.mxu0
        %v4127 = vadd.f32 %v3970, %v4126
        %v4128 = vpop.f32.mrf.mxu0
        %4129 = vmatprep.mubr.bf16.mxu0 0
        %4130 = vmatmul.mubr.bf16.gmra.mxu0 %v4023
        %v4131 = vpop.f32.mrf.mxu0
        %v4132 = vadd.f32 %v3972, %v4131
        %v4133 = vpop.f32.mrf.mxu0
        %v4134 = vpop.f32.mrf.mxu0
        %v4135 = vadd.f32 %v3974, %v4134
        %v4136 = vpop.f32.mrf.mxu0
        %4137 = vdwg.mxu0
        %v4138 = vmax.f32 %v4060, 0.0
        %v4139 = vmax.f32 %v4063, 0.0
        %v4140 = vmax.f32 %v4068, 0.0
        %v4141 = vmax.f32 %v4071, 0.0
        %v4142 = vmax.f32 %v4076, 0.0
        %v4143 = vmax.f32 %v4079, 0.0
        %v4144 = vmax.f32 %v4084, 0.0
        %v4145 = vmax.f32 %v4087, 0.0
        %v4146 = vmax.f32 %v4092, 0.0
        %v4147 = vmax.f32 %v4095, 0.0
        %v4148 = vmax.f32 %v4100, 0.0
        %v4149 = vmax.f32 %v4103, 0.0
        %v4150 = vmax.f32 %v4108, 0.0
        %v4151 = vmax.f32 %v4111, 0.0
        %v4152 = vmax.f32 %v4116, 0.0
        %v4153 = vmax.f32 %v4119, 0.0
        %v4154 = vmax.f32 %v4124, 0.0
        %v4155 = vmax.f32 %v4127, 0.0
        %v4156 = vmax.f32 %v4132, 0.0
        %v4157 = vmax.f32 %v4135, 0.0
        %v4158 = vpack.c.bf16 %v4139, %v4138
        %v4159 = vpack.c.bf16 %v4141, %v4140
        %v4160 = vpack.c.bf16 %v4143, %v4142
        %v4161 = vpack.c.bf16 %v4145, %v4144
        %v4162 = vpack.c.bf16 %v4147, %v4146
        %v4163 = vpack.c.bf16 %v4149, %v4148
        %v4164 = vpack.c.bf16 %v4151, %v4150
        %v4165 = vpack.c.bf16 %v4153, %v4152
        %v4166 = vpack.c.bf16 %v4155, %v4154
        %v4167 = vpack.c.bf16 %v4157, %v4156
        %4168 = vrot.lane.b32.xlu0 %v3574, 32
        %v4169 = vpop.permute.xlu0 %4168
        %4170 = vrot.lane.b32.xlu0 %v3577, 32
        %v4171 = vpop.permute.xlu0 %4170
        %4172 = vrot.lane.b32.xlu0 %v3582, 32
        %v4173 = vpop.permute.xlu0 %4172
        %4174 = vrot.lane.b32.xlu0 %v3585, 32
        %v4175 = vpop.permute.xlu0 %4174
        %4176 = vrot.lane.b32.xlu0 %v3590, 32
        %v4177 = vpop.permute.xlu0 %4176
        %4178 = vrot.lane.b32.xlu0 %v3593, 32
        %v4179 = vpop.permute.xlu0 %4178
        %4180 = vrot.lane.b32.xlu0 %v3598, 32
        %v4181 = vpop.permute.xlu0 %4180
        %4182 = vrot.lane.b32.xlu0 %v3601, 32
        %v4183 = vpop.permute.xlu0 %4182
        %4184 = vrot.lane.b32.xlu0 %v3606, 32
        %v4185 = vpop.permute.xlu0 %4184
        %4186 = vrot.lane.b32.xlu0 %v3609, 32
        %v4187 = vpop.permute.xlu0 %4186
        %4188 = vrot.lane.b32.xlu0 %v3614, 32
        %v4189 = vpop.permute.xlu0 %4188
        %4190 = vrot.lane.b32.xlu0 %v3617, 32
        %v4191 = vpop.permute.xlu0 %4190
        %4192 = vrot.lane.b32.xlu0 %v3622, 32
        %v4193 = vpop.permute.xlu0 %4192
        %4194 = vrot.lane.b32.xlu0 %v3625, 32
        %v4195 = vpop.permute.xlu0 %4194
        %4196 = vrot.lane.b32.xlu0 %v3630, 32
        %v4197 = vpop.permute.xlu0 %4196
        %4198 = vrot.lane.b32.xlu0 %v3633, 32
        %v4199 = vpop.permute.xlu0 %4198
        %4200 = vrot.lane.b32.xlu0 %v3638, 32
        %v4201 = vpop.permute.xlu0 %4200
        %4202 = vrot.lane.b32.xlu0 %v3641, 32
        %v4203 = vpop.permute.xlu0 %4202
        %4204 = vrot.lane.b32.xlu0 %v3646, 32
        %v4205 = vpop.permute.xlu0 %4204
        %4206 = vrot.lane.b32.xlu0 %v3649, 32
        %v4207 = vpop.permute.xlu0 %4206
        %v4229 = vsel %vm919, %v4158, 0
        %v4232 = vsel %vm919, %v4159, 0
        %v4235 = vsel %vm919, %v4160, 0
        %v4238 = vsel %vm919, %v4161, 0
        %v4241 = vsel %vm919, %v4162, 0
        %v4244 = vsel %vm919, %v4163, 0
        %v4247 = vsel %vm919, %v4164, 0
        %v4250 = vsel %vm919, %v4165, 0
        %v4253 = vsel %vm919, %v4166, 0
        %v4256 = vsel %vm919, %v4167, 0
        %4258 = vmatprep.subr.bf16.mxu0 0
        %4259 = vmatpush1.bf16.msra.mxu0 0
        %4260 = vmatprep.subr.bf16.mxu0 0
        %4261 = vmatpush1.bf16.msra.mxu0 0
        %4262 = vmatprep.subr.bf16.mxu0 0
        %4263 = vmatpush1.bf16.msra.mxu0 0
        %4264 = vmatprep.subr.bf16.mxu0 0
        %4265 = vmatpush1.bf16.msra.mxu0 0
        %4266 = vmatprep.subr.bf16.mxu0 0
        %4267 = vmatpush1.bf16.msra.mxu0 0
        %4268 = vmatprep.subr.bf16.mxu0 0
        %4269 = vmatpush1.bf16.msra.mxu0 0
        %4270 = vmatprep.subr.bf16.mxu0 0
        %4271 = vmatpush1.bf16.msra.mxu0 %v1357
        %4272 = vmatprep.subr.bf16.mxu0 0
        %4273 = vmatpush1.bf16.msra.mxu0 %v1356
        %4274 = vmatprep.subr.bf16.mxu0 0
        %4275 = vmatpush2.bf16.msra.mxu0 0
        %4276 = vmatprep.subr.bf16.mxu0 0
        %4277 = vmatpush2.bf16.msra.mxu0 0
        %4278 = vmatprep.subr.bf16.mxu0 0
        %4279 = vmatpush2.bf16.msra.mxu0 0
        %4280 = vmatprep.subr.bf16.mxu0 0
        %4281 = vmatpush2.bf16.msra.mxu0 0
        %4282 = vmatprep.subr.bf16.mxu0 0
        %4283 = vmatpush2.bf16.msra.mxu0 0
        %4284 = vmatprep.subr.bf16.mxu0 0
        %4285 = vmatpush2.bf16.msra.mxu0 0
        %4286 = vmatprep.subr.bf16.mxu0 0
        %4287 = vmatpush2.bf16.msra.mxu0 0
        %4288 = vmatprep.subr.bf16.mxu0 0
        %4289 = vmatpush2.bf16.msra.mxu0 0
        %4290 = vmatprep.mubr.bf16.mxu0 0
        %4291 = vmatmul.mubr.bf16.gmra.mxu0 %v4229
        %v4292 = vpop.f32.mrf.mxu0
        %v4293 = vadd.f32 %v4169, %v4292
        %v4294 = vpop.f32.mrf.mxu0
        %v4295 = vpop.f32.mrf.mxu0
        %v4296 = vadd.f32 %v4171, %v4295
        %v4297 = vpop.f32.mrf.mxu0
        %4298 = vmatprep.mubr.bf16.mxu0 0
        %4299 = vmatmul.mubr.bf16.gmra.mxu0 %v4232
        %v4300 = vpop.f32.mrf.mxu0
        %v4301 = vadd.f32 %v4173, %v4300
        %v4302 = vpop.f32.mrf.mxu0
        %v4303 = vpop.f32.mrf.mxu0
        %v4304 = vadd.f32 %v4175, %v4303
        %v4305 = vpop.f32.mrf.mxu0
        %4306 = vmatprep.mubr.bf16.mxu0 0
        %4307 = vmatmul.mubr.bf16.gmra.mxu0 %v4235
        %v4308 = vpop.f32.mrf.mxu0
        %v4309 = vadd.f32 %v4177, %v4308
        %v4310 = vpop.f32.mrf.mxu0
        %v4311 = vpop.f32.mrf.mxu0
        %v4312 = vadd.f32 %v4179, %v4311
        %v4313 = vpop.f32.mrf.mxu0
        %4314 = vmatprep.mubr.bf16.mxu0 0
        %4315 = vmatmul.mubr.bf16.gmra.mxu0 %v4238
        %v4316 = vpop.f32.mrf.mxu0
        %v4317 = vadd.f32 %v4181, %v4316
        %v4318 = vpop.f32.mrf.mxu0
        %v4319 = vpop.f32.mrf.mxu0
        %v4320 = vadd.f32 %v4183, %v4319
        %v4321 = vpop.f32.mrf.mxu0
        %4322 = vmatprep.mubr.bf16.mxu0 0
        %4323 = vmatmul.mubr.bf16.gmra.mxu0 %v4241
        %v4324 = vpop.f32.mrf.mxu0
        %v4325 = vadd.f32 %v4185, %v4324
        %v4326 = vpop.f32.mrf.mxu0
        %v4327 = vpop.f32.mrf.mxu0
        %v4328 = vadd.f32 %v4187, %v4327
        %v4329 = vpop.f32.mrf.mxu0
        %4330 = vmatprep.mubr.bf16.mxu0 0
        %4331 = vmatmul.mubr.bf16.gmra.mxu0 %v4244
        %v4332 = vpop.f32.mrf.mxu0
        %v4333 = vadd.f32 %v4189, %v4332
        %v4334 = vpop.f32.mrf.mxu0
        %v4335 = vpop.f32.mrf.mxu0
        %v4336 = vadd.f32 %v4191, %v4335
        %v4337 = vpop.f32.mrf.mxu0
        %4338 = vmatprep.mubr.bf16.mxu0 0
        %4339 = vmatmul.mubr.bf16.gmra.mxu0 %v4247
        %v4340 = vpop.f32.mrf.mxu0
        %v4341 = vadd.f32 %v4193, %v4340
        %v4342 = vpop.f32.mrf.mxu0
        %v4343 = vpop.f32.mrf.mxu0
        %v4344 = vadd.f32 %v4195, %v4343
        %v4345 = vpop.f32.mrf.mxu0
        %4346 = vmatprep.mubr.bf16.mxu0 0
        %4347 = vmatmul.mubr.bf16.gmra.mxu0 %v4250
        %v4348 = vpop.f32.mrf.mxu0
        %v4349 = vadd.f32 %v4197, %v4348
        %v4350 = vpop.f32.mrf.mxu0
        %v4351 = vpop.f32.mrf.mxu0
        %v4352 = vadd.f32 %v4199, %v4351
        %v4353 = vpop.f32.mrf.mxu0
        %4354 = vmatprep.mubr.bf16.mxu0 0
        %4355 = vmatmul.mubr.bf16.gmra.mxu0 %v4253
        %v4356 = vpop.f32.mrf.mxu0
        %v4357 = vadd.f32 %v4201, %v4356
        %v4358 = vpop.f32.mrf.mxu0
        %v4359 = vpop.f32.mrf.mxu0
        %v4360 = vadd.f32 %v4203, %v4359
        %v4361 = vpop.f32.mrf.mxu0
        %4362 = vmatprep.mubr.bf16.mxu0 0
        %4363 = vmatmul.mubr.bf16.gmra.mxu0 %v4256
        %v4364 = vpop.f32.mrf.mxu0
        %v4365 = vadd.f32 %v4205, %v4364
        %v4366 = vpop.f32.mrf.mxu0
        %v4367 = vpop.f32.mrf.mxu0
        %v4368 = vadd.f32 %v4207, %v4367
        %v4369 = vpop.f32.mrf.mxu0
        %4370 = vdwg.mxu0
        %v4371 = vmax.f32 %v4293, 0.0
        %v4372 = vmax.f32 %v4296, 0.0
        %v4373 = vmax.f32 %v4301, 0.0
        %v4374 = vmax.f32 %v4304, 0.0
        %v4375 = vmax.f32 %v4309, 0.0
        %v4376 = vmax.f32 %v4312, 0.0
        %v4377 = vmax.f32 %v4317, 0.0
        %v4378 = vmax.f32 %v4320, 0.0
        %v4379 = vmax.f32 %v4325, 0.0
        %v4380 = vmax.f32 %v4328, 0.0
        %v4381 = vmax.f32 %v4333, 0.0
        %v4382 = vmax.f32 %v4336, 0.0
        %v4383 = vmax.f32 %v4341, 0.0
        %v4384 = vmax.f32 %v4344, 0.0
        %v4385 = vmax.f32 %v4349, 0.0
        %v4386 = vmax.f32 %v4352, 0.0
        %v4387 = vmax.f32 %v4357, 0.0
        %v4388 = vmax.f32 %v4360, 0.0
        %v4389 = vmax.f32 %v4365, 0.0
        %v4390 = vmax.f32 %v4368, 0.0
        %4411 = vrot.lane.b32.xlu0 %v3905, 32
        %v4412 = vpop.permute.xlu0 %4411
        %4413 = vrot.lane.b32.xlu0 %v3906, 32
        %v4414 = vpop.permute.xlu0 %4413
        %4415 = vrot.lane.b32.xlu0 %v3907, 32
        %v4416 = vpop.permute.xlu0 %4415
        %4417 = vrot.lane.b32.xlu0 %v3908, 32
        %v4418 = vpop.permute.xlu0 %4417
        %4419 = vrot.lane.b32.xlu0 %v3909, 32
        %v4420 = vpop.permute.xlu0 %4419
        %4421 = vrot.lane.b32.xlu0 %v3910, 32
        %v4422 = vpop.permute.xlu0 %4421
        %4423 = vrot.lane.b32.xlu0 %v3911, 32
        %v4424 = vpop.permute.xlu0 %4423
        %4425 = vrot.lane.b32.xlu0 %v3912, 32
        %v4426 = vpop.permute.xlu0 %4425
        %4427 = vrot.lane.b32.xlu0 %v3913, 32
        %v4428 = vpop.permute.xlu0 %4427
        %4429 = vrot.lane.b32.xlu0 %v3914, 32
        %v4430 = vpop.permute.xlu0 %4429
        %4431 = vrot.lane.b32.xlu0 %v3915, 32
        %v4432 = vpop.permute.xlu0 %4431
        %4433 = vrot.lane.b32.xlu0 %v3916, 32
        %v4434 = vpop.permute.xlu0 %4433
        %4435 = vrot.lane.b32.xlu0 %v3917, 32
        %v4436 = vpop.permute.xlu0 %4435
        %4437 = vrot.lane.b32.xlu0 %v3918, 32
        %v4438 = vpop.permute.xlu0 %4437
        %4439 = vrot.lane.b32.xlu0 %v3919, 32
        %v4440 = vpop.permute.xlu0 %4439
        %4441 = vrot.lane.b32.xlu0 %v3920, 32
        %v4442 = vpop.permute.xlu0 %4441
        %4443 = vrot.lane.b32.xlu0 %v3921, 32
        %v4444 = vpop.permute.xlu0 %4443
        %4445 = vrot.lane.b32.xlu0 %v3922, 32
        %v4446 = vpop.permute.xlu0 %4445
        %4447 = vrot.lane.b32.xlu0 %v3923, 32
        %v4448 = vpop.permute.xlu0 %4447
        %4449 = vrot.lane.b32.xlu0 %v3924, 32
        %v4450 = vpop.permute.xlu0 %4449
        %4491 = vrot.lane.b32.xlu0 %v4138, 64
        %v4492 = vpop.permute.xlu0 %4491
        %4493 = vrot.lane.b32.xlu0 %v4139, 64
        %v4494 = vpop.permute.xlu0 %4493
        %4495 = vrot.lane.b32.xlu0 %v4140, 64
        %v4496 = vpop.permute.xlu0 %4495
        %4497 = vrot.lane.b32.xlu0 %v4141, 64
        %v4498 = vpop.permute.xlu0 %4497
        %4499 = vrot.lane.b32.xlu0 %v4142, 64
        %v4500 = vpop.permute.xlu0 %4499
        %4501 = vrot.lane.b32.xlu0 %v4143, 64
        %v4502 = vpop.permute.xlu0 %4501
        %4503 = vrot.lane.b32.xlu0 %v4144, 64
        %v4504 = vpop.permute.xlu0 %4503
        %4505 = vrot.lane.b32.xlu0 %v4145, 64
        %v4506 = vpop.permute.xlu0 %4505
        %4507 = vrot.lane.b32.xlu0 %v4146, 64
        %v4508 = vpop.permute.xlu0 %4507
        %4509 = vrot.lane.b32.xlu0 %v4147, 64
        %v4510 = vpop.permute.xlu0 %4509
        %4511 = vrot.lane.b32.xlu0 %v4148, 64
        %v4512 = vpop.permute.xlu0 %4511
        %4513 = vrot.lane.b32.xlu0 %v4149, 64
        %v4514 = vpop.permute.xlu0 %4513
        %4515 = vrot.lane.b32.xlu0 %v4150, 64
        %v4516 = vpop.permute.xlu0 %4515
        %4517 = vrot.lane.b32.xlu0 %v4151, 64
        %v4518 = vpop.permute.xlu0 %4517
        %4519 = vrot.lane.b32.xlu0 %v4152, 64
        %v4520 = vpop.permute.xlu0 %4519
        %4521 = vrot.lane.b32.xlu0 %v4153, 64
        %v4522 = vpop.permute.xlu0 %4521
        %4523 = vrot.lane.b32.xlu0 %v4154, 64
        %v4524 = vpop.permute.xlu0 %4523
        %4525 = vrot.lane.b32.xlu0 %v4155, 64
        %v4526 = vpop.permute.xlu0 %4525
        %4527 = vrot.lane.b32.xlu0 %v4156, 64
        %v4528 = vpop.permute.xlu0 %4527
        %4529 = vrot.lane.b32.xlu0 %v4157, 64
        %v4530 = vpop.permute.xlu0 %4529
        %4571 = vrot.lane.b32.xlu0 %v4371, 96
        %v4572 = vpop.permute.xlu0 %4571
        %4573 = vrot.lane.b32.xlu0 %v4372, 96
        %v4574 = vpop.permute.xlu0 %4573
        %4575 = vrot.lane.b32.xlu0 %v4373, 96
        %v4576 = vpop.permute.xlu0 %4575
        %4577 = vrot.lane.b32.xlu0 %v4374, 96
        %v4578 = vpop.permute.xlu0 %4577
        %4579 = vrot.lane.b32.xlu0 %v4375, 96
        %v4580 = vpop.permute.xlu0 %4579
        %4581 = vrot.lane.b32.xlu0 %v4376, 96
        %v4582 = vpop.permute.xlu0 %4581
        %4583 = vrot.lane.b32.xlu0 %v4377, 96
        %v4584 = vpop.permute.xlu0 %4583
        %4585 = vrot.lane.b32.xlu0 %v4378, 96
        %v4586 = vpop.permute.xlu0 %4585
        %4587 = vrot.lane.b32.xlu0 %v4379, 96
        %v4588 = vpop.permute.xlu0 %4587
        %4589 = vrot.lane.b32.xlu0 %v4380, 96
        %v4590 = vpop.permute.xlu0 %4589
        %4591 = vrot.lane.b32.xlu0 %v4381, 96
        %v4592 = vpop.permute.xlu0 %4591
        %4593 = vrot.lane.b32.xlu0 %v4382, 96
        %v4594 = vpop.permute.xlu0 %4593
        %4595 = vrot.lane.b32.xlu0 %v4383, 96
        %v4596 = vpop.permute.xlu0 %4595
        %4597 = vrot.lane.b32.xlu0 %v4384, 96
        %v4598 = vpop.permute.xlu0 %4597
        %4599 = vrot.lane.b32.xlu0 %v4385, 96
        %v4600 = vpop.permute.xlu0 %4599
        %4601 = vrot.lane.b32.xlu0 %v4386, 96
        %v4602 = vpop.permute.xlu0 %4601
        %4603 = vrot.lane.b32.xlu0 %v4387, 96
        %v4604 = vpop.permute.xlu0 %4603
        %4605 = vrot.lane.b32.xlu0 %v4388, 96
        %v4606 = vpop.permute.xlu0 %4605
        %4607 = vrot.lane.b32.xlu0 %v4389, 96
        %v4608 = vpop.permute.xlu0 %4607
        %4609 = vrot.lane.b32.xlu0 %v4390, 96
        %v4610 = vpop.permute.xlu0 %4609
        %v4631 = vsel %vm919, %v3652, %v4412
        %v4632 = vsel %vm919, %v3653, %v4414
        %v4633 = vsel %vm919, %v3654, %v4416
        %v4634 = vsel %vm919, %v3655, %v4418
        %v4635 = vsel %vm919, %v3656, %v4420
        %v4636 = vsel %vm919, %v3657, %v4422
        %v4637 = vsel %vm919, %v3658, %v4424
        %v4638 = vsel %vm919, %v3659, %v4426
        %v4639 = vsel %vm919, %v3660, %v4428
        %v4640 = vsel %vm919, %v3661, %v4430
        %v4641 = vsel %vm919, %v3662, %v4432
        %v4642 = vsel %vm919, %v3663, %v4434
        %v4643 = vsel %vm919, %v3664, %v4436
        %v4644 = vsel %vm919, %v3665, %v4438
        %v4645 = vsel %vm919, %v3666, %v4440
        %v4646 = vsel %vm919, %v3667, %v4442
        %v4647 = vsel %vm919, %v3668, %v4444
        %v4648 = vsel %vm919, %v3669, %v4446
        %v4649 = vsel %vm919, %v3670, %v4448
        %v4650 = vsel %vm919, %v3671, %v4450
        %v4651 = vsel %vm1843, %v4631, %v4492
        %v4652 = vsel %vm1843, %v4632, %v4494
        %v4653 = vsel %vm1843, %v4633, %v4496
        %v4654 = vsel %vm1843, %v4634, %v4498
        %v4655 = vsel %vm1843, %v4635, %v4500
        %v4656 = vsel %vm1843, %v4636, %v4502
        %v4657 = vsel %vm1843, %v4637, %v4504
        %v4658 = vsel %vm1843, %v4638, %v4506
        %v4659 = vsel %vm1843, %v4639, %v4508
        %v4660 = vsel %vm1843, %v4640, %v4510
        %v4661 = vsel %vm1843, %v4641, %v4512
        %v4662 = vsel %vm1843, %v4642, %v4514
        %v4663 = vsel %vm1843, %v4643, %v4516
        %v4664 = vsel %vm1843, %v4644, %v4518
        %v4665 = vsel %vm1843, %v4645, %v4520
        %v4666 = vsel %vm1843, %v4646, %v4522
        %v4667 = vsel %vm1843, %v4647, %v4524
        %v4668 = vsel %vm1843, %v4648, %v4526
        %v4669 = vsel %vm1843, %v4649, %v4528
        %v4670 = vsel %vm1843, %v4650, %v4530
        %v4671 = vsel %vm1864, %v4651, %v4572
        %v4672 = vsel %vm1864, %v4652, %v4574
        %v4673 = vsel %vm1864, %v4653, %v4576
        %v4674 = vsel %vm1864, %v4654, %v4578
        %v4675 = vsel %vm1864, %v4655, %v4580
        %v4676 = vsel %vm1864, %v4656, %v4582
        %v4677 = vsel %vm1864, %v4657, %v4584
        %v4678 = vsel %vm1864, %v4658, %v4586
        %v4679 = vsel %vm1864, %v4659, %v4588
        %v4680 = vsel %vm1864, %v4660, %v4590
        %v4681 = vsel %vm1864, %v4661, %v4592
        %v4682 = vsel %vm1864, %v4662, %v4594
        %v4683 = vsel %vm1864, %v4663, %v4596
        %v4684 = vsel %vm1864, %v4664, %v4598
        %v4685 = vsel %vm1864, %v4665, %v4600
        %v4686 = vsel %vm1864, %v4666, %v4602
        %v4687 = vsel %vm1864, %v4667, %v4604
        %v4688 = vsel %vm1864, %v4668, %v4606
        %v4689 = vsel %vm1864, %v4669, %v4608
        %v4690 = vsel %vm1864, %v4670, %v4610
        %4692 = vset.pattern.permute.xlu0 40
        %4693 = vperm.xlu0 %4692, %v3439
        %v4694 = vpop.permute.xlu0 %4693
        %4697 = vset.pattern.permute.xlu0 40
        %4698 = vperm.xlu0 %4697, %v3440
        %v4699 = vpop.permute.xlu0 %4698
        %4702 = vset.pattern.permute.xlu0 40
        %4703 = vperm.xlu0 %4702, %v3441
        %v4704 = vpop.permute.xlu0 %4703
        %4707 = vset.pattern.permute.xlu0 40
        %4708 = vperm.xlu0 %4707, %v3442
        %v4709 = vpop.permute.xlu0 %4708
        %4712 = vset.pattern.permute.xlu0 40
        %4713 = vperm.xlu0 %4712, %v3443
        %v4714 = vpop.permute.xlu0 %4713
        %4717 = vset.pattern.permute.xlu0 40
        %4718 = vperm.xlu0 %4717, %v3444
        %v4719 = vpop.permute.xlu0 %4718
        %4722 = vset.pattern.permute.xlu0 40
        %4723 = vperm.xlu0 %4722, %v3445
        %v4724 = vpop.permute.xlu0 %4723
        %4727 = vset.pattern.permute.xlu0 40
        %4728 = vperm.xlu0 %4727, %v3446
        %v4729 = vpop.permute.xlu0 %4728
        %4732 = vset.pattern.permute.xlu0 40
        %4733 = vperm.xlu0 %4732, %v3447
        %v4734 = vpop.permute.xlu0 %4733
        %4737 = vset.pattern.permute.xlu0 40
        %4738 = vperm.xlu0 %4737, %v3448
        %v4739 = vpop.permute.xlu0 %4738
        %4742 = vset.pattern.permute.xlu0 40
        %4743 = vperm.xlu0 %4742, %v3449
        %v4744 = vpop.permute.xlu0 %4743
        %4747 = vset.pattern.permute.xlu0 40
        %4748 = vperm.xlu0 %4747, %v3450
        %v4749 = vpop.permute.xlu0 %4748
        %4752 = vset.pattern.permute.xlu0 40
        %4753 = vperm.xlu0 %4752, %v3451
        %v4754 = vpop.permute.xlu0 %4753
        %4757 = vset.pattern.permute.xlu0 40
        %4758 = vperm.xlu0 %4757, %v3452
        %v4759 = vpop.permute.xlu0 %4758
        %4762 = vset.pattern.permute.xlu0 40
        %4763 = vperm.xlu0 %4762, %v3453
        %v4764 = vpop.permute.xlu0 %4763
        %4767 = vset.pattern.permute.xlu0 40
        %4768 = vperm.xlu0 %4767, %v3454
        %v4769 = vpop.permute.xlu0 %4768
        %4772 = vset.pattern.permute.xlu0 40
        %4773 = vperm.xlu0 %4772, %v3455
        %v4774 = vpop.permute.xlu0 %4773
        %4777 = vset.pattern.permute.xlu0 40
        %4778 = vperm.xlu0 %4777, %v3456
        %v4779 = vpop.permute.xlu0 %4778
        %4782 = vset.pattern.permute.xlu0 40
        %4783 = vperm.xlu0 %4782, %v3457
        %v4784 = vpop.permute.xlu0 %4783
        %4787 = vset.pattern.permute.xlu0 40
        %4788 = vperm.xlu0 %4787, %v3458
        %v4789 = vpop.permute.xlu0 %4788
        %v4791 = vmul.f32 %v4671, %v4694
        %v4792 = vmul.f32 %v4672, %v4699
        %v4793 = vmul.f32 %v4673, %v4704
        %v4794 = vmul.f32 %v4674, %v4709
        %v4795 = vmul.f32 %v4675, %v4714
        %v4796 = vmul.f32 %v4676, %v4719
        %v4797 = vmul.f32 %v4677, %v4724
        %v4798 = vmul.f32 %v4678, %v4729
        %v4799 = vmul.f32 %v4679, %v4734
        %v4800 = vmul.f32 %v4680, %v4739
        %v4801 = vmul.f32 %v4681, %v4744
        %v4802 = vmul.f32 %v4682, %v4749
        %v4803 = vmul.f32 %v4683, %v4754
        %v4804 = vmul.f32 %v4684, %v4759
        %v4805 = vmul.f32 %v4685, %v4764
        %v4806 = vmul.f32 %v4686, %v4769
        %v4807 = vmul.f32 %v4687, %v4774
        %v4808 = vmul.f32 %v4688, %v4779
        %v4809 = vmul.f32 %v4689, %v4784
        %v4810 = vmul.f32 %v4690, %v4789
        %v4811 = vadd.f32 %v3398, %v4791
        %v4812 = vadd.f32 %v3399, %v4792
        %v4813 = vadd.f32 %v3400, %v4793
        %v4814 = vadd.f32 %v3401, %v4794
        %v4815 = vadd.f32 %v3402, %v4795
        %v4816 = vadd.f32 %v3403, %v4796
        %v4817 = vadd.f32 %v3404, %v4797
        %v4818 = vadd.f32 %v3405, %v4798
        %v4819 = vadd.f32 %v3406, %v4799
        %v4820 = vadd.f32 %v3407, %v4800
        %v4821 = vadd.f32 %v3408, %v4801
        %v4822 = vadd.f32 %v3409, %v4802
        %v4823 = vadd.f32 %v3410, %v4803
        %v4824 = vadd.f32 %v3411, %v4804
        %v4825 = vadd.f32 %v3412, %v4805
        %v4826 = vadd.f32 %v3413, %v4806
        %v4827 = vadd.f32 %v3414, %v4807
        %v4828 = vadd.f32 %v3415, %v4808
        %v4829 = vadd.f32 %v3416, %v4809
        %v4830 = vadd.f32 %v3417, %v4810
        %s4831 = scalar_lea.vmem %s508, 240 [#allocation2]
        %v4832 = vld [vmem:[%s4831] sm:$0xf]
        %v4833 = vld [vmem:[%s4831 + $0x4] sm:$0xf]
        %v4834 = vld [vmem:[%s4831 + $0x8] sm:$0xf]
        %v4835 = vld [vmem:[%s4831 + $0xc] sm:$0xf]
        %v4836 = vld [vmem:[%s4831 + $0x10] sm:$0xf]
        %v4837 = vld [vmem:[%s4831 + $0x14] sm:$0xf]
        %v4838 = vld [vmem:[%s4831 + $0x18] sm:$0xf]
        %v4839 = vld [vmem:[%s4831 + $0x1c] sm:$0xf]
        %v4840 = vld [vmem:[%s4831 + $0x20] sm:$0xf]
        %v4841 = vld [vmem:[%s4831 + $0x24] sm:$0xf]
        %v4842 = vld [vmem:[%s4831 + $0x28] sm:$0xf]
        %v4843 = vld [vmem:[%s4831 + $0x2c] sm:$0xf]
        %v4844 = vld [vmem:[%s4831 + $0x30] sm:$0xf]
        %v4845 = vld [vmem:[%s4831 + $0x34] sm:$0xf]
        %v4846 = vld [vmem:[%s4831 + $0x38] sm:$0xf]
        %v4847 = vld [vmem:[%s4831 + $0x3c] sm:$0xf]
        %v4848 = vld [vmem:[%s4831 + $0x40] sm:$0xf]
        %v4849 = vld [vmem:[%s4831 + $0x44] sm:$0xf]
        %v4850 = vld [vmem:[%s4831 + $0x48] sm:$0xf]
        %v4851 = vld [vmem:[%s4831 + $0x4c] sm:$0xf]
        %v4852 = vunpack.c.l.bf16 %v4832
        %v4853 = vunpack.c.l.bf16 %v4833
        %v4854 = vunpack.c.l.bf16 %v4834
        %v4855 = vunpack.c.l.bf16 %v4835
        %v4856 = vunpack.c.l.bf16 %v4836
        %v4857 = vunpack.c.l.bf16 %v4837
        %v4858 = vunpack.c.l.bf16 %v4838
        %v4859 = vunpack.c.l.bf16 %v4839
        %v4860 = vunpack.c.l.bf16 %v4840
        %v4861 = vunpack.c.l.bf16 %v4841
        %v4862 = vunpack.c.l.bf16 %v4842
        %v4863 = vunpack.c.l.bf16 %v4843
        %v4864 = vunpack.c.l.bf16 %v4844
        %v4865 = vunpack.c.l.bf16 %v4845
        %v4866 = vunpack.c.l.bf16 %v4846
        %v4867 = vunpack.c.l.bf16 %v4847
        %v4868 = vunpack.c.l.bf16 %v4848
        %v4869 = vunpack.c.l.bf16 %v4849
        %v4870 = vunpack.c.l.bf16 %v4850
        %v4871 = vunpack.c.l.bf16 %v4851
        %v4892 = vunpack.c.l.b16 %v4832
        %v4893 = vunpack.c.l.b16 %v4833
        %v4894 = vunpack.c.l.b16 %v4834
        %v4895 = vunpack.c.l.b16 %v4835
        %v4896 = vunpack.c.l.b16 %v4836
        %v4897 = vunpack.c.l.b16 %v4837
        %v4898 = vunpack.c.l.b16 %v4838
        %v4899 = vunpack.c.l.b16 %v4839
        %v4900 = vunpack.c.l.b16 %v4840
        %v4901 = vunpack.c.l.b16 %v4841
        %v4902 = vunpack.c.l.b16 %v4842
        %v4903 = vunpack.c.l.b16 %v4843
        %v4904 = vunpack.c.l.b16 %v4844
        %v4905 = vunpack.c.l.b16 %v4845
        %v4906 = vunpack.c.l.b16 %v4846
        %v4907 = vunpack.c.l.b16 %v4847
        %v4908 = vunpack.c.l.b16 %v4848
        %v4909 = vunpack.c.l.b16 %v4849
        %v4910 = vunpack.c.l.b16 %v4850
        %v4911 = vunpack.c.l.b16 %v4851
        %v4912 = vpack.c.b16 %v4893, %v4892
        %v4913 = vpack.c.b16 %v4895, %v4894
        %v4914 = vpack.c.b16 %v4897, %v4896
        %v4915 = vpack.c.b16 %v4899, %v4898
        %v4916 = vpack.c.b16 %v4901, %v4900
        %v4917 = vpack.c.b16 %v4903, %v4902
        %v4918 = vpack.c.b16 %v4905, %v4904
        %v4919 = vpack.c.b16 %v4907, %v4906
        %v4920 = vpack.c.b16 %v4909, %v4908
        %v4921 = vpack.c.b16 %v4911, %v4910
        %v4923 = vsel %vm645, %v4912, 0
        %v4926 = vsel %vm645, %v4913, 0
        %v4929 = vsel %vm645, %v4914, 0
        %v4932 = vsel %vm645, %v4915, 0
        %v4935 = vsel %vm645, %v4916, 0
        %v4938 = vsel %vm645, %v4917, 0
        %v4941 = vsel %vm645, %v4918, 0
        %v4944 = vsel %vm645, %v4919, 0
        %v4947 = vsel %vm645, %v4920, 0
        %v4950 = vsel %vm645, %v4921, 0
        %4952 = vmatprep.subr.bf16.mxu0 0
        %4953 = vmatpush1.bf16.msra.mxu0 0
        %4954 = vmatprep.subr.bf16.mxu0 0
        %4955 = vmatpush1.bf16.msra.mxu0 0
        %4956 = vmatprep.subr.bf16.mxu0 0
        %4957 = vmatpush1.bf16.msra.mxu0 0
        %4958 = vmatprep.subr.bf16.mxu0 0
        %4959 = vmatpush1.bf16.msra.mxu0 0
        %4960 = vmatprep.subr.bf16.mxu0 0
        %4961 = vmatpush1.bf16.msra.mxu0 0
        %4962 = vmatprep.subr.bf16.mxu0 0
        %4963 = vmatpush1.bf16.msra.mxu0 %v678
        %4964 = vmatprep.subr.bf16.mxu0 0
        %4965 = vmatpush1.bf16.msra.mxu0 %v641
        %4966 = vmatprep.subr.bf16.mxu0 0
        %4967 = vmatpush1.bf16.msra.mxu0 %v640
        %4968 = vmatprep.subr.bf16.mxu0 0
        %4969 = vmatpush2.bf16.msra.mxu0 0
        %4970 = vmatprep.subr.bf16.mxu0 0
        %4971 = vmatpush2.bf16.msra.mxu0 0
        %4972 = vmatprep.subr.bf16.mxu0 0
        %4973 = vmatpush2.bf16.msra.mxu0 0
        %4974 = vmatprep.subr.bf16.mxu0 0
        %4975 = vmatpush2.bf16.msra.mxu0 0
        %4976 = vmatprep.subr.bf16.mxu0 0
        %4977 = vmatpush2.bf16.msra.mxu0 0
        %4978 = vmatprep.subr.bf16.mxu0 0
        %4979 = vmatpush2.bf16.msra.mxu0 0
        %4980 = vmatprep.subr.bf16.mxu0 0
        %4981 = vmatpush2.bf16.msra.mxu0 0
        %4982 = vmatprep.subr.bf16.mxu0 0
        %4983 = vmatpush2.bf16.msra.mxu0 0
        %4984 = vmatprep.mubr.bf16.mxu0 0
        %4985 = vmatmul.mubr.bf16.gmra.mxu0 %v4923
        %v4986 = vpop.f32.mrf.mxu0
        %v4987 = vadd.f32 0.0, %v4986
        %v4988 = vpop.f32.mrf.mxu0
        %v4989 = vpop.f32.mrf.mxu0
        %v4990 = vadd.f32 0.0, %v4989
        %v4991 = vpop.f32.mrf.mxu0
        %4992 = vmatprep.mubr.bf16.mxu0 0
        %4993 = vmatmul.mubr.bf16.gmra.mxu0 %v4926
        %v4994 = vpop.f32.mrf.mxu0
        %v4995 = vadd.f32 0.0, %v4994
        %v4996 = vpop.f32.mrf.mxu0
        %v4997 = vpop.f32.mrf.mxu0
        %v4998 = vadd.f32 0.0, %v4997
        %v4999 = vpop.f32.mrf.mxu0
        %5000 = vmatprep.mubr.bf16.mxu0 0
        %5001 = vmatmul.mubr.bf16.gmra.mxu0 %v4929
        %v5002 = vpop.f32.mrf.mxu0
        %v5003 = vadd.f32 0.0, %v5002
        %v5004 = vpop.f32.mrf.mxu0
        %v5005 = vpop.f32.mrf.mxu0
        %v5006 = vadd.f32 0.0, %v5005
        %v5007 = vpop.f32.mrf.mxu0
        %5008 = vmatprep.mubr.bf16.mxu0 0
        %5009 = vmatmul.mubr.bf16.gmra.mxu0 %v4932
        %v5010 = vpop.f32.mrf.mxu0
        %v5011 = vadd.f32 0.0, %v5010
        %v5012 = vpop.f32.mrf.mxu0
        %v5013 = vpop.f32.mrf.mxu0
        %v5014 = vadd.f32 0.0, %v5013
        %v5015 = vpop.f32.mrf.mxu0
        %5016 = vmatprep.mubr.bf16.mxu0 0
        %5017 = vmatmul.mubr.bf16.gmra.mxu0 %v4935
        %v5018 = vpop.f32.mrf.mxu0
        %v5019 = vadd.f32 0.0, %v5018
        %v5020 = vpop.f32.mrf.mxu0
        %v5021 = vpop.f32.mrf.mxu0
        %v5022 = vadd.f32 0.0, %v5021
        %v5023 = vpop.f32.mrf.mxu0
        %5024 = vmatprep.mubr.bf16.mxu0 0
        %5025 = vmatmul.mubr.bf16.gmra.mxu0 %v4938
        %v5026 = vpop.f32.mrf.mxu0
        %v5027 = vadd.f32 0.0, %v5026
        %v5028 = vpop.f32.mrf.mxu0
        %v5029 = vpop.f32.mrf.mxu0
        %v5030 = vadd.f32 0.0, %v5029
        %v5031 = vpop.f32.mrf.mxu0
        %5032 = vmatprep.mubr.bf16.mxu0 0
        %5033 = vmatmul.mubr.bf16.gmra.mxu0 %v4941
        %v5034 = vpop.f32.mrf.mxu0
        %v5035 = vadd.f32 0.0, %v5034
        %v5036 = vpop.f32.mrf.mxu0
        %v5037 = vpop.f32.mrf.mxu0
        %v5038 = vadd.f32 0.0, %v5037
        %v5039 = vpop.f32.mrf.mxu0
        %5040 = vmatprep.mubr.bf16.mxu0 0
        %5041 = vmatmul.mubr.bf16.gmra.mxu0 %v4944
        %v5042 = vpop.f32.mrf.mxu0
        %v5043 = vadd.f32 0.0, %v5042
        %v5044 = vpop.f32.mrf.mxu0
        %v5045 = vpop.f32.mrf.mxu0
        %v5046 = vadd.f32 0.0, %v5045
        %v5047 = vpop.f32.mrf.mxu0
        %5048 = vmatprep.mubr.bf16.mxu0 0
        %5049 = vmatmul.mubr.bf16.gmra.mxu0 %v4947
        %v5050 = vpop.f32.mrf.mxu0
        %v5051 = vadd.f32 0.0, %v5050
        %v5052 = vpop.f32.mrf.mxu0
        %v5053 = vpop.f32.mrf.mxu0
        %v5054 = vadd.f32 0.0, %v5053
        %v5055 = vpop.f32.mrf.mxu0
        %5056 = vmatprep.mubr.bf16.mxu0 0
        %5057 = vmatmul.mubr.bf16.gmra.mxu0 %v4950
        %v5058 = vpop.f32.mrf.mxu0
        %v5059 = vadd.f32 0.0, %v5058
        %v5060 = vpop.f32.mrf.mxu0
        %v5061 = vpop.f32.mrf.mxu0
        %v5062 = vadd.f32 0.0, %v5061
        %v5063 = vpop.f32.mrf.mxu0
        %5064 = vdwg.mxu0
        %v5065 = vmax.f32 %v4987, 0.0
        %v5066 = vmax.f32 %v4990, 0.0
        %v5067 = vmax.f32 %v4995, 0.0
        %v5068 = vmax.f32 %v4998, 0.0
        %v5069 = vmax.f32 %v5003, 0.0
        %v5070 = vmax.f32 %v5006, 0.0
        %v5071 = vmax.f32 %v5011, 0.0
        %v5072 = vmax.f32 %v5014, 0.0
        %v5073 = vmax.f32 %v5019, 0.0
        %v5074 = vmax.f32 %v5022, 0.0
        %v5075 = vmax.f32 %v5027, 0.0
        %v5076 = vmax.f32 %v5030, 0.0
        %v5077 = vmax.f32 %v5035, 0.0
        %v5078 = vmax.f32 %v5038, 0.0
        %v5079 = vmax.f32 %v5043, 0.0
        %v5080 = vmax.f32 %v5046, 0.0
        %v5081 = vmax.f32 %v5051, 0.0
        %v5082 = vmax.f32 %v5054, 0.0
        %v5083 = vmax.f32 %v5059, 0.0
        %v5084 = vmax.f32 %v5062, 0.0
        %v5085 = vpack.c.bf16 %v5066, %v5065
        %v5086 = vpack.c.bf16 %v5068, %v5067
        %v5087 = vpack.c.bf16 %v5070, %v5069
        %v5088 = vpack.c.bf16 %v5072, %v5071
        %v5089 = vpack.c.bf16 %v5074, %v5073
        %v5090 = vpack.c.bf16 %v5076, %v5075
        %v5091 = vpack.c.bf16 %v5078, %v5077
        %v5092 = vpack.c.bf16 %v5080, %v5079
        %v5093 = vpack.c.bf16 %v5082, %v5081
        %v5094 = vpack.c.bf16 %v5084, %v5083
        %5115 = vrot.lane.b32.xlu0 %v4987, 96
        %v5116 = vpop.permute.xlu0 %5115
        %5117 = vrot.lane.b32.xlu0 %v4990, 96
        %v5118 = vpop.permute.xlu0 %5117
        %5119 = vrot.lane.b32.xlu0 %v4995, 96
        %v5120 = vpop.permute.xlu0 %5119
        %5121 = vrot.lane.b32.xlu0 %v4998, 96
        %v5122 = vpop.permute.xlu0 %5121
        %5123 = vrot.lane.b32.xlu0 %v5003, 96
        %v5124 = vpop.permute.xlu0 %5123
        %5125 = vrot.lane.b32.xlu0 %v5006, 96
        %v5126 = vpop.permute.xlu0 %5125
        %5127 = vrot.lane.b32.xlu0 %v5011, 96
        %v5128 = vpop.permute.xlu0 %5127
        %5129 = vrot.lane.b32.xlu0 %v5014, 96
        %v5130 = vpop.permute.xlu0 %5129
        %5131 = vrot.lane.b32.xlu0 %v5019, 96
        %v5132 = vpop.permute.xlu0 %5131
        %5133 = vrot.lane.b32.xlu0 %v5022, 96
        %v5134 = vpop.permute.xlu0 %5133
        %5135 = vrot.lane.b32.xlu0 %v5027, 96
        %v5136 = vpop.permute.xlu0 %5135
        %5137 = vrot.lane.b32.xlu0 %v5030, 96
        %v5138 = vpop.permute.xlu0 %5137
        %5139 = vrot.lane.b32.xlu0 %v5035, 96
        %v5140 = vpop.permute.xlu0 %5139
        %5141 = vrot.lane.b32.xlu0 %v5038, 96
        %v5142 = vpop.permute.xlu0 %5141
        %5143 = vrot.lane.b32.xlu0 %v5043, 96
        %v5144 = vpop.permute.xlu0 %5143
        %5145 = vrot.lane.b32.xlu0 %v5046, 96
        %v5146 = vpop.permute.xlu0 %5145
        %5147 = vrot.lane.b32.xlu0 %v5051, 96
        %v5148 = vpop.permute.xlu0 %5147
        %5149 = vrot.lane.b32.xlu0 %v5054, 96
        %v5150 = vpop.permute.xlu0 %5149
        %5151 = vrot.lane.b32.xlu0 %v5059, 96
        %v5152 = vpop.permute.xlu0 %5151
        %5153 = vrot.lane.b32.xlu0 %v5062, 96
        %v5154 = vpop.permute.xlu0 %5153
        %v5176 = vsel %vm919, %v5085, 0
        %v5179 = vsel %vm919, %v5086, 0
        %v5182 = vsel %vm919, %v5087, 0
        %v5185 = vsel %vm919, %v5088, 0
        %v5188 = vsel %vm919, %v5089, 0
        %v5191 = vsel %vm919, %v5090, 0
        %v5194 = vsel %vm919, %v5091, 0
        %v5197 = vsel %vm919, %v5092, 0
        %v5200 = vsel %vm919, %v5093, 0
        %v5203 = vsel %vm919, %v5094, 0
        %5205 = vmatprep.subr.bf16.mxu0 0
        %5206 = vmatpush1.bf16.msra.mxu0 0
        %5207 = vmatprep.subr.bf16.mxu0 0
        %5208 = vmatpush1.bf16.msra.mxu0 0
        %5209 = vmatprep.subr.bf16.mxu0 0
        %5210 = vmatpush1.bf16.msra.mxu0 0
        %5211 = vmatprep.subr.bf16.mxu0 0
        %5212 = vmatpush1.bf16.msra.mxu0 0
        %5213 = vmatprep.subr.bf16.mxu0 0
        %5214 = vmatpush1.bf16.msra.mxu0 0
        %5215 = vmatprep.subr.bf16.mxu0 0
        %5216 = vmatpush1.bf16.msra.mxu0 0
        %5217 = vmatprep.subr.bf16.mxu0 0
        %5218 = vmatpush1.bf16.msra.mxu0 %v836
        %5219 = vmatprep.subr.bf16.mxu0 0
        %5220 = vmatpush1.bf16.msra.mxu0 %v835
        %5221 = vmatprep.subr.bf16.mxu0 0
        %5222 = vmatpush2.bf16.msra.mxu0 0
        %5223 = vmatprep.subr.bf16.mxu0 0
        %5224 = vmatpush2.bf16.msra.mxu0 0
        %5225 = vmatprep.subr.bf16.mxu0 0
        %5226 = vmatpush2.bf16.msra.mxu0 0
        %5227 = vmatprep.subr.bf16.mxu0 0
        %5228 = vmatpush2.bf16.msra.mxu0 0
        %5229 = vmatprep.subr.bf16.mxu0 0
        %5230 = vmatpush2.bf16.msra.mxu0 0
        %5231 = vmatprep.subr.bf16.mxu0 0
        %5232 = vmatpush2.bf16.msra.mxu0 0
        %5233 = vmatprep.subr.bf16.mxu0 0
        %5234 = vmatpush2.bf16.msra.mxu0 0
        %5235 = vmatprep.subr.bf16.mxu0 0
        %5236 = vmatpush2.bf16.msra.mxu0 0
        %5237 = vmatprep.mubr.bf16.mxu0 0
        %5238 = vmatmul.mubr.bf16.gmra.mxu0 %v5176
        %v5239 = vpop.f32.mrf.mxu0
        %v5240 = vadd.f32 %v5116, %v5239
        %v5241 = vpop.f32.mrf.mxu0
        %v5242 = vpop.f32.mrf.mxu0
        %v5243 = vadd.f32 %v5118, %v5242
        %v5244 = vpop.f32.mrf.mxu0
        %5245 = vmatprep.mubr.bf16.mxu0 0
        %5246 = vmatmul.mubr.bf16.gmra.mxu0 %v5179
        %v5247 = vpop.f32.mrf.mxu0
        %v5248 = vadd.f32 %v5120, %v5247
        %v5249 = vpop.f32.mrf.mxu0
        %v5250 = vpop.f32.mrf.mxu0
        %v5251 = vadd.f32 %v5122, %v5250
        %v5252 = vpop.f32.mrf.mxu0
        %5253 = vmatprep.mubr.bf16.mxu0 0
        %5254 = vmatmul.mubr.bf16.gmra.mxu0 %v5182
        %v5255 = vpop.f32.mrf.mxu0
        %v5256 = vadd.f32 %v5124, %v5255
        %v5257 = vpop.f32.mrf.mxu0
        %v5258 = vpop.f32.mrf.mxu0
        %v5259 = vadd.f32 %v5126, %v5258
        %v5260 = vpop.f32.mrf.mxu0
        %5261 = vmatprep.mubr.bf16.mxu0 0
        %5262 = vmatmul.mubr.bf16.gmra.mxu0 %v5185
        %v5263 = vpop.f32.mrf.mxu0
        %v5264 = vadd.f32 %v5128, %v5263
        %v5265 = vpop.f32.mrf.mxu0
        %v5266 = vpop.f32.mrf.mxu0
        %v5267 = vadd.f32 %v5130, %v5266
        %v5268 = vpop.f32.mrf.mxu0
        %5269 = vmatprep.mubr.bf16.mxu0 0
        %5270 = vmatmul.mubr.bf16.gmra.mxu0 %v5188
        %v5271 = vpop.f32.mrf.mxu0
        %v5272 = vadd.f32 %v5132, %v5271
        %v5273 = vpop.f32.mrf.mxu0
        %v5274 = vpop.f32.mrf.mxu0
        %v5275 = vadd.f32 %v5134, %v5274
        %v5276 = vpop.f32.mrf.mxu0
        %5277 = vmatprep.mubr.bf16.mxu0 0
        %5278 = vmatmul.mubr.bf16.gmra.mxu0 %v5191
        %v5279 = vpop.f32.mrf.mxu0
        %v5280 = vadd.f32 %v5136, %v5279
        %v5281 = vpop.f32.mrf.mxu0
        %v5282 = vpop.f32.mrf.mxu0
        %v5283 = vadd.f32 %v5138, %v5282
        %v5284 = vpop.f32.mrf.mxu0
        %5285 = vmatprep.mubr.bf16.mxu0 0
        %5286 = vmatmul.mubr.bf16.gmra.mxu0 %v5194
        %v5287 = vpop.f32.mrf.mxu0
        %v5288 = vadd.f32 %v5140, %v5287
        %v5289 = vpop.f32.mrf.mxu0
        %v5290 = vpop.f32.mrf.mxu0
        %v5291 = vadd.f32 %v5142, %v5290
        %v5292 = vpop.f32.mrf.mxu0
        %5293 = vmatprep.mubr.bf16.mxu0 0
        %5294 = vmatmul.mubr.bf16.gmra.mxu0 %v5197
        %v5295 = vpop.f32.mrf.mxu0
        %v5296 = vadd.f32 %v5144, %v5295
        %v5297 = vpop.f32.mrf.mxu0
        %v5298 = vpop.f32.mrf.mxu0
        %v5299 = vadd.f32 %v5146, %v5298
        %v5300 = vpop.f32.mrf.mxu0
        %5301 = vmatprep.mubr.bf16.mxu0 0
        %5302 = vmatmul.mubr.bf16.gmra.mxu0 %v5200
        %v5303 = vpop.f32.mrf.mxu0
        %v5304 = vadd.f32 %v5148, %v5303
        %v5305 = vpop.f32.mrf.mxu0
        %v5306 = vpop.f32.mrf.mxu0
        %v5307 = vadd.f32 %v5150, %v5306
        %v5308 = vpop.f32.mrf.mxu0
        %5309 = vmatprep.mubr.bf16.mxu0 0
        %5310 = vmatmul.mubr.bf16.gmra.mxu0 %v5203
        %v5311 = vpop.f32.mrf.mxu0
        %v5312 = vadd.f32 %v5152, %v5311
        %v5313 = vpop.f32.mrf.mxu0
        %v5314 = vpop.f32.mrf.mxu0
        %v5315 = vadd.f32 %v5154, %v5314
        %v5316 = vpop.f32.mrf.mxu0
        %5317 = vdwg.mxu0
        %v5318 = vmax.f32 %v5240, 0.0
        %v5319 = vmax.f32 %v5243, 0.0
        %v5320 = vmax.f32 %v5248, 0.0
        %v5321 = vmax.f32 %v5251, 0.0
        %v5322 = vmax.f32 %v5256, 0.0
        %v5323 = vmax.f32 %v5259, 0.0
        %v5324 = vmax.f32 %v5264, 0.0
        %v5325 = vmax.f32 %v5267, 0.0
        %v5326 = vmax.f32 %v5272, 0.0
        %v5327 = vmax.f32 %v5275, 0.0
        %v5328 = vmax.f32 %v5280, 0.0
        %v5329 = vmax.f32 %v5283, 0.0
        %v5330 = vmax.f32 %v5288, 0.0
        %v5331 = vmax.f32 %v5291, 0.0
        %v5332 = vmax.f32 %v5296, 0.0
        %v5333 = vmax.f32 %v5299, 0.0
        %v5334 = vmax.f32 %v5304, 0.0
        %v5335 = vmax.f32 %v5307, 0.0
        %v5336 = vmax.f32 %v5312, 0.0
        %v5337 = vmax.f32 %v5315, 0.0
        %v5338 = vpack.c.bf16 %v5319, %v5318
        %v5339 = vpack.c.bf16 %v5321, %v5320
        %v5340 = vpack.c.bf16 %v5323, %v5322
        %v5341 = vpack.c.bf16 %v5325, %v5324
        %v5342 = vpack.c.bf16 %v5327, %v5326
        %v5343 = vpack.c.bf16 %v5329, %v5328
        %v5344 = vpack.c.bf16 %v5331, %v5330
        %v5345 = vpack.c.bf16 %v5333, %v5332
        %v5346 = vpack.c.bf16 %v5335, %v5334
        %v5347 = vpack.c.bf16 %v5337, %v5336
        %5348 = vrot.lane.b32.xlu0 %v4987, 64
        %v5349 = vpop.permute.xlu0 %5348
        %5350 = vrot.lane.b32.xlu0 %v4990, 64
        %v5351 = vpop.permute.xlu0 %5350
        %5352 = vrot.lane.b32.xlu0 %v4995, 64
        %v5353 = vpop.permute.xlu0 %5352
        %5354 = vrot.lane.b32.xlu0 %v4998, 64
        %v5355 = vpop.permute.xlu0 %5354
        %5356 = vrot.lane.b32.xlu0 %v5003, 64
        %v5357 = vpop.permute.xlu0 %5356
        %5358 = vrot.lane.b32.xlu0 %v5006, 64
        %v5359 = vpop.permute.xlu0 %5358
        %5360 = vrot.lane.b32.xlu0 %v5011, 64
        %v5361 = vpop.permute.xlu0 %5360
        %5362 = vrot.lane.b32.xlu0 %v5014, 64
        %v5363 = vpop.permute.xlu0 %5362
        %5364 = vrot.lane.b32.xlu0 %v5019, 64
        %v5365 = vpop.permute.xlu0 %5364
        %5366 = vrot.lane.b32.xlu0 %v5022, 64
        %v5367 = vpop.permute.xlu0 %5366
        %5368 = vrot.lane.b32.xlu0 %v5027, 64
        %v5369 = vpop.permute.xlu0 %5368
        %5370 = vrot.lane.b32.xlu0 %v5030, 64
        %v5371 = vpop.permute.xlu0 %5370
        %5372 = vrot.lane.b32.xlu0 %v5035, 64
        %v5373 = vpop.permute.xlu0 %5372
        %5374 = vrot.lane.b32.xlu0 %v5038, 64
        %v5375 = vpop.permute.xlu0 %5374
        %5376 = vrot.lane.b32.xlu0 %v5043, 64
        %v5377 = vpop.permute.xlu0 %5376
        %5378 = vrot.lane.b32.xlu0 %v5046, 64
        %v5379 = vpop.permute.xlu0 %5378
        %5380 = vrot.lane.b32.xlu0 %v5051, 64
        %v5381 = vpop.permute.xlu0 %5380
        %5382 = vrot.lane.b32.xlu0 %v5054, 64
        %v5383 = vpop.permute.xlu0 %5382
        %5384 = vrot.lane.b32.xlu0 %v5059, 64
        %v5385 = vpop.permute.xlu0 %5384
        %5386 = vrot.lane.b32.xlu0 %v5062, 64
        %v5387 = vpop.permute.xlu0 %5386
        %v5409 = vsel %vm919, %v5338, 0
        %v5412 = vsel %vm919, %v5339, 0
        %v5415 = vsel %vm919, %v5340, 0
        %v5418 = vsel %vm919, %v5341, 0
        %v5421 = vsel %vm919, %v5342, 0
        %v5424 = vsel %vm919, %v5343, 0
        %v5427 = vsel %vm919, %v5344, 0
        %v5430 = vsel %vm919, %v5345, 0
        %v5433 = vsel %vm919, %v5346, 0
        %v5436 = vsel %vm919, %v5347, 0
        %5438 = vmatprep.subr.bf16.mxu0 0
        %5439 = vmatpush1.bf16.msra.mxu0 0
        %5440 = vmatprep.subr.bf16.mxu0 0
        %5441 = vmatpush1.bf16.msra.mxu0 0
        %5442 = vmatprep.subr.bf16.mxu0 0
        %5443 = vmatpush1.bf16.msra.mxu0 0
        %5444 = vmatprep.subr.bf16.mxu0 0
        %5445 = vmatpush1.bf16.msra.mxu0 0
        %5446 = vmatprep.subr.bf16.mxu0 0
        %5447 = vmatpush1.bf16.msra.mxu0 0
        %5448 = vmatprep.subr.bf16.mxu0 0
        %5449 = vmatpush1.bf16.msra.mxu0 0
        %5450 = vmatprep.subr.bf16.mxu0 0
        %5451 = vmatpush1.bf16.msra.mxu0 %v1107
        %5452 = vmatprep.subr.bf16.mxu0 0
        %5453 = vmatpush1.bf16.msra.mxu0 %v1106
        %5454 = vmatprep.subr.bf16.mxu0 0
        %5455 = vmatpush2.bf16.msra.mxu0 0
        %5456 = vmatprep.subr.bf16.mxu0 0
        %5457 = vmatpush2.bf16.msra.mxu0 0
        %5458 = vmatprep.subr.bf16.mxu0 0
        %5459 = vmatpush2.bf16.msra.mxu0 0
        %5460 = vmatprep.subr.bf16.mxu0 0
        %5461 = vmatpush2.bf16.msra.mxu0 0
        %5462 = vmatprep.subr.bf16.mxu0 0
        %5463 = vmatpush2.bf16.msra.mxu0 0
        %5464 = vmatprep.subr.bf16.mxu0 0
        %5465 = vmatpush2.bf16.msra.mxu0 0
        %5466 = vmatprep.subr.bf16.mxu0 0
        %5467 = vmatpush2.bf16.msra.mxu0 0
        %5468 = vmatprep.subr.bf16.mxu0 0
        %5469 = vmatpush2.bf16.msra.mxu0 0
        %5470 = vmatprep.mubr.bf16.mxu0 0
        %5471 = vmatmul.mubr.bf16.gmra.mxu0 %v5409
        %v5472 = vpop.f32.mrf.mxu0
        %v5473 = vadd.f32 %v5349, %v5472
        %v5474 = vpop.f32.mrf.mxu0
        %v5475 = vpop.f32.mrf.mxu0
        %v5476 = vadd.f32 %v5351, %v5475
        %v5477 = vpop.f32.mrf.mxu0
        %5478 = vmatprep.mubr.bf16.mxu0 0
        %5479 = vmatmul.mubr.bf16.gmra.mxu0 %v5412
        %v5480 = vpop.f32.mrf.mxu0
        %v5481 = vadd.f32 %v5353, %v5480
        %v5482 = vpop.f32.mrf.mxu0
        %v5483 = vpop.f32.mrf.mxu0
        %v5484 = vadd.f32 %v5355, %v5483
        %v5485 = vpop.f32.mrf.mxu0
        %5486 = vmatprep.mubr.bf16.mxu0 0
        %5487 = vmatmul.mubr.bf16.gmra.mxu0 %v5415
        %v5488 = vpop.f32.mrf.mxu0
        %v5489 = vadd.f32 %v5357, %v5488
        %v5490 = vpop.f32.mrf.mxu0
        %v5491 = vpop.f32.mrf.mxu0
        %v5492 = vadd.f32 %v5359, %v5491
        %v5493 = vpop.f32.mrf.mxu0
        %5494 = vmatprep.mubr.bf16.mxu0 0
        %5495 = vmatmul.mubr.bf16.gmra.mxu0 %v5418
        %v5496 = vpop.f32.mrf.mxu0
        %v5497 = vadd.f32 %v5361, %v5496
        %v5498 = vpop.f32.mrf.mxu0
        %v5499 = vpop.f32.mrf.mxu0
        %v5500 = vadd.f32 %v5363, %v5499
        %v5501 = vpop.f32.mrf.mxu0
        %5502 = vmatprep.mubr.bf16.mxu0 0
        %5503 = vmatmul.mubr.bf16.gmra.mxu0 %v5421
        %v5504 = vpop.f32.mrf.mxu0
        %v5505 = vadd.f32 %v5365, %v5504
        %v5506 = vpop.f32.mrf.mxu0
        %v5507 = vpop.f32.mrf.mxu0
        %v5508 = vadd.f32 %v5367, %v5507
        %v5509 = vpop.f32.mrf.mxu0
        %5510 = vmatprep.mubr.bf16.mxu0 0
        %5511 = vmatmul.mubr.bf16.gmra.mxu0 %v5424
        %v5512 = vpop.f32.mrf.mxu0
        %v5513 = vadd.f32 %v5369, %v5512
        %v5514 = vpop.f32.mrf.mxu0
        %v5515 = vpop.f32.mrf.mxu0
        %v5516 = vadd.f32 %v5371, %v5515
        %v5517 = vpop.f32.mrf.mxu0
        %5518 = vmatprep.mubr.bf16.mxu0 0
        %5519 = vmatmul.mubr.bf16.gmra.mxu0 %v5427
        %v5520 = vpop.f32.mrf.mxu0
        %v5521 = vadd.f32 %v5373, %v5520
        %v5522 = vpop.f32.mrf.mxu0
        %v5523 = vpop.f32.mrf.mxu0
        %v5524 = vadd.f32 %v5375, %v5523
        %v5525 = vpop.f32.mrf.mxu0
        %5526 = vmatprep.mubr.bf16.mxu0 0
        %5527 = vmatmul.mubr.bf16.gmra.mxu0 %v5430
        %v5528 = vpop.f32.mrf.mxu0
        %v5529 = vadd.f32 %v5377, %v5528
        %v5530 = vpop.f32.mrf.mxu0
        %v5531 = vpop.f32.mrf.mxu0
        %v5532 = vadd.f32 %v5379, %v5531
        %v5533 = vpop.f32.mrf.mxu0
        %5534 = vmatprep.mubr.bf16.mxu0 0
        %5535 = vmatmul.mubr.bf16.gmra.mxu0 %v5433
        %v5536 = vpop.f32.mrf.mxu0
        %v5537 = vadd.f32 %v5381, %v5536
        %v5538 = vpop.f32.mrf.mxu0
        %v5539 = vpop.f32.mrf.mxu0
        %v5540 = vadd.f32 %v5383, %v5539
        %v5541 = vpop.f32.mrf.mxu0
        %5542 = vmatprep.mubr.bf16.mxu0 0
        %5543 = vmatmul.mubr.bf16.gmra.mxu0 %v5436
        %v5544 = vpop.f32.mrf.mxu0
        %v5545 = vadd.f32 %v5385, %v5544
        %v5546 = vpop.f32.mrf.mxu0
        %v5547 = vpop.f32.mrf.mxu0
        %v5548 = vadd.f32 %v5387, %v5547
        %v5549 = vpop.f32.mrf.mxu0
        %5550 = vdwg.mxu0
        %v5551 = vmax.f32 %v5473, 0.0
        %v5552 = vmax.f32 %v5476, 0.0
        %v5553 = vmax.f32 %v5481, 0.0
        %v5554 = vmax.f32 %v5484, 0.0
        %v5555 = vmax.f32 %v5489, 0.0
        %v5556 = vmax.f32 %v5492, 0.0
        %v5557 = vmax.f32 %v5497, 0.0
        %v5558 = vmax.f32 %v5500, 0.0
        %v5559 = vmax.f32 %v5505, 0.0
        %v5560 = vmax.f32 %v5508, 0.0
        %v5561 = vmax.f32 %v5513, 0.0
        %v5562 = vmax.f32 %v5516, 0.0
        %v5563 = vmax.f32 %v5521, 0.0
        %v5564 = vmax.f32 %v5524, 0.0
        %v5565 = vmax.f32 %v5529, 0.0
        %v5566 = vmax.f32 %v5532, 0.0
        %v5567 = vmax.f32 %v5537, 0.0
        %v5568 = vmax.f32 %v5540, 0.0
        %v5569 = vmax.f32 %v5545, 0.0
        %v5570 = vmax.f32 %v5548, 0.0
        %v5571 = vpack.c.bf16 %v5552, %v5551
        %v5572 = vpack.c.bf16 %v5554, %v5553
        %v5573 = vpack.c.bf16 %v5556, %v5555
        %v5574 = vpack.c.bf16 %v5558, %v5557
        %v5575 = vpack.c.bf16 %v5560, %v5559
        %v5576 = vpack.c.bf16 %v5562, %v5561
        %v5577 = vpack.c.bf16 %v5564, %v5563
        %v5578 = vpack.c.bf16 %v5566, %v5565
        %v5579 = vpack.c.bf16 %v5568, %v5567
        %v5580 = vpack.c.bf16 %v5570, %v5569
        %5581 = vrot.lane.b32.xlu0 %v4987, 32
        %v5582 = vpop.permute.xlu0 %5581
        %5583 = vrot.lane.b32.xlu0 %v4990, 32
        %v5584 = vpop.permute.xlu0 %5583
        %5585 = vrot.lane.b32.xlu0 %v4995, 32
        %v5586 = vpop.permute.xlu0 %5585
        %5587 = vrot.lane.b32.xlu0 %v4998, 32
        %v5588 = vpop.permute.xlu0 %5587
        %5589 = vrot.lane.b32.xlu0 %v5003, 32
        %v5590 = vpop.permute.xlu0 %5589
        %5591 = vrot.lane.b32.xlu0 %v5006, 32
        %v5592 = vpop.permute.xlu0 %5591
        %5593 = vrot.lane.b32.xlu0 %v5011, 32
        %v5594 = vpop.permute.xlu0 %5593
        %5595 = vrot.lane.b32.xlu0 %v5014, 32
        %v5596 = vpop.permute.xlu0 %5595
        %5597 = vrot.lane.b32.xlu0 %v5019, 32
        %v5598 = vpop.permute.xlu0 %5597
        %5599 = vrot.lane.b32.xlu0 %v5022, 32
        %v5600 = vpop.permute.xlu0 %5599
        %5601 = vrot.lane.b32.xlu0 %v5027, 32
        %v5602 = vpop.permute.xlu0 %5601
        %5603 = vrot.lane.b32.xlu0 %v5030, 32
        %v5604 = vpop.permute.xlu0 %5603
        %5605 = vrot.lane.b32.xlu0 %v5035, 32
        %v5606 = vpop.permute.xlu0 %5605
        %5607 = vrot.lane.b32.xlu0 %v5038, 32
        %v5608 = vpop.permute.xlu0 %5607
        %5609 = vrot.lane.b32.xlu0 %v5043, 32
        %v5610 = vpop.permute.xlu0 %5609
        %5611 = vrot.lane.b32.xlu0 %v5046, 32
        %v5612 = vpop.permute.xlu0 %5611
        %5613 = vrot.lane.b32.xlu0 %v5051, 32
        %v5614 = vpop.permute.xlu0 %5613
        %5615 = vrot.lane.b32.xlu0 %v5054, 32
        %v5616 = vpop.permute.xlu0 %5615
        %5617 = vrot.lane.b32.xlu0 %v5059, 32
        %v5618 = vpop.permute.xlu0 %5617
        %5619 = vrot.lane.b32.xlu0 %v5062, 32
        %v5620 = vpop.permute.xlu0 %5619
        %v5642 = vsel %vm919, %v5571, 0
        %v5645 = vsel %vm919, %v5572, 0
        %v5648 = vsel %vm919, %v5573, 0
        %v5651 = vsel %vm919, %v5574, 0
        %v5654 = vsel %vm919, %v5575, 0
        %v5657 = vsel %vm919, %v5576, 0
        %v5660 = vsel %vm919, %v5577, 0
        %v5663 = vsel %vm919, %v5578, 0
        %v5666 = vsel %vm919, %v5579, 0
        %v5669 = vsel %vm919, %v5580, 0
        %5671 = vmatprep.subr.bf16.mxu0 0
        %5672 = vmatpush1.bf16.msra.mxu0 0
        %5673 = vmatprep.subr.bf16.mxu0 0
        %5674 = vmatpush1.bf16.msra.mxu0 0
        %5675 = vmatprep.subr.bf16.mxu0 0
        %5676 = vmatpush1.bf16.msra.mxu0 0
        %5677 = vmatprep.subr.bf16.mxu0 0
        %5678 = vmatpush1.bf16.msra.mxu0 0
        %5679 = vmatprep.subr.bf16.mxu0 0
        %5680 = vmatpush1.bf16.msra.mxu0 0
        %5681 = vmatprep.subr.bf16.mxu0 0
        %5682 = vmatpush1.bf16.msra.mxu0 0
        %5683 = vmatprep.subr.bf16.mxu0 0
        %5684 = vmatpush1.bf16.msra.mxu0 %v1357
        %5685 = vmatprep.subr.bf16.mxu0 0
        %5686 = vmatpush1.bf16.msra.mxu0 %v1356
        %5687 = vmatprep.subr.bf16.mxu0 0
        %5688 = vmatpush2.bf16.msra.mxu0 0
        %5689 = vmatprep.subr.bf16.mxu0 0
        %5690 = vmatpush2.bf16.msra.mxu0 0
        %5691 = vmatprep.subr.bf16.mxu0 0
        %5692 = vmatpush2.bf16.msra.mxu0 0
        %5693 = vmatprep.subr.bf16.mxu0 0
        %5694 = vmatpush2.bf16.msra.mxu0 0
        %5695 = vmatprep.subr.bf16.mxu0 0
        %5696 = vmatpush2.bf16.msra.mxu0 0
        %5697 = vmatprep.subr.bf16.mxu0 0
        %5698 = vmatpush2.bf16.msra.mxu0 0
        %5699 = vmatprep.subr.bf16.mxu0 0
        %5700 = vmatpush2.bf16.msra.mxu0 0
        %5701 = vmatprep.subr.bf16.mxu0 0
        %5702 = vmatpush2.bf16.msra.mxu0 0
        %5703 = vmatprep.mubr.bf16.mxu0 0
        %5704 = vmatmul.mubr.bf16.gmra.mxu0 %v5642
        %v5705 = vpop.f32.mrf.mxu0
        %v5706 = vadd.f32 %v5582, %v5705
        %v5707 = vpop.f32.mrf.mxu0
        %v5708 = vpop.f32.mrf.mxu0
        %v5709 = vadd.f32 %v5584, %v5708
        %v5710 = vpop.f32.mrf.mxu0
        %5711 = vmatprep.mubr.bf16.mxu0 0
        %5712 = vmatmul.mubr.bf16.gmra.mxu0 %v5645
        %v5713 = vpop.f32.mrf.mxu0
        %v5714 = vadd.f32 %v5586, %v5713
        %v5715 = vpop.f32.mrf.mxu0
        %v5716 = vpop.f32.mrf.mxu0
        %v5717 = vadd.f32 %v5588, %v5716
        %v5718 = vpop.f32.mrf.mxu0
        %5719 = vmatprep.mubr.bf16.mxu0 0
        %5720 = vmatmul.mubr.bf16.gmra.mxu0 %v5648
        %v5721 = vpop.f32.mrf.mxu0
        %v5722 = vadd.f32 %v5590, %v5721
        %v5723 = vpop.f32.mrf.mxu0
        %v5724 = vpop.f32.mrf.mxu0
        %v5725 = vadd.f32 %v5592, %v5724
        %v5726 = vpop.f32.mrf.mxu0
        %5727 = vmatprep.mubr.bf16.mxu0 0
        %5728 = vmatmul.mubr.bf16.gmra.mxu0 %v5651
        %v5729 = vpop.f32.mrf.mxu0
        %v5730 = vadd.f32 %v5594, %v5729
        %v5731 = vpop.f32.mrf.mxu0
        %v5732 = vpop.f32.mrf.mxu0
        %v5733 = vadd.f32 %v5596, %v5732
        %v5734 = vpop.f32.mrf.mxu0
        %5735 = vmatprep.mubr.bf16.mxu0 0
        %5736 = vmatmul.mubr.bf16.gmra.mxu0 %v5654
        %v5737 = vpop.f32.mrf.mxu0
        %v5738 = vadd.f32 %v5598, %v5737
        %v5739 = vpop.f32.mrf.mxu0
        %v5740 = vpop.f32.mrf.mxu0
        %v5741 = vadd.f32 %v5600, %v5740
        %v5742 = vpop.f32.mrf.mxu0
        %5743 = vmatprep.mubr.bf16.mxu0 0
        %5744 = vmatmul.mubr.bf16.gmra.mxu0 %v5657
        %v5745 = vpop.f32.mrf.mxu0
        %v5746 = vadd.f32 %v5602, %v5745
        %v5747 = vpop.f32.mrf.mxu0
        %v5748 = vpop.f32.mrf.mxu0
        %v5749 = vadd.f32 %v5604, %v5748
        %v5750 = vpop.f32.mrf.mxu0
        %5751 = vmatprep.mubr.bf16.mxu0 0
        %5752 = vmatmul.mubr.bf16.gmra.mxu0 %v5660
        %v5753 = vpop.f32.mrf.mxu0
        %v5754 = vadd.f32 %v5606, %v5753
        %v5755 = vpop.f32.mrf.mxu0
        %v5756 = vpop.f32.mrf.mxu0
        %v5757 = vadd.f32 %v5608, %v5756
        %v5758 = vpop.f32.mrf.mxu0
        %5759 = vmatprep.mubr.bf16.mxu0 0
        %5760 = vmatmul.mubr.bf16.gmra.mxu0 %v5663
        %v5761 = vpop.f32.mrf.mxu0
        %v5762 = vadd.f32 %v5610, %v5761
        %v5763 = vpop.f32.mrf.mxu0
        %v5764 = vpop.f32.mrf.mxu0
        %v5765 = vadd.f32 %v5612, %v5764
        %v5766 = vpop.f32.mrf.mxu0
        %5767 = vmatprep.mubr.bf16.mxu0 0
        %5768 = vmatmul.mubr.bf16.gmra.mxu0 %v5666
        %v5769 = vpop.f32.mrf.mxu0
        %v5770 = vadd.f32 %v5614, %v5769
        %v5771 = vpop.f32.mrf.mxu0
        %v5772 = vpop.f32.mrf.mxu0
        %v5773 = vadd.f32 %v5616, %v5772
        %v5774 = vpop.f32.mrf.mxu0
        %5775 = vmatprep.mubr.bf16.mxu0 0
        %5776 = vmatmul.mubr.bf16.gmra.mxu0 %v5669
        %v5777 = vpop.f32.mrf.mxu0
        %v5778 = vadd.f32 %v5618, %v5777
        %v5779 = vpop.f32.mrf.mxu0
        %v5780 = vpop.f32.mrf.mxu0
        %v5781 = vadd.f32 %v5620, %v5780
        %v5782 = vpop.f32.mrf.mxu0
        %5783 = vdwg.mxu0
        %v5784 = vmax.f32 %v5706, 0.0
        %v5785 = vmax.f32 %v5709, 0.0
        %v5786 = vmax.f32 %v5714, 0.0
        %v5787 = vmax.f32 %v5717, 0.0
        %v5788 = vmax.f32 %v5722, 0.0
        %v5789 = vmax.f32 %v5725, 0.0
        %v5790 = vmax.f32 %v5730, 0.0
        %v5791 = vmax.f32 %v5733, 0.0
        %v5792 = vmax.f32 %v5738, 0.0
        %v5793 = vmax.f32 %v5741, 0.0
        %v5794 = vmax.f32 %v5746, 0.0
        %v5795 = vmax.f32 %v5749, 0.0
        %v5796 = vmax.f32 %v5754, 0.0
        %v5797 = vmax.f32 %v5757, 0.0
        %v5798 = vmax.f32 %v5762, 0.0
        %v5799 = vmax.f32 %v5765, 0.0
        %v5800 = vmax.f32 %v5770, 0.0
        %v5801 = vmax.f32 %v5773, 0.0
        %v5802 = vmax.f32 %v5778, 0.0
        %v5803 = vmax.f32 %v5781, 0.0
        %5824 = vrot.lane.b32.xlu0 %v5318, 32
        %v5825 = vpop.permute.xlu0 %5824
        %5826 = vrot.lane.b32.xlu0 %v5319, 32
        %v5827 = vpop.permute.xlu0 %5826
        %5828 = vrot.lane.b32.xlu0 %v5320, 32
        %v5829 = vpop.permute.xlu0 %5828
        %5830 = vrot.lane.b32.xlu0 %v5321, 32
        %v5831 = vpop.permute.xlu0 %5830
        %5832 = vrot.lane.b32.xlu0 %v5322, 32
        %v5833 = vpop.permute.xlu0 %5832
        %5834 = vrot.lane.b32.xlu0 %v5323, 32
        %v5835 = vpop.permute.xlu0 %5834
        %5836 = vrot.lane.b32.xlu0 %v5324, 32
        %v5837 = vpop.permute.xlu0 %5836
        %5838 = vrot.lane.b32.xlu0 %v5325, 32
        %v5839 = vpop.permute.xlu0 %5838
        %5840 = vrot.lane.b32.xlu0 %v5326, 32
        %v5841 = vpop.permute.xlu0 %5840
        %5842 = vrot.lane.b32.xlu0 %v5327, 32
        %v5843 = vpop.permute.xlu0 %5842
        %5844 = vrot.lane.b32.xlu0 %v5328, 32
        %v5845 = vpop.permute.xlu0 %5844
        %5846 = vrot.lane.b32.xlu0 %v5329, 32
        %v5847 = vpop.permute.xlu0 %5846
        %5848 = vrot.lane.b32.xlu0 %v5330, 32
        %v5849 = vpop.permute.xlu0 %5848
        %5850 = vrot.lane.b32.xlu0 %v5331, 32
        %v5851 = vpop.permute.xlu0 %5850
        %5852 = vrot.lane.b32.xlu0 %v5332, 32
        %v5853 = vpop.permute.xlu0 %5852
        %5854 = vrot.lane.b32.xlu0 %v5333, 32
        %v5855 = vpop.permute.xlu0 %5854
        %5856 = vrot.lane.b32.xlu0 %v5334, 32
        %v5857 = vpop.permute.xlu0 %5856
        %5858 = vrot.lane.b32.xlu0 %v5335, 32
        %v5859 = vpop.permute.xlu0 %5858
        %5860 = vrot.lane.b32.xlu0 %v5336, 32
        %v5861 = vpop.permute.xlu0 %5860
        %5862 = vrot.lane.b32.xlu0 %v5337, 32
        %v5863 = vpop.permute.xlu0 %5862
        %5904 = vrot.lane.b32.xlu0 %v5551, 64
        %v5905 = vpop.permute.xlu0 %5904
        %5906 = vrot.lane.b32.xlu0 %v5552, 64
        %v5907 = vpop.permute.xlu0 %5906
        %5908 = vrot.lane.b32.xlu0 %v5553, 64
        %v5909 = vpop.permute.xlu0 %5908
        %5910 = vrot.lane.b32.xlu0 %v5554, 64
        %v5911 = vpop.permute.xlu0 %5910
        %5912 = vrot.lane.b32.xlu0 %v5555, 64
        %v5913 = vpop.permute.xlu0 %5912
        %5914 = vrot.lane.b32.xlu0 %v5556, 64
        %v5915 = vpop.permute.xlu0 %5914
        %5916 = vrot.lane.b32.xlu0 %v5557, 64
        %v5917 = vpop.permute.xlu0 %5916
        %5918 = vrot.lane.b32.xlu0 %v5558, 64
        %v5919 = vpop.permute.xlu0 %5918
        %5920 = vrot.lane.b32.xlu0 %v5559, 64
        %v5921 = vpop.permute.xlu0 %5920
        %5922 = vrot.lane.b32.xlu0 %v5560, 64
        %v5923 = vpop.permute.xlu0 %5922
        %5924 = vrot.lane.b32.xlu0 %v5561, 64
        %v5925 = vpop.permute.xlu0 %5924
        %5926 = vrot.lane.b32.xlu0 %v5562, 64
        %v5927 = vpop.permute.xlu0 %5926
        %5928 = vrot.lane.b32.xlu0 %v5563, 64
        %v5929 = vpop.permute.xlu0 %5928
        %5930 = vrot.lane.b32.xlu0 %v5564, 64
        %v5931 = vpop.permute.xlu0 %5930
        %5932 = vrot.lane.b32.xlu0 %v5565, 64
        %v5933 = vpop.permute.xlu0 %5932
        %5934 = vrot.lane.b32.xlu0 %v5566, 64
        %v5935 = vpop.permute.xlu0 %5934
        %5936 = vrot.lane.b32.xlu0 %v5567, 64
        %v5937 = vpop.permute.xlu0 %5936
        %5938 = vrot.lane.b32.xlu0 %v5568, 64
        %v5939 = vpop.permute.xlu0 %5938
        %5940 = vrot.lane.b32.xlu0 %v5569, 64
        %v5941 = vpop.permute.xlu0 %5940
        %5942 = vrot.lane.b32.xlu0 %v5570, 64
        %v5943 = vpop.permute.xlu0 %5942
        %5984 = vrot.lane.b32.xlu0 %v5784, 96
        %v5985 = vpop.permute.xlu0 %5984
        %5986 = vrot.lane.b32.xlu0 %v5785, 96
        %v5987 = vpop.permute.xlu0 %5986
        %5988 = vrot.lane.b32.xlu0 %v5786, 96
        %v5989 = vpop.permute.xlu0 %5988
        %5990 = vrot.lane.b32.xlu0 %v5787, 96
        %v5991 = vpop.permute.xlu0 %5990
        %5992 = vrot.lane.b32.xlu0 %v5788, 96
        %v5993 = vpop.permute.xlu0 %5992
        %5994 = vrot.lane.b32.xlu0 %v5789, 96
        %v5995 = vpop.permute.xlu0 %5994
        %5996 = vrot.lane.b32.xlu0 %v5790, 96
        %v5997 = vpop.permute.xlu0 %5996
        %5998 = vrot.lane.b32.xlu0 %v5791, 96
        %v5999 = vpop.permute.xlu0 %5998
        %6000 = vrot.lane.b32.xlu0 %v5792, 96
        %v6001 = vpop.permute.xlu0 %6000
        %6002 = vrot.lane.b32.xlu0 %v5793, 96
        %v6003 = vpop.permute.xlu0 %6002
        %6004 = vrot.lane.b32.xlu0 %v5794, 96
        %v6005 = vpop.permute.xlu0 %6004
        %6006 = vrot.lane.b32.xlu0 %v5795, 96
        %v6007 = vpop.permute.xlu0 %6006
        %6008 = vrot.lane.b32.xlu0 %v5796, 96
        %v6009 = vpop.permute.xlu0 %6008
        %6010 = vrot.lane.b32.xlu0 %v5797, 96
        %v6011 = vpop.permute.xlu0 %6010
        %6012 = vrot.lane.b32.xlu0 %v5798, 96
        %v6013 = vpop.permute.xlu0 %6012
        %6014 = vrot.lane.b32.xlu0 %v5799, 96
        %v6015 = vpop.permute.xlu0 %6014
        %6016 = vrot.lane.b32.xlu0 %v5800, 96
        %v6017 = vpop.permute.xlu0 %6016
        %6018 = vrot.lane.b32.xlu0 %v5801, 96
        %v6019 = vpop.permute.xlu0 %6018
        %6020 = vrot.lane.b32.xlu0 %v5802, 96
        %v6021 = vpop.permute.xlu0 %6020
        %6022 = vrot.lane.b32.xlu0 %v5803, 96
        %v6023 = vpop.permute.xlu0 %6022
        %v6044 = vsel %vm919, %v5065, %v5825
        %v6045 = vsel %vm919, %v5066, %v5827
        %v6046 = vsel %vm919, %v5067, %v5829
        %v6047 = vsel %vm919, %v5068, %v5831
        %v6048 = vsel %vm919, %v5069, %v5833
        %v6049 = vsel %vm919, %v5070, %v5835
        %v6050 = vsel %vm919, %v5071, %v5837
        %v6051 = vsel %vm919, %v5072, %v5839
        %v6052 = vsel %vm919, %v5073, %v5841
        %v6053 = vsel %vm919, %v5074, %v5843
        %v6054 = vsel %vm919, %v5075, %v5845
        %v6055 = vsel %vm919, %v5076, %v5847
        %v6056 = vsel %vm919, %v5077, %v5849
        %v6057 = vsel %vm919, %v5078, %v5851
        %v6058 = vsel %vm919, %v5079, %v5853
        %v6059 = vsel %vm919, %v5080, %v5855
        %v6060 = vsel %vm919, %v5081, %v5857
        %v6061 = vsel %vm919, %v5082, %v5859
        %v6062 = vsel %vm919, %v5083, %v5861
        %v6063 = vsel %vm919, %v5084, %v5863
        %v6064 = vsel %vm1843, %v6044, %v5905
        %v6065 = vsel %vm1843, %v6045, %v5907
        %v6066 = vsel %vm1843, %v6046, %v5909
        %v6067 = vsel %vm1843, %v6047, %v5911
        %v6068 = vsel %vm1843, %v6048, %v5913
        %v6069 = vsel %vm1843, %v6049, %v5915
        %v6070 = vsel %vm1843, %v6050, %v5917
        %v6071 = vsel %vm1843, %v6051, %v5919
        %v6072 = vsel %vm1843, %v6052, %v5921
        %v6073 = vsel %vm1843, %v6053, %v5923
        %v6074 = vsel %vm1843, %v6054, %v5925
        %v6075 = vsel %vm1843, %v6055, %v5927
        %v6076 = vsel %vm1843, %v6056, %v5929
        %v6077 = vsel %vm1843, %v6057, %v5931
        %v6078 = vsel %vm1843, %v6058, %v5933
        %v6079 = vsel %vm1843, %v6059, %v5935
        %v6080 = vsel %vm1843, %v6060, %v5937
        %v6081 = vsel %vm1843, %v6061, %v5939
        %v6082 = vsel %vm1843, %v6062, %v5941
        %v6083 = vsel %vm1843, %v6063, %v5943
        %v6084 = vsel %vm1864, %v6064, %v5985
        %v6085 = vsel %vm1864, %v6065, %v5987
        %v6086 = vsel %vm1864, %v6066, %v5989
        %v6087 = vsel %vm1864, %v6067, %v5991
        %v6088 = vsel %vm1864, %v6068, %v5993
        %v6089 = vsel %vm1864, %v6069, %v5995
        %v6090 = vsel %vm1864, %v6070, %v5997
        %v6091 = vsel %vm1864, %v6071, %v5999
        %v6092 = vsel %vm1864, %v6072, %v6001
        %v6093 = vsel %vm1864, %v6073, %v6003
        %v6094 = vsel %vm1864, %v6074, %v6005
        %v6095 = vsel %vm1864, %v6075, %v6007
        %v6096 = vsel %vm1864, %v6076, %v6009
        %v6097 = vsel %vm1864, %v6077, %v6011
        %v6098 = vsel %vm1864, %v6078, %v6013
        %v6099 = vsel %vm1864, %v6079, %v6015
        %v6100 = vsel %vm1864, %v6080, %v6017
        %v6101 = vsel %vm1864, %v6081, %v6019
        %v6102 = vsel %vm1864, %v6082, %v6021
        %v6103 = vsel %vm1864, %v6083, %v6023
        %6105 = vset.pattern.permute.xlu0 40
        %6106 = vperm.xlu0 %6105, %v4852
        %v6107 = vpop.permute.xlu0 %6106
        %6110 = vset.pattern.permute.xlu0 40
        %6111 = vperm.xlu0 %6110, %v4853
        %v6112 = vpop.permute.xlu0 %6111
        %6115 = vset.pattern.permute.xlu0 40
        %6116 = vperm.xlu0 %6115, %v4854
        %v6117 = vpop.permute.xlu0 %6116
        %6120 = vset.pattern.permute.xlu0 40
        %6121 = vperm.xlu0 %6120, %v4855
        %v6122 = vpop.permute.xlu0 %6121
        %6125 = vset.pattern.permute.xlu0 40
        %6126 = vperm.xlu0 %6125, %v4856
        %v6127 = vpop.permute.xlu0 %6126
        %6130 = vset.pattern.permute.xlu0 40
        %6131 = vperm.xlu0 %6130, %v4857
        %v6132 = vpop.permute.xlu0 %6131
        %6135 = vset.pattern.permute.xlu0 40
        %6136 = vperm.xlu0 %6135, %v4858
        %v6137 = vpop.permute.xlu0 %6136
        %6140 = vset.pattern.permute.xlu0 40
        %6141 = vperm.xlu0 %6140, %v4859
        %v6142 = vpop.permute.xlu0 %6141
        %6145 = vset.pattern.permute.xlu0 40
        %6146 = vperm.xlu0 %6145, %v4860
        %v6147 = vpop.permute.xlu0 %6146
        %6150 = vset.pattern.permute.xlu0 40
        %6151 = vperm.xlu0 %6150, %v4861
        %v6152 = vpop.permute.xlu0 %6151
        %6155 = vset.pattern.permute.xlu0 40
        %6156 = vperm.xlu0 %6155, %v4862
        %v6157 = vpop.permute.xlu0 %6156
        %6160 = vset.pattern.permute.xlu0 40
        %6161 = vperm.xlu0 %6160, %v4863
        %v6162 = vpop.permute.xlu0 %6161
        %6165 = vset.pattern.permute.xlu0 40
        %6166 = vperm.xlu0 %6165, %v4864
        %v6167 = vpop.permute.xlu0 %6166
        %6170 = vset.pattern.permute.xlu0 40
        %6171 = vperm.xlu0 %6170, %v4865
        %v6172 = vpop.permute.xlu0 %6171
        %6175 = vset.pattern.permute.xlu0 40
        %6176 = vperm.xlu0 %6175, %v4866
        %v6177 = vpop.permute.xlu0 %6176
        %6180 = vset.pattern.permute.xlu0 40
        %6181 = vperm.xlu0 %6180, %v4867
        %v6182 = vpop.permute.xlu0 %6181
        %6185 = vset.pattern.permute.xlu0 40
        %6186 = vperm.xlu0 %6185, %v4868
        %v6187 = vpop.permute.xlu0 %6186
        %6190 = vset.pattern.permute.xlu0 40
        %6191 = vperm.xlu0 %6190, %v4869
        %v6192 = vpop.permute.xlu0 %6191
        %6195 = vset.pattern.permute.xlu0 40
        %6196 = vperm.xlu0 %6195, %v4870
        %v6197 = vpop.permute.xlu0 %6196
        %6200 = vset.pattern.permute.xlu0 40
        %6201 = vperm.xlu0 %6200, %v4871
        %v6202 = vpop.permute.xlu0 %6201
        %v6204 = vmul.f32 %v6084, %v6107
        %v6205 = vmul.f32 %v6085, %v6112
        %v6206 = vmul.f32 %v6086, %v6117
        %v6207 = vmul.f32 %v6087, %v6122
        %v6208 = vmul.f32 %v6088, %v6127
        %v6209 = vmul.f32 %v6089, %v6132
        %v6210 = vmul.f32 %v6090, %v6137
        %v6211 = vmul.f32 %v6091, %v6142
        %v6212 = vmul.f32 %v6092, %v6147
        %v6213 = vmul.f32 %v6093, %v6152
        %v6214 = vmul.f32 %v6094, %v6157
        %v6215 = vmul.f32 %v6095, %v6162
        %v6216 = vmul.f32 %v6096, %v6167
        %v6217 = vmul.f32 %v6097, %v6172
        %v6218 = vmul.f32 %v6098, %v6177
        %v6219 = vmul.f32 %v6099, %v6182
        %v6220 = vmul.f32 %v6100, %v6187
        %v6221 = vmul.f32 %v6101, %v6192
        %v6222 = vmul.f32 %v6102, %v6197
        %v6223 = vmul.f32 %v6103, %v6202
        %v6224 = vadd.f32 %v4811, %v6204
        %v6225 = vadd.f32 %v4812, %v6205
        %v6226 = vadd.f32 %v4813, %v6206
        %v6227 = vadd.f32 %v4814, %v6207
        %v6228 = vadd.f32 %v4815, %v6208
        %v6229 = vadd.f32 %v4816, %v6209
        %v6230 = vadd.f32 %v4817, %v6210
        %v6231 = vadd.f32 %v4818, %v6211
        %v6232 = vadd.f32 %v4819, %v6212
        %v6233 = vadd.f32 %v4820, %v6213
        %v6234 = vadd.f32 %v4821, %v6214
        %v6235 = vadd.f32 %v4822, %v6215
        %v6236 = vadd.f32 %v4823, %v6216
        %v6237 = vadd.f32 %v4824, %v6217
        %v6238 = vadd.f32 %v4825, %v6218
        %v6239 = vadd.f32 %v4826, %v6219
        %v6240 = vadd.f32 %v4827, %v6220
        %v6241 = vadd.f32 %v4828, %v6221
        %v6242 = vadd.f32 %v4829, %v6222
        %v6243 = vadd.f32 %v4830, %v6223
        %6244 = vst [vmem:[%s528] sm:$0xff] %v6224
        %6245 = vst [vmem:[%s528 + $0x8] sm:$0xff] %v6225
        %6246 = vst [vmem:[%s528 + $0x10] sm:$0xff] %v6226
        %6247 = vst [vmem:[%s528 + $0x18] sm:$0xff] %v6227
        %6248 = vst [vmem:[%s528 + $0x20] sm:$0xff] %v6228
        %6249 = vst [vmem:[%s528 + $0x28] sm:$0xff] %v6229
        %6250 = vst [vmem:[%s528 + $0x30] sm:$0xff] %v6230
        %6251 = vst [vmem:[%s528 + $0x38] sm:$0xff] %v6231
        %6252 = vst [vmem:[%s528 + $0x40] sm:$0xff] %v6232
        %6253 = vst [vmem:[%s528 + $0x48] sm:$0xff] %v6233
        %6254 = vst [vmem:[%s528 + $0x50] sm:$0xff] %v6234
        %6255 = vst [vmem:[%s528 + $0x58] sm:$0xff] %v6235
        %6256 = vst [vmem:[%s528 + $0x60] sm:$0xff] %v6236
        %6257 = vst [vmem:[%s528 + $0x68] sm:$0xff] %v6237
        %6258 = vst [vmem:[%s528 + $0x70] sm:$0xff] %v6238
        %6259 = vst [vmem:[%s528 + $0x78] sm:$0xff] %v6239
        %6260 = vst [vmem:[%s528 + $0x80] sm:$0xff] %v6240
        %6261 = vst [vmem:[%s528 + $0x88] sm:$0xff] %v6241
        %6262 = vst [vmem:[%s528 + $0x90] sm:$0xff] %v6242
        %6263 = vst [vmem:[%s528 + $0x98] sm:$0xff] %v6243
        %s6264 = sand.u32 %s93, 1
        %s6265 = scalar_lea.sflag [#allocation4], %s6264
        %s6266 = sand.u32 %s93, 1
        %s6267 = smul.addr %s6266, 160
        %s6268 = scalar_lea.vmem [#allocation3], %s6267
        // Predicated region
        $region74: #{tpu_custom_call.1} parent=68 // pred_check
          %p6269 = pneg %p103
        $region75: #{tpu_custom_call.1} parent=68 // pred_check_branch
          %6271 = sbr.rel (%p6269) target = $region77
        $region76: #{tpu_custom_call.1} parent=68 // pred_region
          %s6272 = smul.u32 20, %s17
          %s6274 = ssub.s32 2560, 2560
          %6275 = vsyncadd %s6265, %s6274
          %s6276 = smul.addr %s6272, 128
          %s6277 = scalar_lea.hbm %s3, %s6276
          %s6278 = sshll.u32 %s6268, 4
          %s6279 = int_to_ptr.vmem [resolvable:$true] %s6278
          %6284 = dma.vmem_to_hbm [thread:$0]  %s6279, 2560, %s6277, %s6265, 128, 128, 8
        $region77: #{tpu_custom_call.1} parent=68 // pred_fallthru
          _
      $region69: #{tpu_custom_call.1} parent=5 // pred_fallthru
        _
      %p6285 = scmp.le.s32.totalorder 2, %s12
      // Predicated region
      $region78: #{tpu_custom_call.1} parent=5 // pred_check
        %p6286 = pneg %p6285
      $region79: #{tpu_custom_call.1} parent=5 // pred_check_branch
        %6288 = sbr.rel (%p6286) target = $region81
      $region80: #{tpu_custom_call.1} parent=5 // pred_region
        %s6289 = ssub.s32 %s12, 2
        // Predicated region
        $region82: #{tpu_custom_call.1} parent=80 // pred_check
          %p6290 = pneg %p109
        $region83: #{tpu_custom_call.1} parent=80 // pred_check_branch
          %6292 = sbr.rel (%p6290) target = $region85
        $region84: #{tpu_custom_call.1} parent=80 // pred_region
          %s6293 = sand.u32 %s94, 1
          %s6294 = scalar_lea.sflag [#allocation4], %s6293
          %s6295 = sand.u32 %s94, 1
          %s6296 = smul.addr %s6295, 160
          %s6297 = scalar_lea.vmem [#allocation3], %s6296
          %6298 = dma.done %s6294, 2560
        $region85: #{tpu_custom_call.1} parent=80 // pred_fallthru
          _
      $region81: #{tpu_custom_call.1} parent=5 // pred_fallthru
        _
    $region6: #{tpu_custom_call.1} parent=1 // loop_footer
      %s16 = sadd.s32 1, %s12
    $region7: #{tpu_custom_call.1} parent=1 // loop_footer_branch
      %11 = sbr.rel target = $region3
    $region8: #{tpu_custom_call.1} parent=1 // loop_exit
      _
    %6299 = vsyncpa [#allocation4], 1
    %s6300 = scalar_lea.sflag [#allocation4], 1
    %6301 = vsyncpa %s6300, 1

</llo_original>
